<compile_context>
chip_gen: v7x
topology: tpu7x:2x2x1
jax: 0.10.0
libtpu: 0.0.40
codegen_flags: <defaults>
</compile_context>

<pallas_src>
import functools
import math

import jax
import jax.numpy as jnp
from jax import lax
from jax.experimental import pallas as pl
from jax.experimental.pallas import tpu as pltpu


# ----------------------------- shared math ---------------------------------
def _gelu(v):
    # TODO(synk): PyTorch nn.GELU() is the exact erf GELU; the tanh
    # approximation is used for robust Mosaic lowering (|delta| ~1e-3).
    c = math.sqrt(2.0 / math.pi)
    return 0.5 * v * (1.0 + jnp.tanh(c * (v + 0.044715 * v * v * v)))


def _layernorm(v, g, b, eps):
    mu = jnp.mean(v, axis=-1, keepdims=True)
    var = jnp.mean((v - mu) ** 2, axis=-1, keepdims=True)
    return (v - mu) * lax.rsqrt(var + eps) * g + b


# ----------------------------- Pallas kernel --------------------------------
def _block_kernel(x_ref, pol_ref, g1_ref, b1_ref, wqkv_ref, bqkv_ref,
                  wproj_ref, bproj_ref, g2_ref, b2_ref,
                  wfc1_ref, bfc1_ref, wfc2_ref, bfc2_ref, o_ref,
                  *, num_heads, scale, eps):
    """One full transformer Block for one batch element, entirely in VMEM."""
    x = x_ref[0]                       # (N, C) f32
    pol = pol_ref[0]                   # (1, N) f32 keep-policy
    n_tok, dim = x.shape
    hd = dim // num_heads

    # ---- attention sub-layer (softmax_with_policy, eval path eps = 0) -----
    xn = _layernorm(x, g1_ref[...], b1_ref[...], eps)
    qkv = jnp.dot(xn, wqkv_ref[...],
                  preferred_element_type=jnp.float32) + bqkv_ref[...]   # (N, 3C)

    # attn_policy[i, j] = p[j] + (1 - p[j]) * (i == j)
    rows = lax.broadcasted_iota(jnp.int32, (n_tok, n_tok), 0)
    cols = lax.broadcasted_iota(jnp.int32, (n_tok, n_tok), 1)
    eye = (rows == cols).astype(jnp.float32)
    a_pol = pol + (1.0 - pol) * eye                                    # (N, N)

    w_proj = wproj_ref[...]                                            # (C, C)
    att_proj = None
    for h in range(num_heads):
        q = qkv[:, h * hd:(h + 1) * hd]
        k = qkv[:, dim + h * hd:dim + (h + 1) * hd]
        v = qkv[:, 2 * dim + h * hd:2 * dim + (h + 1) * hd]
        s = lax.dot_general(q, k, (((1,), (1,)), ((), ())),
                            preferred_element_type=jnp.float32) * scale  # (N, N)
        m = jnp.max(s, axis=-1, keepdims=True)
        e = jnp.exp(s - m) * a_pol
        attn = e / jnp.sum(e, axis=-1, keepdims=True)
        o_h = jnp.dot(attn, v, preferred_element_type=jnp.float32)       # (N, hd)
        # head-wise projection: sum_h o_h @ Wproj^T[h*hd:(h+1)*hd, :]
        term = jnp.dot(o_h, w_proj[h * hd:(h + 1) * hd, :],
                       preferred_element_type=jnp.float32)               # (N, C)
        att_proj = term if att_proj is None else att_proj + term
    x = x + att_proj + bproj_ref[...]

    # ---- MLP sub-layer -----------------------------------------------------
    xn2 = _layernorm(x, g2_ref[...], b2_ref[...], eps)
    h1 = _gelu(jnp.dot(xn2, wfc1_ref[...],
                       preferred_element_type=jnp.float32) + bfc1_ref[...])
    x = x + jnp.dot(h1, wfc2_ref[...],
                    preferred_element_type=jnp.float32) + bfc2_ref[...]

    o_ref[0] = x


def transformer_block_pallas(x, policy, p, *, num_heads, eps=1e-6):
    """Block.forward(x, policy) with softmax_with_policy (eval, eps=0)."""
    B, N, C = x.shape
    hd = C // num_heads
    Hm = p["wfc1_t"].shape[1]
    scale = float(hd) ** -0.5
    pol = policy.reshape(B, 1, N).astype(jnp.float32)

    def _full(shape):
        return pl.BlockSpec(shape, lambda b, _s=len(shape): (0,) * _s)

    flops = B * (2 * N * C * (3 * C + C + 2 * Hm) + 4 * N * N * C)
    transcendentals = B * (num_heads * N * N + N * Hm)
    w_bytes = 4 * (C * 3 * C + 3 * C + C * C + C + C * Hm + Hm + Hm * C + 7 * C)
    bytes_accessed = 4 * (2 * B * N * C + B * N) + w_bytes

    kernel = functools.partial(_block_kernel, num_heads=num_heads,
                               scale=scale, eps=eps)
    return pl.pallas_call(
        kernel,
        out_shape=jax.ShapeDtypeStruct((B, N, C), jnp.float32),
        grid=(B,),
        in_specs=[
            pl.BlockSpec((1, N, C), lambda b: (b, 0, 0)),   # x
            pl.BlockSpec((1, 1, N), lambda b: (b, 0, 0)),   # policy
            _full((1, C)), _full((1, C)),                   # norm1 gamma/beta
            _full((C, 3 * C)), _full((1, 3 * C)),           # qkv
            _full((C, C)), _full((1, C)),                   # proj
            _full((1, C)), _full((1, C)),                   # norm2 gamma/beta
            _full((C, Hm)), _full((1, Hm)),                 # fc1
            _full((Hm, C)), _full((1, C)),                  # fc2
        ],
        out_specs=pl.BlockSpec((1, N, C), lambda b: (b, 0, 0)),
        compiler_params=pltpu.CompilerParams(
            dimension_semantics=("parallel",)),
        cost_estimate=pl.CostEstimate(flops=flops,
                                      transcendentals=transcendentals,
                                      bytes_accessed=bytes_accessed),
    )(
        x.astype(jnp.float32), pol,
        p["ln1_g"].reshape(1, C), p["ln1_b"].reshape(1, C),
        p["wqkv_t"], p["bqkv"].reshape(1, 3 * C),
        p["wproj_t"], p["bproj"].reshape(1, C),
        p["ln2_g"].reshape(1, C), p["ln2_b"].reshape(1, C),
        p["wfc1_t"], p["bfc1"].reshape(1, Hm),
        p["wfc2_t"], p["bfc2"].reshape(1, C),
    )


# --------------------- pure-JAX reference Block (for checking) --------------
def transformer_block_ref(x, policy, p, *, num_heads, eps=1e-6):
    B, N, C = x.shape
    hd = C // num_heads
    scale = float(hd) ** -0.5
    hp = lax.Precision.HIGHEST
    pol = policy.reshape(B, 1, 1, N)

    xn = _layernorm(x, p["ln1_g"], p["ln1_b"], eps)
    qkv = jnp.einsum("bnc,cd->bnd", xn, p["wqkv_t"], precision=hp) + p["bqkv"]
    qkv = qkv.reshape(B, N, 3, num_heads, hd).transpose(2, 0, 3, 1, 4)
    q, k, v = qkv[0], qkv[1], qkv[2]                       # (B, H, N, hd)
    s = jnp.einsum("bhqd,bhkd->bhqk", q, k, precision=hp) * scale
    eye = jnp.eye(N, dtype=x.dtype).reshape(1, 1, N, N)
    a_pol = pol + (1.0 - pol) * eye
    m = jnp.max(s, axis=-1, keepdims=True)
    e = jnp.exp(s - m) * a_pol
    attn = e / jnp.sum(e, axis=-1, keepdims=True)
    o = jnp.einsum("bhqk,bhkd->bhqd", attn, v, precision=hp)
    o = o.transpose(0, 2, 1, 3).reshape(B, N, C)
    x = x + jnp.einsum("bnc,cd->bnd", o, p["wproj_t"], precision=hp) + p["bproj"]

    xn2 = _layernorm(x, p["ln2_g"], p["ln2_b"], eps)
    h1 = _gelu(jnp.einsum("bnc,ch->bnh", xn2, p["wfc1_t"], precision=hp)
               + p["bfc1"])
    x = x + jnp.einsum("bnh,hc->bnc", h1, p["wfc2_t"], precision=hp) + p["bfc2"]
    return x


# ------------------------- predictor & glue (plain JAX) ----------------------
def predictor_forward(x, policy, pp, *, num_heads):
    """MultiheadPredictorLG.forward — all heads share in_conv / out_conv."""
    B, n, C = x.shape
    d = C // num_heads
    # AdaptiveAvgPool2d((n, num_heads)) on (B, n, C) == per-head channel mean.
    x_head = x.reshape(B, n, num_heads, d).mean(axis=-1)
    h = _gelu(x_head @ pp["se_w1"].T + pp["se_b1"])
    head_weights = jax.nn.sigmoid(h @ pp["se_w2"].T + pp["se_b2"])   # (B, n, H)
    hw_sum = jnp.sum(head_weights, axis=2, keepdims=True)            # (B, n, 1)
    pol_sum = jnp.sum(policy, axis=1, keepdims=True)                 # (B, 1, 1)

    mh_log = jnp.zeros((B, n, 2), jnp.float32)
    mh_soft = jnp.zeros((B, n, 2), jnp.float32)
    for i in range(num_heads):
        xs = x[:, :, i * d:(i + 1) * d]
        xs = _layernorm(xs, pp["in_ln_g"], pp["in_ln_b"], 1e-5)
        xs = _gelu(xs @ pp["in_w"].T + pp["in_b"])
        local_x = xs[:, :, :d // 2]
        global_x = jnp.sum(xs[:, :, d // 2:] * policy, axis=1,
                           keepdims=True) / pol_sum
        xs = jnp.concatenate(
            [local_x, jnp.broadcast_to(global_x, (B, n, d // 2))], axis=-1)
        z = _gelu(xs @ pp["out_w1"].T + pp["out_b1"])
        z = _gelu(z @ pp["out_w2"].T + pp["out_b2"])
        z = z @ pp["out_w3"].T + pp["out_b3"]
        z = jax.nn.log_softmax(z, axis=-1)           # out_conv ends in LogSoftmax
        w_i = head_weights[:, :, i:i + 1]
        mh_soft = mh_soft + jax.nn.softmax(z, axis=-1) * w_i
        mh_log = mh_log + jax.nn.log_softmax(z, axis=-1) * w_i
    return mh_log / hw_sum, mh_soft / hw_sum


def gumbel_softmax_hard(logits, key, tau=1.0):
    g = jax.random.gumbel(key, logits.shape, dtype=logits.dtype)
    y = jax.nn.softmax((logits + g) / tau, axis=-1)
    return jax.nn.one_hot(jnp.argmax(y, axis=-1), logits.shape[-1],
                          dtype=logits.dtype)


def test_irregular_sparsity(matrix):
    return int(jnp.sum(matrix == 0)), int(jnp.sum(matrix != 0))


# --------------------------- Transformer forward -----------------------------
def transformer_forward(x_img, cls_tokens, rep_token, policy, params, *,
                        heads, depth, pruning_loc, gumbel_key, use_pallas=True):
    """Eval-mode forward of pit.Transformer (depth == 2 configuration)."""
    assert depth == 2, "demo config uses the depth == 2 branch"
    # TODO(synk): training-mode branches (dropout/drop-path, eps=1e-6 policy
    # softmax, out_pred_prob), the depth != 2 rep-token merge path, and the
    # score.json file dump are intentionally not implemented here.
    del rep_token  # only consumed by the depth != 2 branch

    B, C, hgt, wid = x_img.shape
    block_fn = transformer_block_pallas if use_pallas else transformer_block_ref

    x = x_img.transpose(0, 2, 3, 1).reshape(B, hgt * wid, C)   # b c h w -> b (hw) c
    token_length = cls_tokens.shape[1]
    prev_decision = policy[:, token_length:]
    x = jnp.concatenate([cls_tokens, x], axis=1)
    sparse = []

    for i in range(depth):
        if i == pruning_loc:
            spatial_x = x[:, token_length:]
            pred_score, softmax_score = predictor_forward(
                spatial_x, prev_decision, params["predictor"], num_heads=heads)
            hard_keep = gumbel_softmax_hard(pred_score, gumbel_key)[:, :, 0:1] \
                * prev_decision
            hard_drop = 1.0 - hard_keep - (1.0 - prev_decision)
            placeholder = softmax_score[:, :, 0:1] * hard_drop
            x2_sum = jnp.sum(spatial_x * placeholder, axis=1, keepdims=True)
            ph_sum = jnp.sum(placeholder, axis=1, keepdims=True)
            represent_token = x2_sum / ph_sum
            x = jnp.concatenate([x, represent_token], axis=1)
            ones_tl = jnp.ones((B, token_length, 1), x.dtype)
            policy = jnp.concatenate([ones_tl, hard_keep, ones_tl], axis=1)
            sparse.append(list(test_irregular_sparsity(policy)))
            x = block_fn(x, policy, params["blocks"][i], num_heads=heads)
            prev_decision = hard_keep
        else:
            x = block_fn(x, policy, params["blocks"][i], num_heads=heads)

    cls_out = x[:, :token_length]
    rep_out = x[:, -1:]
    spatial = x[:, token_length:-1]
    out = spatial.reshape(B, hgt, wid, C).transpose(0, 3, 1, 2)  # b (hw) c -> b c h w
    return out, cls_out, rep_out, sparse


# --------------------------- parameter init ----------------------------------
def _linear(key, out_f, in_f):
    kw, kb = jax.random.split(key)
    bound = 1.0 / math.sqrt(in_f)
    w = jax.random.uniform(kw, (out_f, in_f), jnp.float32, -bound, bound)
    b = jax.random.uniform(kb, (out_f,), jnp.float32, -bound, bound)
    return w, b


def init_block_params(key, dim, mlp_ratio):
    hidden = int(dim * mlp_ratio)
    k0, k1, k2, k3 = jax.random.split(key, 4)
    wqkv, bqkv = _linear(k0, 3 * dim, dim)
    wproj, bproj = _linear(k1, dim, dim)
    wfc1, bfc1 = _linear(k2, hidden, dim)
    wfc2, bfc2 = _linear(k3, dim, hidden)
    return dict(
        ln1_g=jnp.ones((dim,), jnp.float32), ln1_b=jnp.zeros((dim,), jnp.float32),
        ln2_g=jnp.ones((dim,), jnp.float32), ln2_b=jnp.zeros((dim,), jnp.float32),
        wqkv_t=wqkv.T, bqkv=bqkv, wproj_t=wproj.T, bproj=bproj,
        wfc1_t=wfc1.T, bfc1=bfc1, wfc2_t=wfc2.T, bfc2=bfc2)


def init_predictor_params(key, num_heads, embed_dim):
    d = embed_dim // num_heads
    ks = jax.random.split(key, 6)
    se_w1, se_b1 = _linear(ks[0], num_heads // 2, num_heads)
    se_w2, se_b2 = _linear(ks[1], num_heads, num_heads // 2)
    in_w, in_b = _linear(ks[2], d, d)
    o_w1, o_b1 = _linear(ks[3], d // 2, d)
    o_w2, o_b2 = _linear(ks[4], d // 4, d // 2)
    o_w3, o_b3 = _linear(ks[5], 2, d // 4)
    return dict(se_w1=se_w1, se_b1=se_b1, se_w2=se_w2, se_b2=se_b2,
                in_ln_g=jnp.ones((d,), jnp.float32),
                in_ln_b=jnp.zeros((d,), jnp.float32),
                in_w=in_w, in_b=in_b,
                out_w1=o_w1, out_b1=o_b1, out_w2=o_w2, out_b2=o_b2,
                out_w3=o_w3, out_b3=o_b3)


# ------------------------------------ main -----------------------------------
if __name__ == "__main__":
    heads, base_dim, depth, mlp_ratio = 4, 8, 2, 4.0
    embed_dim = base_dim * heads                       # 32
    B, hgt, wid = 2, 8, 8
    token_length = 1
    pruning_loc = 0

    root = jax.random.PRNGKey(0)
    kx, kcls, krep, kb0, kb1, kpred, kgum = jax.random.split(root, 7)
    x_img = jax.random.normal(kx, (B, embed_dim, hgt, wid), jnp.float32)
    cls_tokens = 0.02 * jax.random.normal(
        kcls, (B, token_length, embed_dim), jnp.float32)
    rep_token = 0.02 * jax.random.normal(krep, (B, 1, embed_dim), jnp.float32)
    policy0 = jnp.ones((B, token_length + hgt * wid, 1), jnp.float32)

    params = dict(
        blocks=[init_block_params(kb0, embed_dim, mlp_ratio),
                init_block_params(kb1, embed_dim, mlp_ratio)],
        predictor=init_predictor_params(kpred, heads, embed_dim))

    out, cls_out, rep_out, sparse = transformer_forward(
        x_img, cls_tokens, rep_token, policy0, params,
        heads=heads, depth=depth, pruning_loc=pruning_loc,
        gumbel_key=kgum, use_pallas=True)
    out = jax.block_until_ready(out)

    # Pure-JAX reference of the full forward (same gumbel key -> same policy).
    ref_out, ref_cls, ref_rep, _ = transformer_forward(
        x_img, cls_tokens, rep_token, policy0, params,
        heads=heads, depth=depth, pruning_loc=pruning_loc,
        gumbel_key=kgum, use_pallas=False)

    assert out.shape == (B, embed_dim, hgt, wid)
    assert cls_out.shape == (B, token_length, embed_dim)
    assert rep_out.shape == (B, 1, embed_dim)
    assert len(sparse) == 1 and sparse[0][0] + sparse[0][1] == B * (policy0.shape[1] + 1)
    assert jnp.allclose(out, ref_out, atol=2e-3, rtol=2e-3)
    assert jnp.allclose(cls_out, ref_cls, atol=2e-3, rtol=2e-3)
    assert jnp.allclose(rep_out, ref_rep, atol=2e-3, rtol=2e-3)

    print("KERNEL_OK")
</pallas_src>

<mosaic_0001>
module attributes {stable_mosaic.version = 11 : i64} {
  func.func @_block_kernel(%arg0: i32, %arg1: memref<1x66x32xf32, #tpu.memory_space<vmem>>, %arg2: memref<1x1x66xf32, #tpu.memory_space<vmem>>, %arg3: memref<1x32xf32, #tpu.memory_space<vmem>>, %arg4: memref<1x32xf32, #tpu.memory_space<vmem>>, %arg5: memref<32x96xf32, #tpu.memory_space<vmem>>, %arg6: memref<1x96xf32, #tpu.memory_space<vmem>>, %arg7: memref<32x32xf32, #tpu.memory_space<vmem>>, %arg8: memref<1x32xf32, #tpu.memory_space<vmem>>, %arg9: memref<1x32xf32, #tpu.memory_space<vmem>>, %arg10: memref<1x32xf32, #tpu.memory_space<vmem>>, %arg11: memref<32x128xf32, #tpu.memory_space<vmem>>, %arg12: memref<1x128xf32, #tpu.memory_space<vmem>>, %arg13: memref<128x32xf32, #tpu.memory_space<vmem>>, %arg14: memref<1x32xf32, #tpu.memory_space<vmem>>, %arg15: memref<1x66x32xf32, #tpu.memory_space<vmem>>) attributes {dimension_semantics = [#tpu.dimension_semantics<parallel>], iteration_bounds = array<i64: 2>, scalar_prefetch = 0 : i64, scratch_operands = 0 : i64, tpu.core_type = #tpu.core_type<tc>, window_params = [{transform_indices = @transform_0, window_bounds = array<i64: 1, 66, 32>}, {transform_indices = @transform_1, window_bounds = array<i64: 1, 1, 66>}, {pipeline_mode = #tpu.pipeline_mode<synchronous>, transform_indices = @transform_2, window_bounds = array<i64: 1, 32>}, {pipeline_mode = #tpu.pipeline_mode<synchronous>, transform_indices = @transform_3, window_bounds = array<i64: 1, 32>}, {pipeline_mode = #tpu.pipeline_mode<synchronous>, transform_indices = @transform_4, window_bounds = array<i64: 32, 96>}, {pipeline_mode = #tpu.pipeline_mode<synchronous>, transform_indices = @transform_5, window_bounds = array<i64: 1, 96>}, {pipeline_mode = #tpu.pipeline_mode<synchronous>, transform_indices = @transform_6, window_bounds = array<i64: 32, 32>}, {pipeline_mode = #tpu.pipeline_mode<synchronous>, transform_indices = @transform_7, window_bounds = array<i64: 1, 32>}, {pipeline_mode = #tpu.pipeline_mode<synchronous>, transform_indices = @transform_8, window_bounds = array<i64: 1, 32>}, {pipeline_mode = #tpu.pipeline_mode<synchronous>, transform_indices = @transform_9, window_bounds = array<i64: 1, 32>}, {pipeline_mode = #tpu.pipeline_mode<synchronous>, transform_indices = @transform_10, window_bounds = array<i64: 32, 128>}, {pipeline_mode = #tpu.pipeline_mode<synchronous>, transform_indices = @transform_11, window_bounds = array<i64: 1, 128>}, {pipeline_mode = #tpu.pipeline_mode<synchronous>, transform_indices = @transform_12, window_bounds = array<i64: 128, 32>}, {pipeline_mode = #tpu.pipeline_mode<synchronous>, transform_indices = @transform_13, window_bounds = array<i64: 1, 32>}, {transform_indices = @transform_14, window_bounds = array<i64: 1, 66, 32>}]} {
    %c0 = arith.constant 0 : index
    %c0_0 = arith.constant 0 : index
    %c0_1 = arith.constant 0 : index
    %0 = vector.load %arg1[%c0, %c0_0, %c0_1] : memref<1x66x32xf32, #tpu.memory_space<vmem>>, vector<1x66x32xf32>
    %1 = vector.shape_cast %0 : vector<1x66x32xf32> to vector<66x32xf32>
    %c0_2 = arith.constant 0 : index
    %c0_3 = arith.constant 0 : index
    %c0_4 = arith.constant 0 : index
    %2 = vector.load %arg2[%c0_2, %c0_3, %c0_4] : memref<1x1x66xf32, #tpu.memory_space<vmem>>, vector<1x1x66xf32>
    %3 = vector.shape_cast %2 : vector<1x1x66xf32> to vector<1x66xf32>
    %c0_5 = arith.constant 0 : index
    %c0_6 = arith.constant 0 : index
    %4 = vector.load %arg3[%c0_5, %c0_6] : memref<1x32xf32, #tpu.memory_space<vmem>>, vector<1x32xf32>
    %c0_7 = arith.constant 0 : index
    %c0_8 = arith.constant 0 : index
    %5 = vector.load %arg4[%c0_7, %c0_8] : memref<1x32xf32, #tpu.memory_space<vmem>>, vector<1x32xf32>
    %cst = arith.constant dense<0.000000e+00> : vector<66xf32>
    %6 = vector.multi_reduction <add>, %1, %cst [1] : vector<66x32xf32> to vector<66xf32>
    %7 = vector.shape_cast %6 : vector<66xf32> to vector<66x1xf32>
    %cst_9 = arith.constant 3.200000e+01 : f32
    %8 = vector.broadcast %cst_9 : f32 to vector<66x1xf32>
    %9 = arith.divf %7, %8 : vector<66x1xf32>
    %10 = vector.broadcast %9 : vector<66x1xf32> to vector<66x32xf32>
    %11 = arith.subf %1, %10 : vector<66x32xf32>
    %12 = arith.mulf %11, %11 : vector<66x32xf32>
    %cst_10 = arith.constant dense<0.000000e+00> : vector<66xf32>
    %13 = vector.multi_reduction <add>, %12, %cst_10 [1] : vector<66x32xf32> to vector<66xf32>
    %14 = vector.shape_cast %13 : vector<66xf32> to vector<66x1xf32>
    %cst_11 = arith.constant 3.200000e+01 : f32
    %15 = vector.broadcast %cst_11 : f32 to vector<66x1xf32>
    %16 = arith.divf %14, %15 : vector<66x1xf32>
    %17 = vector.broadcast %9 : vector<66x1xf32> to vector<66x32xf32>
    %18 = arith.subf %1, %17 : vector<66x32xf32>
    %cst_12 = arith.constant 9.99999997E-7 : f32
    %19 = vector.broadcast %cst_12 : f32 to vector<66x1xf32>
    %20 = arith.addf %16, %19 : vector<66x1xf32>
    %21 = math.rsqrt %20 : vector<66x1xf32>
    %22 = vector.broadcast %21 : vector<66x1xf32> to vector<66x32xf32>
    %23 = arith.mulf %18, %22 : vector<66x32xf32>
    %24 = vector.broadcast %4 : vector<1x32xf32> to vector<66x32xf32>
    %25 = arith.mulf %23, %24 : vector<66x32xf32>
    %26 = vector.broadcast %5 : vector<1x32xf32> to vector<66x32xf32>
    %27 = arith.addf %25, %26 : vector<66x32xf32>
    %c0_13 = arith.constant 0 : index
    %c0_14 = arith.constant 0 : index
    %28 = vector.load %arg5[%c0_13, %c0_14] : memref<32x96xf32, #tpu.memory_space<vmem>>, vector<32x96xf32>
    %cst_15 = arith.constant dense<0.000000e+00> : vector<66x96xf32>
    %29 = tpu.matmul %27, %28, %cst_15 {dimension_numbers = #tpu.dot_dimension_numbers<[1], [0], [0], [1], [0, 0, 1, 1], [], []>} : vector<66x32xf32>, vector<32x96xf32>, vector<66x96xf32> -> vector<66x96xf32>
    %c0_16 = arith.constant 0 : index
    %c0_17 = arith.constant 0 : index
    %30 = vector.load %arg6[%c0_16, %c0_17] : memref<1x96xf32, #tpu.memory_space<vmem>>, vector<1x96xf32>
    %31 = vector.broadcast %30 : vector<1x96xf32> to vector<66x96xf32>
    %32 = arith.addf %29, %31 : vector<66x96xf32>
    %33 = tpu.iota {dimensions = array<i32: 0>} : vector<66x66xi32>
    %34 = tpu.iota {dimensions = array<i32: 1>} : vector<66x66xi32>
    %35 = arith.cmpi eq, %33, %34 : vector<66x66xi32>
    %36 = arith.extui %35 : vector<66x66xi1> to vector<66x66xi32>
    %37 = arith.sitofp %36 : vector<66x66xi32> to vector<66x66xf32>
    %cst_18 = arith.constant 1.000000e+00 : f32
    %38 = vector.broadcast %cst_18 : f32 to vector<1x66xf32>
    %39 = arith.subf %38, %3 : vector<1x66xf32>
    %40 = vector.broadcast %39 : vector<1x66xf32> to vector<66x66xf32>
    %41 = arith.mulf %40, %37 : vector<66x66xf32>
    %42 = vector.broadcast %3 : vector<1x66xf32> to vector<66x66xf32>
    %43 = arith.addf %42, %41 : vector<66x66xf32>
    %c0_19 = arith.constant 0 : index
    %c0_20 = arith.constant 0 : index
    %44 = vector.load %arg7[%c0_19, %c0_20] : memref<32x32xf32, #tpu.memory_space<vmem>>, vector<32x32xf32>
    %45 = vector.extract_strided_slice %32 {offsets = [0, 0], sizes = [66, 8], strides = [1, 1]} : vector<66x96xf32> to vector<66x8xf32>
    %46 = vector.extract_strided_slice %32 {offsets = [0, 32], sizes = [66, 8], strides = [1, 1]} : vector<66x96xf32> to vector<66x8xf32>
    %47 = vector.extract_strided_slice %32 {offsets = [0, 64], sizes = [66, 8], strides = [1, 1]} : vector<66x96xf32> to vector<66x8xf32>
    %cst_21 = arith.constant dense<0.000000e+00> : vector<66x66xf32>
    %48 = tpu.matmul %45, %46, %cst_21 {dimension_numbers = #tpu.dot_dimension_numbers<[1], [1], [0], [0], [0, 0, 1, 0], [], []>} : vector<66x8xf32>, vector<66x8xf32>, vector<66x66xf32> -> vector<66x66xf32>
    %cst_22 = arith.constant 0.353553385 : f32
    %49 = vector.broadcast %cst_22 : f32 to vector<66x66xf32>
    %50 = arith.mulf %48, %49 : vector<66x66xf32>
    %cst_23 = arith.constant dense<0xFF800000> : vector<66xf32>
    %51 = vector.multi_reduction <maximumf>, %50, %cst_23 [1] : vector<66x66xf32> to vector<66xf32>
    %52 = vector.shape_cast %51 : vector<66xf32> to vector<66x1xf32>
    %53 = vector.broadcast %52 : vector<66x1xf32> to vector<66x66xf32>
    %54 = arith.subf %50, %53 : vector<66x66xf32>
    %55 = math.exp %54 : vector<66x66xf32>
    %56 = arith.mulf %55, %43 : vector<66x66xf32>
    %cst_24 = arith.constant dense<0.000000e+00> : vector<66xf32>
    %57 = vector.multi_reduction <add>, %56, %cst_24 [1] : vector<66x66xf32> to vector<66xf32>
    %58 = vector.shape_cast %57 : vector<66xf32> to vector<66x1xf32>
    %59 = vector.broadcast %58 : vector<66x1xf32> to vector<66x66xf32>
    %60 = arith.divf %56, %59 : vector<66x66xf32>
    %cst_25 = arith.constant dense<0.000000e+00> : vector<66x8xf32>
    %61 = tpu.matmul %60, %47, %cst_25 {dimension_numbers = #tpu.dot_dimension_numbers<[1], [0], [0], [1], [0, 0, 1, 1], [], []>} : vector<66x66xf32>, vector<66x8xf32>, vector<66x8xf32> -> vector<66x8xf32>
    %62 = vector.extract_strided_slice %44 {offsets = [0, 0], sizes = [8, 32], strides = [1, 1]} : vector<32x32xf32> to vector<8x32xf32>
    %cst_26 = arith.constant dense<0.000000e+00> : vector<66x32xf32>
    %63 = tpu.matmul %61, %62, %cst_26 {dimension_numbers = #tpu.dot_dimension_numbers<[1], [0], [0], [1], [0, 0, 1, 1], [], []>} : vector<66x8xf32>, vector<8x32xf32>, vector<66x32xf32> -> vector<66x32xf32>
    %64 = vector.extract_strided_slice %32 {offsets = [0, 8], sizes = [66, 8], strides = [1, 1]} : vector<66x96xf32> to vector<66x8xf32>
    %65 = vector.extract_strided_slice %32 {offsets = [0, 40], sizes = [66, 8], strides = [1, 1]} : vector<66x96xf32> to vector<66x8xf32>
    %66 = vector.extract_strided_slice %32 {offsets = [0, 72], sizes = [66, 8], strides = [1, 1]} : vector<66x96xf32> to vector<66x8xf32>
    %cst_27 = arith.constant dense<0.000000e+00> : vector<66x66xf32>
    %67 = tpu.matmul %64, %65, %cst_27 {dimension_numbers = #tpu.dot_dimension_numbers<[1], [1], [0], [0], [0, 0, 1, 0], [], []>} : vector<66x8xf32>, vector<66x8xf32>, vector<66x66xf32> -> vector<66x66xf32>
    %cst_28 = arith.constant 0.353553385 : f32
    %68 = vector.broadcast %cst_28 : f32 to vector<66x66xf32>
    %69 = arith.mulf %67, %68 : vector<66x66xf32>
    %cst_29 = arith.constant dense<0xFF800000> : vector<66xf32>
    %70 = vector.multi_reduction <maximumf>, %69, %cst_29 [1] : vector<66x66xf32> to vector<66xf32>
    %71 = vector.shape_cast %70 : vector<66xf32> to vector<66x1xf32>
    %72 = vector.broadcast %71 : vector<66x1xf32> to vector<66x66xf32>
    %73 = arith.subf %69, %72 : vector<66x66xf32>
    %74 = math.exp %73 : vector<66x66xf32>
    %75 = arith.mulf %74, %43 : vector<66x66xf32>
    %cst_30 = arith.constant dense<0.000000e+00> : vector<66xf32>
    %76 = vector.multi_reduction <add>, %75, %cst_30 [1] : vector<66x66xf32> to vector<66xf32>
    %77 = vector.shape_cast %76 : vector<66xf32> to vector<66x1xf32>
    %78 = vector.broadcast %77 : vector<66x1xf32> to vector<66x66xf32>
    %79 = arith.divf %75, %78 : vector<66x66xf32>
    %cst_31 = arith.constant dense<0.000000e+00> : vector<66x8xf32>
    %80 = tpu.matmul %79, %66, %cst_31 {dimension_numbers = #tpu.dot_dimension_numbers<[1], [0], [0], [1], [0, 0, 1, 1], [], []>} : vector<66x66xf32>, vector<66x8xf32>, vector<66x8xf32> -> vector<66x8xf32>
    %81 = vector.extract_strided_slice %44 {offsets = [8, 0], sizes = [8, 32], strides = [1, 1]} : vector<32x32xf32> to vector<8x32xf32>
    %cst_32 = arith.constant dense<0.000000e+00> : vector<66x32xf32>
    %82 = tpu.matmul %80, %81, %cst_32 {dimension_numbers = #tpu.dot_dimension_numbers<[1], [0], [0], [1], [0, 0, 1, 1], [], []>} : vector<66x8xf32>, vector<8x32xf32>, vector<66x32xf32> -> vector<66x32xf32>
    %83 = arith.addf %63, %82 : vector<66x32xf32>
    %84 = vector.extract_strided_slice %32 {offsets = [0, 16], sizes = [66, 8], strides = [1, 1]} : vector<66x96xf32> to vector<66x8xf32>
    %85 = vector.extract_strided_slice %32 {offsets = [0, 48], sizes = [66, 8], strides = [1, 1]} : vector<66x96xf32> to vector<66x8xf32>
    %86 = vector.extract_strided_slice %32 {offsets = [0, 80], sizes = [66, 8], strides = [1, 1]} : vector<66x96xf32> to vector<66x8xf32>
    %cst_33 = arith.constant dense<0.000000e+00> : vector<66x66xf32>
    %87 = tpu.matmul %84, %85, %cst_33 {dimension_numbers = #tpu.dot_dimension_numbers<[1], [1], [0], [0], [0, 0, 1, 0], [], []>} : vector<66x8xf32>, vector<66x8xf32>, vector<66x66xf32> -> vector<66x66xf32>
    %cst_34 = arith.constant 0.353553385 : f32
    %88 = vector.broadcast %cst_34 : f32 to vector<66x66xf32>
    %89 = arith.mulf %87, %88 : vector<66x66xf32>
    %cst_35 = arith.constant dense<0xFF800000> : vector<66xf32>
    %90 = vector.multi_reduction <maximumf>, %89, %cst_35 [1] : vector<66x66xf32> to vector<66xf32>
    %91 = vector.shape_cast %90 : vector<66xf32> to vector<66x1xf32>
    %92 = vector.broadcast %91 : vector<66x1xf32> to vector<66x66xf32>
    %93 = arith.subf %89, %92 : vector<66x66xf32>
    %94 = math.exp %93 : vector<66x66xf32>
    %95 = arith.mulf %94, %43 : vector<66x66xf32>
    %cst_36 = arith.constant dense<0.000000e+00> : vector<66xf32>
    %96 = vector.multi_reduction <add>, %95, %cst_36 [1] : vector<66x66xf32> to vector<66xf32>
    %97 = vector.shape_cast %96 : vector<66xf32> to vector<66x1xf32>
    %98 = vector.broadcast %97 : vector<66x1xf32> to vector<66x66xf32>
    %99 = arith.divf %95, %98 : vector<66x66xf32>
    %cst_37 = arith.constant dense<0.000000e+00> : vector<66x8xf32>
    %100 = tpu.matmul %99, %86, %cst_37 {dimension_numbers = #tpu.dot_dimension_numbers<[1], [0], [0], [1], [0, 0, 1, 1], [], []>} : vector<66x66xf32>, vector<66x8xf32>, vector<66x8xf32> -> vector<66x8xf32>
    %101 = vector.extract_strided_slice %44 {offsets = [16, 0], sizes = [8, 32], strides = [1, 1]} : vector<32x32xf32> to vector<8x32xf32>
    %cst_38 = arith.constant dense<0.000000e+00> : vector<66x32xf32>
    %102 = tpu.matmul %100, %101, %cst_38 {dimension_numbers = #tpu.dot_dimension_numbers<[1], [0], [0], [1], [0, 0, 1, 1], [], []>} : vector<66x8xf32>, vector<8x32xf32>, vector<66x32xf32> -> vector<66x32xf32>
    %103 = arith.addf %83, %102 : vector<66x32xf32>
    %104 = vector.extract_strided_slice %32 {offsets = [0, 24], sizes = [66, 8], strides = [1, 1]} : vector<66x96xf32> to vector<66x8xf32>
    %105 = vector.extract_strided_slice %32 {offsets = [0, 56], sizes = [66, 8], strides = [1, 1]} : vector<66x96xf32> to vector<66x8xf32>
    %106 = vector.extract_strided_slice %32 {offsets = [0, 88], sizes = [66, 8], strides = [1, 1]} : vector<66x96xf32> to vector<66x8xf32>
    %cst_39 = arith.constant dense<0.000000e+00> : vector<66x66xf32>
    %107 = tpu.matmul %104, %105, %cst_39 {dimension_numbers = #tpu.dot_dimension_numbers<[1], [1], [0], [0], [0, 0, 1, 0], [], []>} : vector<66x8xf32>, vector<66x8xf32>, vector<66x66xf32> -> vector<66x66xf32>
    %cst_40 = arith.constant 0.353553385 : f32
    %108 = vector.broadcast %cst_40 : f32 to vector<66x66xf32>
    %109 = arith.mulf %107, %108 : vector<66x66xf32>
    %cst_41 = arith.constant dense<0xFF800000> : vector<66xf32>
    %110 = vector.multi_reduction <maximumf>, %109, %cst_41 [1] : vector<66x66xf32> to vector<66xf32>
    %111 = vector.shape_cast %110 : vector<66xf32> to vector<66x1xf32>
    %112 = vector.broadcast %111 : vector<66x1xf32> to vector<66x66xf32>
    %113 = arith.subf %109, %112 : vector<66x66xf32>
    %114 = math.exp %113 : vector<66x66xf32>
    %115 = arith.mulf %114, %43 : vector<66x66xf32>
    %cst_42 = arith.constant dense<0.000000e+00> : vector<66xf32>
    %116 = vector.multi_reduction <add>, %115, %cst_42 [1] : vector<66x66xf32> to vector<66xf32>
    %117 = vector.shape_cast %116 : vector<66xf32> to vector<66x1xf32>
    %118 = vector.broadcast %117 : vector<66x1xf32> to vector<66x66xf32>
    %119 = arith.divf %115, %118 : vector<66x66xf32>
    %cst_43 = arith.constant dense<0.000000e+00> : vector<66x8xf32>
    %120 = tpu.matmul %119, %106, %cst_43 {dimension_numbers = #tpu.dot_dimension_numbers<[1], [0], [0], [1], [0, 0, 1, 1], [], []>} : vector<66x66xf32>, vector<66x8xf32>, vector<66x8xf32> -> vector<66x8xf32>
    %121 = vector.extract_strided_slice %44 {offsets = [24, 0], sizes = [8, 32], strides = [1, 1]} : vector<32x32xf32> to vector<8x32xf32>
    %cst_44 = arith.constant dense<0.000000e+00> : vector<66x32xf32>
    %122 = tpu.matmul %120, %121, %cst_44 {dimension_numbers = #tpu.dot_dimension_numbers<[1], [0], [0], [1], [0, 0, 1, 1], [], []>} : vector<66x8xf32>, vector<8x32xf32>, vector<66x32xf32> -> vector<66x32xf32>
    %123 = arith.addf %103, %122 : vector<66x32xf32>
    %124 = arith.addf %1, %123 : vector<66x32xf32>
    %c0_45 = arith.constant 0 : index
    %c0_46 = arith.constant 0 : index
    %125 = vector.load %arg8[%c0_45, %c0_46] : memref<1x32xf32, #tpu.memory_space<vmem>>, vector<1x32xf32>
    %126 = vector.broadcast %125 : vector<1x32xf32> to vector<66x32xf32>
    %127 = arith.addf %124, %126 : vector<66x32xf32>
    %c0_47 = arith.constant 0 : index
    %c0_48 = arith.constant 0 : index
    %128 = vector.load %arg9[%c0_47, %c0_48] : memref<1x32xf32, #tpu.memory_space<vmem>>, vector<1x32xf32>
    %c0_49 = arith.constant 0 : index
    %c0_50 = arith.constant 0 : index
    %129 = vector.load %arg10[%c0_49, %c0_50] : memref<1x32xf32, #tpu.memory_space<vmem>>, vector<1x32xf32>
    %cst_51 = arith.constant dense<0.000000e+00> : vector<66xf32>
    %130 = vector.multi_reduction <add>, %127, %cst_51 [1] : vector<66x32xf32> to vector<66xf32>
    %131 = vector.shape_cast %130 : vector<66xf32> to vector<66x1xf32>
    %cst_52 = arith.constant 3.200000e+01 : f32
    %132 = vector.broadcast %cst_52 : f32 to vector<66x1xf32>
    %133 = arith.divf %131, %132 : vector<66x1xf32>
    %134 = vector.broadcast %133 : vector<66x1xf32> to vector<66x32xf32>
    %135 = arith.subf %127, %134 : vector<66x32xf32>
    %136 = arith.mulf %135, %135 : vector<66x32xf32>
    %cst_53 = arith.constant dense<0.000000e+00> : vector<66xf32>
    %137 = vector.multi_reduction <add>, %136, %cst_53 [1] : vector<66x32xf32> to vector<66xf32>
    %138 = vector.shape_cast %137 : vector<66xf32> to vector<66x1xf32>
    %cst_54 = arith.constant 3.200000e+01 : f32
    %139 = vector.broadcast %cst_54 : f32 to vector<66x1xf32>
    %140 = arith.divf %138, %139 : vector<66x1xf32>
    %141 = vector.broadcast %133 : vector<66x1xf32> to vector<66x32xf32>
    %142 = arith.subf %127, %141 : vector<66x32xf32>
    %cst_55 = arith.constant 9.99999997E-7 : f32
    %143 = vector.broadcast %cst_55 : f32 to vector<66x1xf32>
    %144 = arith.addf %140, %143 : vector<66x1xf32>
    %145 = math.rsqrt %144 : vector<66x1xf32>
    %146 = vector.broadcast %145 : vector<66x1xf32> to vector<66x32xf32>
    %147 = arith.mulf %142, %146 : vector<66x32xf32>
    %148 = vector.broadcast %128 : vector<1x32xf32> to vector<66x32xf32>
    %149 = arith.mulf %147, %148 : vector<66x32xf32>
    %150 = vector.broadcast %129 : vector<1x32xf32> to vector<66x32xf32>
    %151 = arith.addf %149, %150 : vector<66x32xf32>
    %c0_56 = arith.constant 0 : index
    %c0_57 = arith.constant 0 : index
    %152 = vector.load %arg11[%c0_56, %c0_57] : memref<32x128xf32, #tpu.memory_space<vmem>>, vector<32x128xf32>
    %cst_58 = arith.constant dense<0.000000e+00> : vector<66x128xf32>
    %153 = tpu.matmul %151, %152, %cst_58 {dimension_numbers = #tpu.dot_dimension_numbers<[1], [0], [0], [1], [0, 0, 1, 1], [], []>} : vector<66x32xf32>, vector<32x128xf32>, vector<66x128xf32> -> vector<66x128xf32>
    %c0_59 = arith.constant 0 : index
    %c0_60 = arith.constant 0 : index
    %154 = vector.load %arg12[%c0_59, %c0_60] : memref<1x128xf32, #tpu.memory_space<vmem>>, vector<1x128xf32>
    %155 = vector.broadcast %154 : vector<1x128xf32> to vector<66x128xf32>
    %156 = arith.addf %153, %155 : vector<66x128xf32>
    %cst_61 = arith.constant 5.000000e-01 : f32
    %157 = vector.broadcast %cst_61 : f32 to vector<66x128xf32>
    %158 = arith.mulf %157, %156 : vector<66x128xf32>
    %cst_62 = arith.constant 4.471500e-02 : f32
    %159 = vector.broadcast %cst_62 : f32 to vector<66x128xf32>
    %160 = arith.mulf %159, %156 : vector<66x128xf32>
    %161 = arith.mulf %160, %156 : vector<66x128xf32>
    %162 = arith.mulf %161, %156 : vector<66x128xf32>
    %163 = arith.addf %156, %162 : vector<66x128xf32>
    %cst_63 = arith.constant 0.797884583 : f32
    %164 = vector.broadcast %cst_63 : f32 to vector<66x128xf32>
    %165 = arith.mulf %164, %163 : vector<66x128xf32>
    %166 = math.tanh %165 : vector<66x128xf32>
    %cst_64 = arith.constant 1.000000e+00 : f32
    %167 = vector.broadcast %cst_64 : f32 to vector<66x128xf32>
    %168 = arith.addf %167, %166 : vector<66x128xf32>
    %169 = arith.mulf %158, %168 : vector<66x128xf32>
    %c0_65 = arith.constant 0 : index
    %c0_66 = arith.constant 0 : index
    %170 = vector.load %arg13[%c0_65, %c0_66] : memref<128x32xf32, #tpu.memory_space<vmem>>, vector<128x32xf32>
    %cst_67 = arith.constant dense<0.000000e+00> : vector<66x32xf32>
    %171 = tpu.matmul %169, %170, %cst_67 {dimension_numbers = #tpu.dot_dimension_numbers<[1], [0], [0], [1], [0, 0, 1, 1], [], []>} : vector<66x128xf32>, vector<128x32xf32>, vector<66x32xf32> -> vector<66x32xf32>
    %172 = arith.addf %127, %171 : vector<66x32xf32>
    %c0_68 = arith.constant 0 : index
    %c0_69 = arith.constant 0 : index
    %173 = vector.load %arg14[%c0_68, %c0_69] : memref<1x32xf32, #tpu.memory_space<vmem>>, vector<1x32xf32>
    %174 = vector.broadcast %173 : vector<1x32xf32> to vector<66x32xf32>
    %175 = arith.addf %172, %174 : vector<66x32xf32>
    %c0_70 = arith.constant 0 : index
    %c0_71 = arith.constant 0 : index
    %c0_72 = arith.constant 0 : index
    %176 = vector.load %arg15[%c0_70, %c0_71, %c0_72] : memref<1x66x32xf32, #tpu.memory_space<vmem>>, vector<1x66x32xf32>
    %177 = vector.shape_cast %176 : vector<1x66x32xf32> to vector<66x32xf32>
    %178 = vector.shape_cast %175 : vector<66x32xf32> to vector<1x66x32xf32>
    tpu.vector_store %arg15[%c0_70, %c0_71, %c0_72], %178 {strides = array<i32>} : memref<1x66x32xf32, #tpu.memory_space<vmem>>, vector<1x66x32xf32>,
    return
  }
  func.func @transform_0(%arg0: i32) -> (i32, i32, i32) {
    %c0_i32 = arith.constant 0 : i32
    %c0_i32_0 = arith.constant 0 : i32
    %c0_i32_1 = arith.constant 0 : i32
    return %arg0, %c0_i32, %c0_i32_0 : i32, i32, i32
  }
  func.func @transform_1(%arg0: i32) -> (i32, i32, i32) {
    %c0_i32 = arith.constant 0 : i32
    %c0_i32_0 = arith.constant 0 : i32
    %c0_i32_1 = arith.constant 0 : i32
    return %arg0, %c0_i32, %c0_i32_0 : i32, i32, i32
  }
  func.func @transform_2(%arg0: i32) -> (i32, i32) {
    %c0_i32 = arith.constant 0 : i32
    %c0_i32_0 = arith.constant 0 : i32
    %c0_i32_1 = arith.constant 0 : i32
    return %c0_i32, %c0_i32_0 : i32, i32
  }
  func.func @transform_3(%arg0: i32) -> (i32, i32) {
    %c0_i32 = arith.constant 0 : i32
    %c0_i32_0 = arith.constant 0 : i32
    %c0_i32_1 = arith.constant 0 : i32
    return %c0_i32, %c0_i32_0 : i32, i32
  }
  func.func @transform_4(%arg0: i32) -> (i32, i32) {
    %c0_i32 = arith.constant 0 : i32
    %c0_i32_0 = arith.constant 0 : i32
    %c0_i32_1 = arith.constant 0 : i32
    return %c0_i32, %c0_i32_0 : i32, i32
  }
  func.func @transform_5(%arg0: i32) -> (i32, i32) {
    %c0_i32 = arith.constant 0 : i32
    %c0_i32_0 = arith.constant 0 : i32
    %c0_i32_1 = arith.constant 0 : i32
    return %c0_i32, %c0_i32_0 : i32, i32
  }
  func.func @transform_6(%arg0: i32) -> (i32, i32) {
    %c0_i32 = arith.constant 0 : i32
    %c0_i32_0 = arith.constant 0 : i32
    %c0_i32_1 = arith.constant 0 : i32
    return %c0_i32, %c0_i32_0 : i32, i32
  }
  func.func @transform_7(%arg0: i32) -> (i32, i32) {
    %c0_i32 = arith.constant 0 : i32
    %c0_i32_0 = arith.constant 0 : i32
    %c0_i32_1 = arith.constant 0 : i32
    return %c0_i32, %c0_i32_0 : i32, i32
  }
  func.func @transform_8(%arg0: i32) -> (i32, i32) {
    %c0_i32 = arith.constant 0 : i32
    %c0_i32_0 = arith.constant 0 : i32
    %c0_i32_1 = arith.constant 0 : i32
    return %c0_i32, %c0_i32_0 : i32, i32
  }
  func.func @transform_9(%arg0: i32) -> (i32, i32) {
    %c0_i32 = arith.constant 0 : i32
    %c0_i32_0 = arith.constant 0 : i32
    %c0_i32_1 = arith.constant 0 : i32
    return %c0_i32, %c0_i32_0 : i32, i32
  }
  func.func @transform_10(%arg0: i32) -> (i32, i32) {
    %c0_i32 = arith.constant 0 : i32
    %c0_i32_0 = arith.constant 0 : i32
    %c0_i32_1 = arith.constant 0 : i32
    return %c0_i32, %c0_i32_0 : i32, i32
  }
  func.func @transform_11(%arg0: i32) -> (i32, i32) {
    %c0_i32 = arith.constant 0 : i32
    %c0_i32_0 = arith.constant 0 : i32
    %c0_i32_1 = arith.constant 0 : i32
    return %c0_i32, %c0_i32_0 : i32, i32
  }
  func.func @transform_12(%arg0: i32) -> (i32, i32) {
    %c0_i32 = arith.constant 0 : i32
    %c0_i32_0 = arith.constant 0 : i32
    %c0_i32_1 = arith.constant 0 : i32
    return %c0_i32, %c0_i32_0 : i32, i32
  }
  func.func @transform_13(%arg0: i32) -> (i32, i32) {
    %c0_i32 = arith.constant 0 : i32
    %c0_i32_0 = arith.constant 0 : i32
    %c0_i32_1 = arith.constant 0 : i32
    return %c0_i32, %c0_i32_0 : i32, i32
  }
  func.func @transform_14(%arg0: i32) -> (i32, i32, i32) {
    %c0_i32 = arith.constant 0 : i32
    %c0_i32_0 = arith.constant 0 : i32
    %c0_i32_1 = arith.constant 0 : i32
    return %arg0, %c0_i32, %c0_i32_0 : i32, i32, i32
  }
}

</mosaic_0001>

<llo_original>
// kernel: tpu_custom_call.1
$region0: #{tpu_custom_call.1}
  #allocation0 [shape = 'u32[]', space=smem, size = 0x4, offset = 0x4, fixed_abs, tag = 'smem constant byte address 0x4 - core index']
  #allocation1 [shape = 'u32[144,128]{1,0:T(1,128)}', space=vmem, size = 0x12000, scoped, tag = 'internal scratch']
  %s0 = inlined_call_operand.vmem [shape: f32[2,66,32], index: 0, kind: input, shape index: {}]
  %s1 = inlined_call_operand.vmem [shape: f32[2,1,66], index: 1, kind: input, shape index: {}]
  %s2 = inlined_call_operand.vmem [shape: f32[1,32], index: 2, kind: input, shape index: {}]
  %s3 = inlined_call_operand.vmem [shape: f32[1,32], index: 3, kind: input, shape index: {}]
  %s4 = inlined_call_operand.vmem [shape: f32[32,96], index: 4, kind: input, shape index: {}]
  %s5 = inlined_call_operand.vmem [shape: f32[1,96], index: 5, kind: input, shape index: {}]
  %s6 = inlined_call_operand.vmem [shape: f32[32,32], index: 6, kind: input, shape index: {}]
  %s7 = inlined_call_operand.vmem [shape: f32[1,32], index: 7, kind: input, shape index: {}]
  %s8 = inlined_call_operand.vmem [shape: f32[1,32], index: 8, kind: input, shape index: {}]
  %s9 = inlined_call_operand.vmem [shape: f32[1,32], index: 9, kind: input, shape index: {}]
  %s10 = inlined_call_operand.vmem [shape: f32[32,128], index: 10, kind: input, shape index: {}]
  %s11 = inlined_call_operand.vmem [shape: f32[1,128], index: 11, kind: input, shape index: {}]
  %s12 = inlined_call_operand.vmem [shape: f32[128,32], index: 12, kind: input, shape index: {}]
  %s13 = inlined_call_operand.vmem [shape: f32[1,32], index: 13, kind: input, shape index: {}]
  %s14 = inlined_call_operand.vmem [shape: f32[2,66,32], index: 14, kind: output, shape index: {}]
  %s15 = sld [smem:[#allocation0]]
  $region89: #{tpu_custom_call.1} parent=0
    _
  %s17 = ssub.s32 1, %s15
  %s18 = scalar_select 0, %s17, %s15
  loop: start=0, step=1, limit=4
  $region2: #{tpu_custom_call.1} parent=0 // loop_pre_header
    _
  $region3: #{tpu_custom_call.1} parent=0 // loop_header
    %s20 = sphi 0, %s24
    %p21 = scmp.ge.s32.totalorder %s20, 4
    %s30 = sphi 0, %s32
    %s33 = sphi 0, %s30
    %s34 = sphi 0, %s33
    %s50 = sphi 0, %s34
    %s56 = sphi 0, %s58
    %s59 = sphi 0, %s56
    %s60 = sphi 0, %s59
    %s76 = sphi 0, %s60
    %s80 = sphi 0, %s80
    %s82 = sphi 0, %s80
    %s83 = sphi 0, %s82
    %s97 = sphi 0, %s83
    %s101 = sphi 0, %s101
    %s103 = sphi 0, %s101
    %s104 = sphi 0, %s103
    %s118 = sphi 0, %s104
    %s122 = sphi 0, %s122
    %s124 = sphi 0, %s122
    %s125 = sphi 0, %s124
    %s139 = sphi 0, %s125
    %s143 = sphi 0, %s143
    %s145 = sphi 0, %s143
    %s146 = sphi 0, %s145
    %s160 = sphi 0, %s146
    %s164 = sphi 0, %s164
    %s166 = sphi 0, %s164
    %s167 = sphi 0, %s166
    %s181 = sphi 0, %s167
    %s185 = sphi 0, %s185
    %s187 = sphi 0, %s185
    %s188 = sphi 0, %s187
    %s202 = sphi 0, %s188
    %s206 = sphi 0, %s206
    %s208 = sphi 0, %s206
    %s209 = sphi 0, %s208
    %s223 = sphi 0, %s209
    %s227 = sphi 0, %s227
    %s229 = sphi 0, %s227
    %s230 = sphi 0, %s229
    %s244 = sphi 0, %s230
    %s248 = sphi 0, %s248
    %s250 = sphi 0, %s248
    %s251 = sphi 0, %s250
    %s265 = sphi 0, %s251
    %s269 = sphi 0, %s269
    %s271 = sphi 0, %s269
    %s272 = sphi 0, %s271
    %s286 = sphi 0, %s272
    %s290 = sphi 0, %s290
    %s292 = sphi 0, %s290
    %s293 = sphi 0, %s292
    %s307 = sphi 0, %s293
    %s311 = sphi 0, %s311
    %s313 = sphi 0, %s311
    %s314 = sphi 0, %s313
    %s328 = sphi 0, %s314
    %s334 = sphi 0, %s336
    %s337 = sphi 0, %s334
    %s338 = sphi 0, %s337
    %s354 = sphi 0, %s338
  $region4: #{tpu_custom_call.1} parent=0 // loop_header_branch
    %23 = sbr.rel (%p21) target = $region8
  $region5: #{tpu_custom_call.1} parent=0 // loop_body
    %s25 = ssub.s32 %s20, 1
    %s26 = ssub.s32 %s20, 2
    %s27 = sadd.s32 %s20, 1
    %s28 = ssub.s32 %s20, %s27
    %p29 = scmp.eq.s32.totalorder %s28, 0
    %s31 = sadd.s32 %s30, 1
    %s32 = scalar_select %p29, %s30, %s31
    %p35 = pneg %p29
    %p36 = scmp.eq.s32.totalorder %s20, 1
    %p37 = por %p35, %p36
    %p38 = scmp.ne.s32.totalorder %s30, %s33
    %p39 = scmp.eq.s32.totalorder %s20, 0
    %p40 = por %p38, %p39
    %p41 = scmp.ne.s32.totalorder %s30, %s33
    %p42 = scmp.eq.s32.totalorder %s25, 1
    %p43 = por %p41, %p42
    %p44 = scmp.ne.s32.totalorder %s33, %s34
    %p45 = scmp.eq.s32.totalorder %s25, 0
    %p46 = por %p44, %p45
    %p47 = scmp.ne.s32.totalorder %s33, %s34
    %p48 = scmp.eq.s32.totalorder %s26, 1
    %p49 = por %p47, %p48
    %p51 = scmp.ne.s32.totalorder %s34, %s50
    %p52 = scmp.eq.s32.totalorder %s26, 0
    %p53 = por %p51, %p52
    %s54 = ssub.s32 %s20, %s27
    %p55 = scmp.eq.s32.totalorder %s54, 0
    %s57 = sadd.s32 %s56, 1
    %s58 = scalar_select %p55, %s56, %s57
    %p61 = pneg %p55
    %p62 = scmp.eq.s32.totalorder %s20, 1
    %p63 = por %p61, %p62
    %p64 = scmp.ne.s32.totalorder %s56, %s59
    %p65 = scmp.eq.s32.totalorder %s20, 0
    %p66 = por %p64, %p65
    %p67 = scmp.ne.s32.totalorder %s56, %s59
    %p68 = scmp.eq.s32.totalorder %s25, 1
    %p69 = por %p67, %p68
    %p70 = scmp.ne.s32.totalorder %s59, %s60
    %p71 = scmp.eq.s32.totalorder %s25, 0
    %p72 = por %p70, %p71
    %p73 = scmp.ne.s32.totalorder %s59, %s60
    %p74 = scmp.eq.s32.totalorder %s26, 1
    %p75 = por %p73, %p74
    %p77 = scmp.ne.s32.totalorder %s60, %s76
    %p78 = scmp.eq.s32.totalorder %s26, 0
    %p79 = por %p77, %p78
    %s81 = sadd.s32 %s80, 1
    %p84 = scmp.eq.s32.totalorder %s20, 1
    %p85 = scmp.ne.s32.totalorder %s80, %s82
    %p86 = scmp.eq.s32.totalorder %s20, 0
    %p87 = por %p85, %p86
    %p88 = scmp.ne.s32.totalorder %s80, %s82
    %p89 = scmp.eq.s32.totalorder %s25, 1
    %p90 = por %p88, %p89
    %p91 = scmp.ne.s32.totalorder %s82, %s83
    %p92 = scmp.eq.s32.totalorder %s25, 0
    %p93 = por %p91, %p92
    %p94 = scmp.ne.s32.totalorder %s82, %s83
    %p95 = scmp.eq.s32.totalorder %s26, 1
    %p96 = por %p94, %p95
    %p98 = scmp.ne.s32.totalorder %s83, %s97
    %p99 = scmp.eq.s32.totalorder %s26, 0
    %p100 = por %p98, %p99
    %s102 = sadd.s32 %s101, 1
    %p105 = scmp.eq.s32.totalorder %s20, 1
    %p106 = scmp.ne.s32.totalorder %s101, %s103
    %p107 = scmp.eq.s32.totalorder %s20, 0
    %p108 = por %p106, %p107
    %p109 = scmp.ne.s32.totalorder %s101, %s103
    %p110 = scmp.eq.s32.totalorder %s25, 1
    %p111 = por %p109, %p110
    %p112 = scmp.ne.s32.totalorder %s103, %s104
    %p113 = scmp.eq.s32.totalorder %s25, 0
    %p114 = por %p112, %p113
    %p115 = scmp.ne.s32.totalorder %s103, %s104
    %p116 = scmp.eq.s32.totalorder %s26, 1
    %p117 = por %p115, %p116
    %p119 = scmp.ne.s32.totalorder %s104, %s118
    %p120 = scmp.eq.s32.totalorder %s26, 0
    %p121 = por %p119, %p120
    %s123 = sadd.s32 %s122, 1
    %p126 = scmp.eq.s32.totalorder %s20, 1
    %p127 = scmp.ne.s32.totalorder %s122, %s124
    %p128 = scmp.eq.s32.totalorder %s20, 0
    %p129 = por %p127, %p128
    %p130 = scmp.ne.s32.totalorder %s122, %s124
    %p131 = scmp.eq.s32.totalorder %s25, 1
    %p132 = por %p130, %p131
    %p133 = scmp.ne.s32.totalorder %s124, %s125
    %p134 = scmp.eq.s32.totalorder %s25, 0
    %p135 = por %p133, %p134
    %p136 = scmp.ne.s32.totalorder %s124, %s125
    %p137 = scmp.eq.s32.totalorder %s26, 1
    %p138 = por %p136, %p137
    %p140 = scmp.ne.s32.totalorder %s125, %s139
    %p141 = scmp.eq.s32.totalorder %s26, 0
    %p142 = por %p140, %p141
    %s144 = sadd.s32 %s143, 1
    %p147 = scmp.eq.s32.totalorder %s20, 1
    %p148 = scmp.ne.s32.totalorder %s143, %s145
    %p149 = scmp.eq.s32.totalorder %s20, 0
    %p150 = por %p148, %p149
    %p151 = scmp.ne.s32.totalorder %s143, %s145
    %p152 = scmp.eq.s32.totalorder %s25, 1
    %p153 = por %p151, %p152
    %p154 = scmp.ne.s32.totalorder %s145, %s146
    %p155 = scmp.eq.s32.totalorder %s25, 0
    %p156 = por %p154, %p155
    %p157 = scmp.ne.s32.totalorder %s145, %s146
    %p158 = scmp.eq.s32.totalorder %s26, 1
    %p159 = por %p157, %p158
    %p161 = scmp.ne.s32.totalorder %s146, %s160
    %p162 = scmp.eq.s32.totalorder %s26, 0
    %p163 = por %p161, %p162
    %s165 = sadd.s32 %s164, 1
    %p168 = scmp.eq.s32.totalorder %s20, 1
    %p169 = scmp.ne.s32.totalorder %s164, %s166
    %p170 = scmp.eq.s32.totalorder %s20, 0
    %p171 = por %p169, %p170
    %p172 = scmp.ne.s32.totalorder %s164, %s166
    %p173 = scmp.eq.s32.totalorder %s25, 1
    %p174 = por %p172, %p173
    %p175 = scmp.ne.s32.totalorder %s166, %s167
    %p176 = scmp.eq.s32.totalorder %s25, 0
    %p177 = por %p175, %p176
    %p178 = scmp.ne.s32.totalorder %s166, %s167
    %p179 = scmp.eq.s32.totalorder %s26, 1
    %p180 = por %p178, %p179
    %p182 = scmp.ne.s32.totalorder %s167, %s181
    %p183 = scmp.eq.s32.totalorder %s26, 0
    %p184 = por %p182, %p183
    %s186 = sadd.s32 %s185, 1
    %p189 = scmp.eq.s32.totalorder %s20, 1
    %p190 = scmp.ne.s32.totalorder %s185, %s187
    %p191 = scmp.eq.s32.totalorder %s20, 0
    %p192 = por %p190, %p191
    %p193 = scmp.ne.s32.totalorder %s185, %s187
    %p194 = scmp.eq.s32.totalorder %s25, 1
    %p195 = por %p193, %p194
    %p196 = scmp.ne.s32.totalorder %s187, %s188
    %p197 = scmp.eq.s32.totalorder %s25, 0
    %p198 = por %p196, %p197
    %p199 = scmp.ne.s32.totalorder %s187, %s188
    %p200 = scmp.eq.s32.totalorder %s26, 1
    %p201 = por %p199, %p200
    %p203 = scmp.ne.s32.totalorder %s188, %s202
    %p204 = scmp.eq.s32.totalorder %s26, 0
    %p205 = por %p203, %p204
    %s207 = sadd.s32 %s206, 1
    %p210 = scmp.eq.s32.totalorder %s20, 1
    %p211 = scmp.ne.s32.totalorder %s206, %s208
    %p212 = scmp.eq.s32.totalorder %s20, 0
    %p213 = por %p211, %p212
    %p214 = scmp.ne.s32.totalorder %s206, %s208
    %p215 = scmp.eq.s32.totalorder %s25, 1
    %p216 = por %p214, %p215
    %p217 = scmp.ne.s32.totalorder %s208, %s209
    %p218 = scmp.eq.s32.totalorder %s25, 0
    %p219 = por %p217, %p218
    %p220 = scmp.ne.s32.totalorder %s208, %s209
    %p221 = scmp.eq.s32.totalorder %s26, 1
    %p222 = por %p220, %p221
    %p224 = scmp.ne.s32.totalorder %s209, %s223
    %p225 = scmp.eq.s32.totalorder %s26, 0
    %p226 = por %p224, %p225
    %s228 = sadd.s32 %s227, 1
    %p231 = scmp.eq.s32.totalorder %s20, 1
    %p232 = scmp.ne.s32.totalorder %s227, %s229
    %p233 = scmp.eq.s32.totalorder %s20, 0
    %p234 = por %p232, %p233
    %p235 = scmp.ne.s32.totalorder %s227, %s229
    %p236 = scmp.eq.s32.totalorder %s25, 1
    %p237 = por %p235, %p236
    %p238 = scmp.ne.s32.totalorder %s229, %s230
    %p239 = scmp.eq.s32.totalorder %s25, 0
    %p240 = por %p238, %p239
    %p241 = scmp.ne.s32.totalorder %s229, %s230
    %p242 = scmp.eq.s32.totalorder %s26, 1
    %p243 = por %p241, %p242
    %p245 = scmp.ne.s32.totalorder %s230, %s244
    %p246 = scmp.eq.s32.totalorder %s26, 0
    %p247 = por %p245, %p246
    %s249 = sadd.s32 %s248, 1
    %p252 = scmp.eq.s32.totalorder %s20, 1
    %p253 = scmp.ne.s32.totalorder %s248, %s250
    %p254 = scmp.eq.s32.totalorder %s20, 0
    %p255 = por %p253, %p254
    %p256 = scmp.ne.s32.totalorder %s248, %s250
    %p257 = scmp.eq.s32.totalorder %s25, 1
    %p258 = por %p256, %p257
    %p259 = scmp.ne.s32.totalorder %s250, %s251
    %p260 = scmp.eq.s32.totalorder %s25, 0
    %p261 = por %p259, %p260
    %p262 = scmp.ne.s32.totalorder %s250, %s251
    %p263 = scmp.eq.s32.totalorder %s26, 1
    %p264 = por %p262, %p263
    %p266 = scmp.ne.s32.totalorder %s251, %s265
    %p267 = scmp.eq.s32.totalorder %s26, 0
    %p268 = por %p266, %p267
    %s270 = sadd.s32 %s269, 1
    %p273 = scmp.eq.s32.totalorder %s20, 1
    %p274 = scmp.ne.s32.totalorder %s269, %s271
    %p275 = scmp.eq.s32.totalorder %s20, 0
    %p276 = por %p274, %p275
    %p277 = scmp.ne.s32.totalorder %s269, %s271
    %p278 = scmp.eq.s32.totalorder %s25, 1
    %p279 = por %p277, %p278
    %p280 = scmp.ne.s32.totalorder %s271, %s272
    %p281 = scmp.eq.s32.totalorder %s25, 0
    %p282 = por %p280, %p281
    %p283 = scmp.ne.s32.totalorder %s271, %s272
    %p284 = scmp.eq.s32.totalorder %s26, 1
    %p285 = por %p283, %p284
    %p287 = scmp.ne.s32.totalorder %s272, %s286
    %p288 = scmp.eq.s32.totalorder %s26, 0
    %p289 = por %p287, %p288
    %s291 = sadd.s32 %s290, 1
    %p294 = scmp.eq.s32.totalorder %s20, 1
    %p295 = scmp.ne.s32.totalorder %s290, %s292
    %p296 = scmp.eq.s32.totalorder %s20, 0
    %p297 = por %p295, %p296
    %p298 = scmp.ne.s32.totalorder %s290, %s292
    %p299 = scmp.eq.s32.totalorder %s25, 1
    %p300 = por %p298, %p299
    %p301 = scmp.ne.s32.totalorder %s292, %s293
    %p302 = scmp.eq.s32.totalorder %s25, 0
    %p303 = por %p301, %p302
    %p304 = scmp.ne.s32.totalorder %s292, %s293
    %p305 = scmp.eq.s32.totalorder %s26, 1
    %p306 = por %p304, %p305
    %p308 = scmp.ne.s32.totalorder %s293, %s307
    %p309 = scmp.eq.s32.totalorder %s26, 0
    %p310 = por %p308, %p309
    %s312 = sadd.s32 %s311, 1
    %p315 = scmp.eq.s32.totalorder %s20, 1
    %p316 = scmp.ne.s32.totalorder %s311, %s313
    %p317 = scmp.eq.s32.totalorder %s20, 0
    %p318 = por %p316, %p317
    %p319 = scmp.ne.s32.totalorder %s311, %s313
    %p320 = scmp.eq.s32.totalorder %s25, 1
    %p321 = por %p319, %p320
    %p322 = scmp.ne.s32.totalorder %s313, %s314
    %p323 = scmp.eq.s32.totalorder %s25, 0
    %p324 = por %p322, %p323
    %p325 = scmp.ne.s32.totalorder %s313, %s314
    %p326 = scmp.eq.s32.totalorder %s26, 1
    %p327 = por %p325, %p326
    %p329 = scmp.ne.s32.totalorder %s314, %s328
    %p330 = scmp.eq.s32.totalorder %s26, 0
    %p331 = por %p329, %p330
    %s332 = ssub.s32 %s20, %s27
    %p333 = scmp.eq.s32.totalorder %s332, 0
    %s335 = sadd.s32 %s334, 1
    %s336 = scalar_select %p333, %s334, %s335
    %p339 = pneg %p333
    %p340 = scmp.eq.s32.totalorder %s20, 1
    %p341 = por %p339, %p340
    %p342 = scmp.ne.s32.totalorder %s334, %s337
    %p343 = scmp.eq.s32.totalorder %s20, 0
    %p344 = por %p342, %p343
    %p345 = scmp.ne.s32.totalorder %s334, %s337
    %p346 = scmp.eq.s32.totalorder %s25, 1
    %p347 = por %p345, %p346
    %p348 = scmp.ne.s32.totalorder %s337, %s338
    %p349 = scmp.eq.s32.totalorder %s25, 0
    %p350 = por %p348, %p349
    %p351 = scmp.ne.s32.totalorder %s337, %s338
    %p352 = scmp.eq.s32.totalorder %s26, 1
    %p353 = por %p351, %p352
    %p355 = scmp.ne.s32.totalorder %s338, %s354
    %p356 = scmp.eq.s32.totalorder %s26, 0
    %p357 = por %p355, %p356
    %p358 = scmp.le.s32.totalorder 1, %s20
    %p359 = scmp.lt.s32.totalorder %s20, 3
    %p360 = pnand %p358, %p359
    %p361 = pneg %p360
    // Predicated region
    $region9: #{tpu_custom_call.1} parent=5 // pred_check
      _
    $region10: #{tpu_custom_call.1} parent=5 // pred_check_branch
      %363 = sbr.rel (%p360) target = $region12
    $region11: #{tpu_custom_call.1} parent=5 // pred_region
      %s364 = ssub.s32 %s20, 1
      // Predicated region
      $region13: #{tpu_custom_call.1} parent=11 // pred_check
        %p365 = pneg %p93
      $region14: #{tpu_custom_call.1} parent=11 // pred_check_branch
        %367 = sbr.rel (%p365) target = $region16
      $region15: #{tpu_custom_call.1} parent=11 // pred_region
        _
      $region16: #{tpu_custom_call.1} parent=11 // pred_fallthru
        _
      // Predicated region
      $region17: #{tpu_custom_call.1} parent=11 // pred_check
        %p368 = pneg %p114
      $region18: #{tpu_custom_call.1} parent=11 // pred_check_branch
        %370 = sbr.rel (%p368) target = $region20
      $region19: #{tpu_custom_call.1} parent=11 // pred_region
        _
      $region20: #{tpu_custom_call.1} parent=11 // pred_fallthru
        _
      // Predicated region
      $region21: #{tpu_custom_call.1} parent=11 // pred_check
        %p371 = pneg %p135
      $region22: #{tpu_custom_call.1} parent=11 // pred_check_branch
        %373 = sbr.rel (%p371) target = $region24
      $region23: #{tpu_custom_call.1} parent=11 // pred_region
        _
      $region24: #{tpu_custom_call.1} parent=11 // pred_fallthru
        _
      // Predicated region
      $region25: #{tpu_custom_call.1} parent=11 // pred_check
        %p374 = pneg %p156
      $region26: #{tpu_custom_call.1} parent=11 // pred_check_branch
        %376 = sbr.rel (%p374) target = $region28
      $region27: #{tpu_custom_call.1} parent=11 // pred_region
        _
      $region28: #{tpu_custom_call.1} parent=11 // pred_fallthru
        _
      // Predicated region
      $region29: #{tpu_custom_call.1} parent=11 // pred_check
        %p377 = pneg %p177
      $region30: #{tpu_custom_call.1} parent=11 // pred_check_branch
        %379 = sbr.rel (%p377) target = $region32
      $region31: #{tpu_custom_call.1} parent=11 // pred_region
        _
      $region32: #{tpu_custom_call.1} parent=11 // pred_fallthru
        _
      // Predicated region
      $region33: #{tpu_custom_call.1} parent=11 // pred_check
        %p380 = pneg %p198
      $region34: #{tpu_custom_call.1} parent=11 // pred_check_branch
        %382 = sbr.rel (%p380) target = $region36
      $region35: #{tpu_custom_call.1} parent=11 // pred_region
        _
      $region36: #{tpu_custom_call.1} parent=11 // pred_fallthru
        _
      // Predicated region
      $region37: #{tpu_custom_call.1} parent=11 // pred_check
        %p383 = pneg %p219
      $region38: #{tpu_custom_call.1} parent=11 // pred_check_branch
        %385 = sbr.rel (%p383) target = $region40
      $region39: #{tpu_custom_call.1} parent=11 // pred_region
        _
      $region40: #{tpu_custom_call.1} parent=11 // pred_fallthru
        _
      // Predicated region
      $region41: #{tpu_custom_call.1} parent=11 // pred_check
        %p386 = pneg %p240
      $region42: #{tpu_custom_call.1} parent=11 // pred_check_branch
        %388 = sbr.rel (%p386) target = $region44
      $region43: #{tpu_custom_call.1} parent=11 // pred_region
        _
      $region44: #{tpu_custom_call.1} parent=11 // pred_fallthru
        _
      // Predicated region
      $region45: #{tpu_custom_call.1} parent=11 // pred_check
        %p389 = pneg %p261
      $region46: #{tpu_custom_call.1} parent=11 // pred_check_branch
        %391 = sbr.rel (%p389) target = $region48
      $region47: #{tpu_custom_call.1} parent=11 // pred_region
        _
      $region48: #{tpu_custom_call.1} parent=11 // pred_fallthru
        _
      // Predicated region
      $region49: #{tpu_custom_call.1} parent=11 // pred_check
        %p392 = pneg %p282
      $region50: #{tpu_custom_call.1} parent=11 // pred_check_branch
        %394 = sbr.rel (%p392) target = $region52
      $region51: #{tpu_custom_call.1} parent=11 // pred_region
        _
      $region52: #{tpu_custom_call.1} parent=11 // pred_fallthru
        _
      // Predicated region
      $region53: #{tpu_custom_call.1} parent=11 // pred_check
        %p395 = pneg %p303
      $region54: #{tpu_custom_call.1} parent=11 // pred_check_branch
        %397 = sbr.rel (%p395) target = $region56
      $region55: #{tpu_custom_call.1} parent=11 // pred_region
        _
      $region56: #{tpu_custom_call.1} parent=11 // pred_fallthru
        _
      // Predicated region
      $region57: #{tpu_custom_call.1} parent=11 // pred_check
        %p398 = pneg %p324
      $region58: #{tpu_custom_call.1} parent=11 // pred_check_branch
        %400 = sbr.rel (%p398) target = $region60
      $region59: #{tpu_custom_call.1} parent=11 // pred_region
        _
      $region60: #{tpu_custom_call.1} parent=11 // pred_fallthru
        _
    $region12: #{tpu_custom_call.1} parent=5 // pred_fallthru
      _
    %p401 = scmp.lt.s32.totalorder %s20, 2
    // Predicated region
    $region61: #{tpu_custom_call.1} parent=5 // pred_check
      %p402 = pneg %p401
    $region62: #{tpu_custom_call.1} parent=5 // pred_check_branch
      %404 = sbr.rel (%p402) target = $region64
    $region63: #{tpu_custom_call.1} parent=5 // pred_region
      // Predicated region
      $region65: #{tpu_custom_call.1} parent=63 // pred_check
        %p405 = pneg %p40
      $region66: #{tpu_custom_call.1} parent=63 // pred_check_branch
        %407 = sbr.rel (%p405) target = $region68
      $region67: #{tpu_custom_call.1} parent=63 // pred_region
        %p408 = scmp.lt.s32.totalorder %s20, 1
        %s409 = scalar_select %p408, %s20, 1
        %s410 = smul.addr %s409, 9
        %s411 = smul.addr %s410, 8
        %s412 = scalar_lea.vmem %s0, %s411
      $region68: #{tpu_custom_call.1} parent=63 // pred_fallthru
        _
      // Predicated region
      $region69: #{tpu_custom_call.1} parent=63 // pred_check
        %p413 = pneg %p66
      $region70: #{tpu_custom_call.1} parent=63 // pred_check_branch
        %415 = sbr.rel (%p413) target = $region72
      $region71: #{tpu_custom_call.1} parent=63 // pred_region
        %p416 = scmp.lt.s32.totalorder %s20, 1
        %s417 = scalar_select %p416, %s20, 1
        %s418 = scalar_lea.vmem %s1, %s417
      $region72: #{tpu_custom_call.1} parent=63 // pred_fallthru
        _
    $region64: #{tpu_custom_call.1} parent=5 // pred_fallthru
      _
    %p419 = scmp.le.s32.totalorder 1, %s20
    %p420 = scmp.lt.s32.totalorder %s20, 3
    %p421 = pnand %p419, %p420
    %p422 = pneg %p421
    // Predicated region
    $region73: #{tpu_custom_call.1} parent=5 // pred_check
      _
    $region74: #{tpu_custom_call.1} parent=5 // pred_check_branch
      %424 = sbr.rel (%p421) target = $region76
    $region75: #{tpu_custom_call.1} parent=5 // pred_region
      %s425 = ssub.s32 %s20, 1
      %p426 = scmp.lt.s32.totalorder %s25, 1
      %s427 = scalar_select %p426, %s25, 1
      %s428 = smul.addr %s427, 9
      %s429 = smul.addr %s428, 8
      %s430 = scalar_lea.vmem %s0, %s429
      %p431 = pneg %p46
      %p432 = pneg %p43
      %p433 = scmp.lt.s32.totalorder %s25, 1
      %s434 = scalar_select %p433, %s25, 1
      %s435 = scalar_lea.vmem %s1, %s434
      %p436 = pneg %p72
      %p437 = pneg %p69
      %p438 = pneg %p93
      %p439 = pneg %p90
      %p440 = pneg %p114
      %p441 = pneg %p111
      %p442 = pneg %p135
      %p443 = pneg %p132
      %p444 = pneg %p156
      %p445 = pneg %p153
      %p446 = pneg %p177
      %p447 = pneg %p174
      %p448 = pneg %p198
      %p449 = pneg %p195
      %p450 = pneg %p219
      %p451 = pneg %p216
      %p452 = pneg %p240
      %p453 = pneg %p237
      %p454 = pneg %p261
      %p455 = pneg %p258
      %p456 = pneg %p282
      %p457 = pneg %p279
      %p458 = pneg %p303
      %p459 = pneg %p300
      %p460 = pneg %p324
      %p461 = pneg %p321
      %p462 = pneg %p350
      %p463 = pneg %p347
      %p464 = scmp.lt.s32.totalorder %s25, 1
      %s465 = scalar_select %p464, %s25, 1
      %s466 = smul.addr %s465, 9
      %s467 = smul.addr %s466, 8
      %s468 = scalar_lea.vmem %s14, %s467
      %p469 = scmp.lt.s32.totalorder %s25, 1
      %s470 = scalar_select %p469, %s25, 1
      %s471 = smul.addr %s470, 9
      %s472 = smul.addr %s471, 8
      %s473 = scalar_lea.vmem %s0, %s472
      %p474 = scmp.lt.s32.totalorder %s25, 1
      %s475 = scalar_select %p474, %s25, 1
      %s476 = scalar_lea.vmem %s1, %s475
      %p477 = scmp.lt.s32.totalorder %s25, 1
      %s478 = scalar_select %p477, %s25, 1
      %s479 = smul.addr %s478, 9
      %s480 = smul.addr %s479, 8
      %s481 = scalar_lea.vmem %s14, %s480
      %v482 = vld [vmem:[%s473] sm:$0xff]
      %v483 = vld [vmem:[%s473 + $0x8] sm:$0xff]
      %v484 = vld [vmem:[%s473 + $0x10] sm:$0xff]
      %v485 = vld [vmem:[%s473 + $0x18] sm:$0xff]
      %v486 = vld [vmem:[%s473 + $0x20] sm:$0xff]
      %v487 = vld [vmem:[%s473 + $0x28] sm:$0xff]
      %v488 = vld [vmem:[%s473 + $0x30] sm:$0xff]
      %v489 = vld [vmem:[%s473 + $0x38] sm:$0xff]
      %v490 = vld [vmem:[%s473 + $0x40] sm:$0x3]
      %v491 = vld [vmem:[%s476] sm:$0x1]
      %v492 = vld [vmem:[%s2] sm:$0x1]
      %v493 = vld [vmem:[%s3] sm:$0x1]
      %vm494 = vcmask 261120
      %v495 = vsel %vm494, %v482, 0.0
      %496 = vadd.xlane.f32.xlu0 %v495
      %v497 = vpop.xlane.xlu0 %496
      %v498 = vsel %vm494, %v483, 0.0
      %499 = vadd.xlane.f32.xlu0 %v498
      %v500 = vpop.xlane.xlu0 %499
      %v501 = vsel %vm494, %v484, 0.0
      %502 = vadd.xlane.f32.xlu0 %v501
      %v503 = vpop.xlane.xlu0 %502
      %v504 = vsel %vm494, %v485, 0.0
      %505 = vadd.xlane.f32.xlu0 %v504
      %v506 = vpop.xlane.xlu0 %505
      %v507 = vsel %vm494, %v486, 0.0
      %508 = vadd.xlane.f32.xlu0 %v507
      %v509 = vpop.xlane.xlu0 %508
      %v510 = vsel %vm494, %v487, 0.0
      %511 = vadd.xlane.f32.xlu0 %v510
      %v512 = vpop.xlane.xlu0 %511
      %v513 = vsel %vm494, %v488, 0.0
      %514 = vadd.xlane.f32.xlu0 %v513
      %v515 = vpop.xlane.xlu0 %514
      %v516 = vsel %vm494, %v489, 0.0
      %517 = vadd.xlane.f32.xlu0 %v516
      %v518 = vpop.xlane.xlu0 %517
      %vm519 = vcmask 254976
      %v520 = vsel %vm519, %v490, 0.0
      %521 = vadd.xlane.f32.xlu0 %v520
      %v522 = vpop.xlane.xlu0 %521
      %v523 = vrcp.pop 32.0
      %v524 = vmul.f32 %v497, %v523
      %v525 = vmul.f32 %v500, %v523
      %v526 = vmul.f32 %v503, %v523
      %v527 = vmul.f32 %v506, %v523
      %v528 = vmul.f32 %v509, %v523
      %v529 = vmul.f32 %v512, %v523
      %v530 = vmul.f32 %v515, %v523
      %v531 = vmul.f32 %v518, %v523
      %v532 = vmul.f32 %v522, %v523
      %v533 = vsub.f32 %v482, %v524
      %v534 = vsub.f32 %v483, %v525
      %v535 = vsub.f32 %v484, %v526
      %v536 = vsub.f32 %v485, %v527
      %v537 = vsub.f32 %v486, %v528
      %v538 = vsub.f32 %v487, %v529
      %v539 = vsub.f32 %v488, %v530
      %v540 = vsub.f32 %v489, %v531
      %v541 = vsub.f32 %v490, %v532
      %v542 = vmul.f32 %v533, %v533
      %v543 = vmul.f32 %v534, %v534
      %v544 = vmul.f32 %v535, %v535
      %v545 = vmul.f32 %v536, %v536
      %v546 = vmul.f32 %v537, %v537
      %v547 = vmul.f32 %v538, %v538
      %v548 = vmul.f32 %v539, %v539
      %v549 = vmul.f32 %v540, %v540
      %v550 = vmul.f32 %v541, %v541
      %v551 = vsel %vm494, %v542, 0.0
      %552 = vadd.xlane.f32.xlu0 %v551
      %v553 = vpop.xlane.xlu0 %552
      %v554 = vsel %vm494, %v543, 0.0
      %555 = vadd.xlane.f32.xlu0 %v554
      %v556 = vpop.xlane.xlu0 %555
      %v557 = vsel %vm494, %v544, 0.0
      %558 = vadd.xlane.f32.xlu0 %v557
      %v559 = vpop.xlane.xlu0 %558
      %v560 = vsel %vm494, %v545, 0.0
      %561 = vadd.xlane.f32.xlu0 %v560
      %v562 = vpop.xlane.xlu0 %561
      %v563 = vsel %vm494, %v546, 0.0
      %564 = vadd.xlane.f32.xlu0 %v563
      %v565 = vpop.xlane.xlu0 %564
      %v566 = vsel %vm494, %v547, 0.0
      %567 = vadd.xlane.f32.xlu0 %v566
      %v568 = vpop.xlane.xlu0 %567
      %v569 = vsel %vm494, %v548, 0.0
      %570 = vadd.xlane.f32.xlu0 %v569
      %v571 = vpop.xlane.xlu0 %570
      %v572 = vsel %vm494, %v549, 0.0
      %573 = vadd.xlane.f32.xlu0 %v572
      %v574 = vpop.xlane.xlu0 %573
      %v575 = vsel %vm519, %v550, 0.0
      %576 = vadd.xlane.f32.xlu0 %v575
      %v577 = vpop.xlane.xlu0 %576
      %v578 = vmul.f32 %v553, %v523
      %v579 = vmul.f32 %v556, %v523
      %v580 = vmul.f32 %v559, %v523
      %v581 = vmul.f32 %v562, %v523
      %v582 = vmul.f32 %v565, %v523
      %v583 = vmul.f32 %v568, %v523
      %v584 = vmul.f32 %v571, %v523
      %v585 = vmul.f32 %v574, %v523
      %v586 = vmul.f32 %v577, %v523
      %v587 = vadd.f32 %v578, 1e-06
      %v588 = vadd.f32 %v579, 1e-06
      %v589 = vadd.f32 %v580, 1e-06
      %v590 = vadd.f32 %v581, 1e-06
      %v591 = vadd.f32 %v582, 1e-06
      %v592 = vadd.f32 %v583, 1e-06
      %v593 = vadd.f32 %v584, 1e-06
      %v594 = vadd.f32 %v585, 1e-06
      %v595 = vadd.f32 %v586, 1e-06
      %v596 = vrsqrt.pop %v587
      %v597 = vrsqrt.pop %v588
      %v598 = vrsqrt.pop %v589
      %v599 = vrsqrt.pop %v590
      %v600 = vrsqrt.pop %v591
      %v601 = vrsqrt.pop %v592
      %v602 = vrsqrt.pop %v593
      %v603 = vrsqrt.pop %v594
      %v604 = vrsqrt.pop %v595
      %v605 = vmul.f32 %v533, %v596
      %v606 = vmul.f32 %v534, %v597
      %v607 = vmul.f32 %v535, %v598
      %v608 = vmul.f32 %v536, %v599
      %v609 = vmul.f32 %v537, %v600
      %v610 = vmul.f32 %v538, %v601
      %v611 = vmul.f32 %v539, %v602
      %v612 = vmul.f32 %v540, %v603
      %v613 = vmul.f32 %v541, %v604
      %v615 = vlaneseq
      %v616 = vshrl.u32 %v615, 7
      %v617 = vsub.s32 0, %v616
      %v618 = vrot.slane %v492, %v617
      %v620 = vmul.f32 %v605, %v618
      %v621 = vmul.f32 %v606, %v618
      %v622 = vmul.f32 %v607, %v618
      %v623 = vmul.f32 %v608, %v618
      %v624 = vmul.f32 %v609, %v618
      %v625 = vmul.f32 %v610, %v618
      %v626 = vmul.f32 %v611, %v618
      %v627 = vmul.f32 %v612, %v618
      %v628 = vmul.f32 %v613, %v618
      %v630 = vlaneseq
      %v631 = vshrl.u32 %v630, 7
      %v632 = vsub.s32 0, %v631
      %v633 = vrot.slane %v493, %v632
      %v635 = vadd.f32 %v620, %v633
      %v636 = vadd.f32 %v621, %v633
      %v637 = vadd.f32 %v622, %v633
      %v638 = vadd.f32 %v623, %v633
      %v639 = vadd.f32 %v624, %v633
      %v640 = vadd.f32 %v625, %v633
      %v641 = vadd.f32 %v626, %v633
      %v642 = vadd.f32 %v627, %v633
      %v643 = vadd.f32 %v628, %v633
      %v644 = vld [vmem:[%s4] sm:$0xff]
      %v645 = vld [vmem:[%s4 + $0x8] sm:$0xff]
      %v646 = vld [vmem:[%s4 + $0x10] sm:$0xff]
      %v647 = vld [vmem:[%s4 + $0x18] sm:$0xff]
      %v648 = vld [vmem:[%s5] sm:$0x1]
      %v650 = vlaneseq
      %v651 = vshrl.u32 %v650, 7
      %v652 = vsub.s32 0, %v651
      %v653 = vrot.slane %v648, %v652
      %v656 = vsel %vm494, %v635, 0
      %v659 = vsel %vm494, %v636, 0
      %v662 = vsel %vm494, %v637, 0
      %v665 = vsel %vm494, %v638, 0
      %v668 = vsel %vm494, %v639, 0
      %v671 = vsel %vm494, %v640, 0
      %v674 = vsel %vm494, %v641, 0
      %v677 = vsel %vm494, %v642, 0
      %v680 = vsel %vm494, %v643, 0
      %682 = vmatprep.subr.mxu0 0.0
      %683 = vmatpush1.msra.mxu0 %v644
      %684 = vmatprep.subr.mxu0 0.0
      %685 = vmatpush1.msra.mxu0 %v645
      %686 = vmatprep.subr.mxu0 0.0
      %687 = vmatpush1.msra.mxu0 %v646
      %688 = vmatprep.subr.mxu0 0.0
      %689 = vmatpush1.msra.mxu0 %v647
      %690 = vmatprep.subr.mxu0 0.0
      %691 = vmatpush1.msra.mxu0 0.0
      %692 = vmatprep.subr.mxu0 0.0
      %693 = vmatpush1.msra.mxu0 0.0
      %694 = vmatprep.subr.mxu0 0.0
      %695 = vmatpush1.msra.mxu0 0.0
      %696 = vmatprep.subr.mxu0 0.0
      %697 = vmatpush1.msra.mxu0 0.0
      %698 = vmatprep.subr.mxu0 0.0
      %699 = vmatpush1.msra.mxu0 0.0
      %700 = vmatprep.subr.mxu0 0.0
      %701 = vmatpush1.msra.mxu0 0.0
      %702 = vmatprep.subr.mxu0 0.0
      %703 = vmatpush1.msra.mxu0 0.0
      %704 = vmatprep.subr.mxu0 0.0
      %705 = vmatpush1.msra.mxu0 0.0
      %706 = vmatprep.subr.mxu0 0.0
      %707 = vmatpush1.msra.mxu0 0.0
      %708 = vmatprep.subr.mxu0 0.0
      %709 = vmatpush1.msra.mxu0 0.0
      %710 = vmatprep.subr.mxu0 0.0
      %711 = vmatpush1.msra.mxu0 0.0
      %712 = vmatprep.subr.mxu0 0.0
      %713 = vmatpush1.msra.mxu0 0.0
      %714 = vmatprep.subr.mxu0 0.0
      %715 = vmatpush1.msra.mxu0 0.0
      %716 = vmatprep.subr.mxu0 0.0
      %717 = vmatpush1.msra.mxu0 0.0
      %718 = vmatprep.subr.mxu0 0.0
      %719 = vmatpush1.msra.mxu0 0.0
      %720 = vmatprep.subr.mxu0 0.0
      %721 = vmatpush1.msra.mxu0 0.0
      %722 = vmatprep.subr.mxu0 0.0
      %723 = vmatpush1.msra.mxu0 0.0
      %724 = vmatprep.subr.mxu0 0.0
      %725 = vmatpush1.msra.mxu0 0.0
      %726 = vmatprep.subr.mxu0 0.0
      %727 = vmatpush1.msra.mxu0 0.0
      %728 = vmatprep.subr.mxu0 0.0
      %729 = vmatpush1.msra.mxu0 0.0
      %730 = vmatprep.subr.mxu0 0.0
      %731 = vmatpush1.msra.mxu0 0.0
      %732 = vmatprep.subr.mxu0 0.0
      %733 = vmatpush1.msra.mxu0 0.0
      %734 = vmatprep.subr.mxu0 0.0
      %735 = vmatpush1.msra.mxu0 0.0
      %736 = vmatprep.subr.mxu0 0.0
      %737 = vmatpush1.msra.mxu0 0.0
      %738 = vmatprep.subr.mxu0 0.0
      %739 = vmatpush1.msra.mxu0 0.0
      %740 = vmatprep.subr.mxu0 0.0
      %741 = vmatpush1.msra.mxu0 0.0
      %742 = vmatprep.subr.mxu0 0.0
      %743 = vmatpush1.msra.mxu0 0.0
      %744 = vmatprep.subr.mxu0 0.0
      %745 = vmatpush1.msra.mxu0 0.0
      %746 = vmatprep.mubr.f32.mxu0 0.0
      %747 = vmatmul.mubr.f32.gmra.mrb[0].mxu0 %v656
      %v748 = vpop.f32.mrb[0].mxu0
      %v749 = vadd.f32 %v653, %v748
      %v750 = vpop.f32.mrb[0].mxu0
      %751 = vmatprep.mubr.f32.mxu0 0.0
      %752 = vmatmul.mubr.f32.gmra.mrb[0].mxu0 %v659
      %v753 = vpop.f32.mrb[0].mxu0
      %v754 = vadd.f32 %v653, %v753
      %v755 = vpop.f32.mrb[0].mxu0
      %756 = vmatprep.mubr.f32.mxu0 0.0
      %757 = vmatmul.mubr.f32.gmra.mrb[0].mxu0 %v662
      %v758 = vpop.f32.mrb[0].mxu0
      %v759 = vadd.f32 %v653, %v758
      %v760 = vpop.f32.mrb[0].mxu0
      %761 = vmatprep.mubr.f32.mxu0 0.0
      %762 = vmatmul.mubr.f32.gmra.mrb[0].mxu0 %v665
      %v763 = vpop.f32.mrb[0].mxu0
      %v764 = vadd.f32 %v653, %v763
      %v765 = vpop.f32.mrb[0].mxu0
      %766 = vmatprep.mubr.f32.mxu0 0.0
      %767 = vmatmul.mubr.f32.gmra.mrb[0].mxu0 %v668
      %v768 = vpop.f32.mrb[0].mxu0
      %v769 = vadd.f32 %v653, %v768
      %v770 = vpop.f32.mrb[0].mxu0
      %771 = vmatprep.mubr.f32.mxu0 0.0
      %772 = vmatmul.mubr.f32.gmra.mrb[0].mxu0 %v671
      %v773 = vpop.f32.mrb[0].mxu0
      %v774 = vadd.f32 %v653, %v773
      %v775 = vpop.f32.mrb[0].mxu0
      %776 = vmatprep.mubr.f32.mxu0 0.0
      %777 = vmatmul.mubr.f32.gmra.mrb[0].mxu0 %v674
      %v778 = vpop.f32.mrb[0].mxu0
      %v779 = vadd.f32 %v653, %v778
      %v780 = vpop.f32.mrb[0].mxu0
      %781 = vmatprep.mubr.f32.mxu0 0.0
      %782 = vmatmul.mubr.f32.gmra.mrb[0].mxu0 %v677
      %v783 = vpop.f32.mrb[0].mxu0
      %v784 = vadd.f32 %v653, %v783
      %v785 = vpop.f32.mrb[0].mxu0
      %786 = vmatprep.mubr.f32.mxu0 0.0
      %787 = vmatmul.mubr.f32.gmra.mrb[0].mxu0 %v680
      %v788 = vpop.f32.mrb[0].mxu0
      %v789 = vadd.f32 %v653, %v788
      %v790 = vpop.f32.mrb[0].mxu0
      %791 = vdwg.mxu0
      %v792 = vlaneseq
      %v793 = vshrl.u32 %v792, 7
      %v794 = vadd.s32 %v793, 8
      %v795 = vadd.s32 %v793, 16
      %v796 = vadd.s32 %v793, 24
      %v797 = vadd.s32 %v793, 32
      %v798 = vadd.s32 %v793, 40
      %v799 = vadd.s32 %v793, 48
      %v800 = vadd.s32 %v793, 56
      %v801 = vadd.s32 %v793, 64
      %v802 = vlaneseq
      %v803 = vand.u32 %v802, 127
      %vm804 = vcmp.eq.s32.totalorder %v793, %v803
      %vm805 = vcmp.eq.s32.totalorder %v794, %v803
      %vm806 = vcmp.eq.s32.totalorder %v795, %v803
      %vm807 = vcmp.eq.s32.totalorder %v796, %v803
      %vm808 = vcmp.eq.s32.totalorder %v797, %v803
      %vm809 = vcmp.eq.s32.totalorder %v798, %v803
      %vm810 = vcmp.eq.s32.totalorder %v799, %v803
      %vm811 = vcmp.eq.s32.totalorder %v800, %v803
      %vm812 = vcmp.eq.s32.totalorder %v801, %v803
      %v813 = vsel %vm804, 1, 0
      %v814 = vsel %vm805, 1, 0
      %v815 = vsel %vm806, 1, 0
      %v816 = vsel %vm807, 1, 0
      %v817 = vsel %vm808, 1, 0
      %v818 = vsel %vm809, 1, 0
      %v819 = vsel %vm810, 1, 0
      %v820 = vsel %vm811, 1, 0
      %v821 = vsel %vm812, 1, 0
      %v822 = vcvt.s32.f32 %v813
      %v823 = vcvt.s32.f32 %v814
      %v824 = vcvt.s32.f32 %v815
      %v825 = vcvt.s32.f32 %v816
      %v826 = vcvt.s32.f32 %v817
      %v827 = vcvt.s32.f32 %v818
      %v828 = vcvt.s32.f32 %v819
      %v829 = vcvt.s32.f32 %v820
      %v830 = vcvt.s32.f32 %v821
      %v831 = vsub.f32 1.0, %v491
      %v833 = vlaneseq
      %v834 = vshrl.u32 %v833, 7
      %v835 = vsub.s32 0, %v834
      %v836 = vrot.slane %v831, %v835
      %v838 = vmul.f32 %v836, %v822
      %v839 = vmul.f32 %v836, %v823
      %v840 = vmul.f32 %v836, %v824
      %v841 = vmul.f32 %v836, %v825
      %v842 = vmul.f32 %v836, %v826
      %v843 = vmul.f32 %v836, %v827
      %v844 = vmul.f32 %v836, %v828
      %v845 = vmul.f32 %v836, %v829
      %v846 = vmul.f32 %v836, %v830
      %v848 = vlaneseq
      %v849 = vshrl.u32 %v848, 7
      %v850 = vsub.s32 0, %v849
      %v851 = vrot.slane %v491, %v850
      %v853 = vadd.f32 %v851, %v838
      %v854 = vadd.f32 %v851, %v839
      %v855 = vadd.f32 %v851, %v840
      %v856 = vadd.f32 %v851, %v841
      %v857 = vadd.f32 %v851, %v842
      %v858 = vadd.f32 %v851, %v843
      %v859 = vadd.f32 %v851, %v844
      %v860 = vadd.f32 %v851, %v845
      %v861 = vadd.f32 %v851, %v846
      %v862 = vld [vmem:[%s6] sm:$0xff]
      %v863 = vld [vmem:[%s6 + $0x8] sm:$0xff]
      %v864 = vld [vmem:[%s6 + $0x10] sm:$0xff]
      %v865 = vld [vmem:[%s6 + $0x18] sm:$0xff]
      %875 = vrot.lane.b32.xlu0 %v749, 96
      %v876 = vpop.permute.xlu0 %875
      %877 = vrot.lane.b32.xlu0 %v754, 96
      %v878 = vpop.permute.xlu0 %877
      %879 = vrot.lane.b32.xlu0 %v759, 96
      %v880 = vpop.permute.xlu0 %879
      %881 = vrot.lane.b32.xlu0 %v764, 96
      %v882 = vpop.permute.xlu0 %881
      %883 = vrot.lane.b32.xlu0 %v769, 96
      %v884 = vpop.permute.xlu0 %883
      %885 = vrot.lane.b32.xlu0 %v774, 96
      %v886 = vpop.permute.xlu0 %885
      %887 = vrot.lane.b32.xlu0 %v779, 96
      %v888 = vpop.permute.xlu0 %887
      %889 = vrot.lane.b32.xlu0 %v784, 96
      %v890 = vpop.permute.xlu0 %889
      %891 = vrot.lane.b32.xlu0 %v789, 96
      %v892 = vpop.permute.xlu0 %891
      %vm893 = vcmask 64512
      %v894 = vsel %vm893, %v749, 0
      %v896 = vsel %vm893, %v754, 0
      %v898 = vsel %vm893, %v759, 0
      %v900 = vsel %vm893, %v764, 0
      %v902 = vsel %vm893, %v769, 0
      %v904 = vsel %vm893, %v774, 0
      %v906 = vsel %vm893, %v779, 0
      %v908 = vsel %vm893, %v784, 0
      %v910 = vsel %vm893, %v789, 0
      %v912 = vsel %vm893, %v876, 0
      %v914 = vsel %vm893, %v878, 0
      %v916 = vsel %vm893, %v880, 0
      %v918 = vsel %vm893, %v882, 0
      %v920 = vsel %vm893, %v884, 0
      %v922 = vsel %vm893, %v886, 0
      %v924 = vsel %vm893, %v888, 0
      %v926 = vsel %vm893, %v890, 0
      %v928 = vsel %vm893, %v892, 0
      %930 = vmatprep.subr.mxu0 0.0
      %931 = vmatpush1.xpose.msra.mxu0 %v912
      %932 = vmatprep.subr.mxu0 0.0
      %933 = vmatpush1.xpose.msra.mxu0 %v914
      %934 = vmatprep.subr.mxu0 0.0
      %935 = vmatpush1.xpose.msra.mxu0 %v916
      %936 = vmatprep.subr.mxu0 0.0
      %937 = vmatpush1.xpose.msra.mxu0 %v918
      %938 = vmatprep.subr.mxu0 0.0
      %939 = vmatpush1.xpose.msra.mxu0 %v920
      %940 = vmatprep.subr.mxu0 0.0
      %941 = vmatpush1.xpose.msra.mxu0 %v922
      %942 = vmatprep.subr.mxu0 0.0
      %943 = vmatpush1.xpose.msra.mxu0 %v924
      %944 = vmatprep.subr.mxu0 0.0
      %945 = vmatpush1.xpose.msra.mxu0 %v926
      %946 = vmatprep.subr.mxu0 0.0
      %947 = vmatpush1.xpose.msra.mxu0 %v928
      %948 = vmatprep.subr.mxu0 0.0
      %949 = vmatpush1.xpose.msra.mxu0 0.0
      %950 = vmatprep.subr.mxu0 0.0
      %951 = vmatpush1.xpose.msra.mxu0 0.0
      %952 = vmatprep.subr.mxu0 0.0
      %953 = vmatpush1.xpose.msra.mxu0 0.0
      %954 = vmatprep.subr.mxu0 0.0
      %955 = vmatpush1.xpose.msra.mxu0 0.0
      %956 = vmatprep.subr.mxu0 0.0
      %957 = vmatpush1.xpose.msra.mxu0 0.0
      %958 = vmatprep.subr.mxu0 0.0
      %959 = vmatpush1.xpose.msra.mxu0 0.0
      %960 = vmatprep.subr.mxu0 0.0
      %961 = vmatpush1.xpose.msra.mxu0 0.0
      %962 = vmatprep.subr.mxu0 0.0
      %963 = vmatpush1.xpose.msra.mxu0 0.0
      %964 = vmatprep.subr.mxu0 0.0
      %965 = vmatpush1.xpose.msra.mxu0 0.0
      %966 = vmatprep.subr.mxu0 0.0
      %967 = vmatpush1.xpose.msra.mxu0 0.0
      %968 = vmatprep.subr.mxu0 0.0
      %969 = vmatpush1.xpose.msra.mxu0 0.0
      %970 = vmatprep.subr.mxu0 0.0
      %971 = vmatpush1.xpose.msra.mxu0 0.0
      %972 = vmatprep.subr.mxu0 0.0
      %973 = vmatpush1.xpose.msra.mxu0 0.0
      %974 = vmatprep.subr.mxu0 0.0
      %975 = vmatpush1.xpose.msra.mxu0 0.0
      %976 = vmatprep.subr.mxu0 0.0
      %977 = vmatpush1.xpose.msra.mxu0 0.0
      %978 = vmatprep.subr.mxu0 0.0
      %979 = vmatpush1.xpose.msra.mxu0 0.0
      %980 = vmatprep.subr.mxu0 0.0
      %981 = vmatpush1.xpose.msra.mxu0 0.0
      %982 = vmatprep.subr.mxu0 0.0
      %983 = vmatpush1.xpose.msra.mxu0 0.0
      %984 = vmatprep.subr.mxu0 0.0
      %985 = vmatpush1.xpose.msra.mxu0 0.0
      %986 = vmatprep.subr.mxu0 0.0
      %987 = vmatpush1.xpose.msra.mxu0 0.0
      %988 = vmatprep.subr.mxu0 0.0
      %989 = vmatpush1.xpose.msra.mxu0 0.0
      %990 = vmatprep.subr.mxu0 0.0
      %991 = vmatpush1.xpose.msra.mxu0 0.0
      %992 = vmatprep.subr.mxu0 0.0
      %993 = vmatpush1.xpose.msra.mxu0 0.0
      %994 = vmatprep.mubr.f32.mxu0 0.0
      %995 = vmatmul.mubr.f32.gmra.mrb[0].mxu0 %v894
      %v996 = vpop.f32.mrb[0].mxu0
      %v997 = vadd.f32 0.0, %v996
      %v998 = vpop.f32.mrb[0].mxu0
      %999 = vmatprep.mubr.f32.mxu0 0.0
      %1000 = vmatmul.mubr.f32.gmra.mrb[0].mxu0 %v896
      %v1001 = vpop.f32.mrb[0].mxu0
      %v1002 = vadd.f32 0.0, %v1001
      %v1003 = vpop.f32.mrb[0].mxu0
      %1004 = vmatprep.mubr.f32.mxu0 0.0
      %1005 = vmatmul.mubr.f32.gmra.mrb[0].mxu0 %v898
      %v1006 = vpop.f32.mrb[0].mxu0
      %v1007 = vadd.f32 0.0, %v1006
      %v1008 = vpop.f32.mrb[0].mxu0
      %1009 = vmatprep.mubr.f32.mxu0 0.0
      %1010 = vmatmul.mubr.f32.gmra.mrb[0].mxu0 %v900
      %v1011 = vpop.f32.mrb[0].mxu0
      %v1012 = vadd.f32 0.0, %v1011
      %v1013 = vpop.f32.mrb[0].mxu0
      %1014 = vmatprep.mubr.f32.mxu0 0.0
      %1015 = vmatmul.mubr.f32.gmra.mrb[0].mxu0 %v902
      %v1016 = vpop.f32.mrb[0].mxu0
      %v1017 = vadd.f32 0.0, %v1016
      %v1018 = vpop.f32.mrb[0].mxu0
      %1019 = vmatprep.mubr.f32.mxu0 0.0
      %1020 = vmatmul.mubr.f32.gmra.mrb[0].mxu0 %v904
      %v1021 = vpop.f32.mrb[0].mxu0
      %v1022 = vadd.f32 0.0, %v1021
      %v1023 = vpop.f32.mrb[0].mxu0
      %1024 = vmatprep.mubr.f32.mxu0 0.0
      %1025 = vmatmul.mubr.f32.gmra.mrb[0].mxu0 %v906
      %v1026 = vpop.f32.mrb[0].mxu0
      %v1027 = vadd.f32 0.0, %v1026
      %v1028 = vpop.f32.mrb[0].mxu0
      %1029 = vmatprep.mubr.f32.mxu0 0.0
      %1030 = vmatmul.mubr.f32.gmra.mrb[0].mxu0 %v908
      %v1031 = vpop.f32.mrb[0].mxu0
      %v1032 = vadd.f32 0.0, %v1031
      %v1033 = vpop.f32.mrb[0].mxu0
      %1034 = vmatprep.mubr.f32.mxu0 0.0
      %1035 = vmatmul.mubr.f32.gmra.mrb[0].mxu0 %v910
      %v1036 = vpop.f32.mrb[0].mxu0
      %v1037 = vadd.f32 0.0, %v1036
      %v1038 = vpop.f32.mrb[0].mxu0
      %1039 = vdwg.mxu0
      %v1040 = vmul.f32 %v997, 0.35355338
      %v1041 = vmul.f32 %v1002, 0.35355338
      %v1042 = vmul.f32 %v1007, 0.35355338
      %v1043 = vmul.f32 %v1012, 0.35355338
      %v1044 = vmul.f32 %v1017, 0.35355338
      %v1045 = vmul.f32 %v1022, 0.35355338
      %v1046 = vmul.f32 %v1027, 0.35355338
      %v1047 = vmul.f32 %v1032, 0.35355338
      %v1048 = vmul.f32 %v1037, 0.35355338
      %vm1049 = vcmask 539648
      %v1050 = vsel %vm1049, %v1040, -inf
      %1051 = vmax.xlane.f32.xlu0 %v1050
      %v1052 = vpop.xlane.xlu0 %1051
      %v1053 = vsel %vm1049, %v1041, -inf
      %1054 = vmax.xlane.f32.xlu0 %v1053
      %v1055 = vpop.xlane.xlu0 %1054
      %v1056 = vsel %vm1049, %v1042, -inf
      %1057 = vmax.xlane.f32.xlu0 %v1056
      %v1058 = vpop.xlane.xlu0 %1057
      %v1059 = vsel %vm1049, %v1043, -inf
      %1060 = vmax.xlane.f32.xlu0 %v1059
      %v1061 = vpop.xlane.xlu0 %1060
      %v1062 = vsel %vm1049, %v1044, -inf
      %1063 = vmax.xlane.f32.xlu0 %v1062
      %v1064 = vpop.xlane.xlu0 %1063
      %v1065 = vsel %vm1049, %v1045, -inf
      %1066 = vmax.xlane.f32.xlu0 %v1065
      %v1067 = vpop.xlane.xlu0 %1066
      %v1068 = vsel %vm1049, %v1046, -inf
      %1069 = vmax.xlane.f32.xlu0 %v1068
      %v1070 = vpop.xlane.xlu0 %1069
      %v1071 = vsel %vm1049, %v1047, -inf
      %1072 = vmax.xlane.f32.xlu0 %v1071
      %v1073 = vpop.xlane.xlu0 %1072
      %vm1074 = vcmask 533504
      %v1075 = vsel %vm1074, %v1048, -inf
      %1076 = vmax.xlane.f32.xlu0 %v1075
      %v1077 = vpop.xlane.xlu0 %1076
      %v1078 = vsub.f32 %v1040, %v1052
      %v1079 = vsub.f32 %v1041, %v1055
      %v1080 = vsub.f32 %v1042, %v1058
      %v1081 = vsub.f32 %v1043, %v1061
      %v1082 = vsub.f32 %v1044, %v1064
      %v1083 = vsub.f32 %v1045, %v1067
      %v1084 = vsub.f32 %v1046, %v1070
      %v1085 = vsub.f32 %v1047, %v1073
      %v1086 = vsub.f32 %v1048, %v1077
      %v1087 = vmul.f32 %v1078, 1.442695
      %v1088 = vpow.pop %v1087
      %v1089 = vmul.f32 %v1079, 1.442695
      %v1090 = vpow.pop %v1089
      %v1091 = vmul.f32 %v1080, 1.442695
      %v1092 = vpow.pop %v1091
      %v1093 = vmul.f32 %v1081, 1.442695
      %v1094 = vpow.pop %v1093
      %v1095 = vmul.f32 %v1082, 1.442695
      %v1096 = vpow.pop %v1095
      %v1097 = vmul.f32 %v1083, 1.442695
      %v1098 = vpow.pop %v1097
      %v1099 = vmul.f32 %v1084, 1.442695
      %v1100 = vpow.pop %v1099
      %v1101 = vmul.f32 %v1085, 1.442695
      %v1102 = vpow.pop %v1101
      %v1103 = vmul.f32 %v1086, 1.442695
      %v1104 = vpow.pop %v1103
      %v1105 = vmul.f32 %v1088, %v853
      %v1106 = vmul.f32 %v1090, %v854
      %v1107 = vmul.f32 %v1092, %v855
      %v1108 = vmul.f32 %v1094, %v856
      %v1109 = vmul.f32 %v1096, %v857
      %v1110 = vmul.f32 %v1098, %v858
      %v1111 = vmul.f32 %v1100, %v859
      %v1112 = vmul.f32 %v1102, %v860
      %v1113 = vmul.f32 %v1104, %v861
      %v1114 = vsel %vm1049, %v1105, 0.0
      %1115 = vadd.xlane.f32.xlu0 %v1114
      %v1116 = vpop.xlane.xlu0 %1115
      %v1117 = vsel %vm1049, %v1106, 0.0
      %1118 = vadd.xlane.f32.xlu0 %v1117
      %v1119 = vpop.xlane.xlu0 %1118
      %v1120 = vsel %vm1049, %v1107, 0.0
      %1121 = vadd.xlane.f32.xlu0 %v1120
      %v1122 = vpop.xlane.xlu0 %1121
      %v1123 = vsel %vm1049, %v1108, 0.0
      %1124 = vadd.xlane.f32.xlu0 %v1123
      %v1125 = vpop.xlane.xlu0 %1124
      %v1126 = vsel %vm1049, %v1109, 0.0
      %1127 = vadd.xlane.f32.xlu0 %v1126
      %v1128 = vpop.xlane.xlu0 %1127
      %v1129 = vsel %vm1049, %v1110, 0.0
      %1130 = vadd.xlane.f32.xlu0 %v1129
      %v1131 = vpop.xlane.xlu0 %1130
      %v1132 = vsel %vm1049, %v1111, 0.0
      %1133 = vadd.xlane.f32.xlu0 %v1132
      %v1134 = vpop.xlane.xlu0 %1133
      %v1135 = vsel %vm1049, %v1112, 0.0
      %1136 = vadd.xlane.f32.xlu0 %v1135
      %v1137 = vpop.xlane.xlu0 %1136
      %v1138 = vsel %vm1074, %v1113, 0.0
      %1139 = vadd.xlane.f32.xlu0 %v1138
      %v1140 = vpop.xlane.xlu0 %1139
      %v1141 = vrcp.pop %v1116
      %v1142 = vmul.f32 %v1105, %v1141
      %v1143 = vrcp.pop %v1119
      %v1144 = vmul.f32 %v1106, %v1143
      %v1145 = vrcp.pop %v1122
      %v1146 = vmul.f32 %v1107, %v1145
      %v1147 = vrcp.pop %v1125
      %v1148 = vmul.f32 %v1108, %v1147
      %v1149 = vrcp.pop %v1128
      %v1150 = vmul.f32 %v1109, %v1149
      %v1151 = vrcp.pop %v1131
      %v1152 = vmul.f32 %v1110, %v1151
      %v1153 = vrcp.pop %v1134
      %v1154 = vmul.f32 %v1111, %v1153
      %v1155 = vrcp.pop %v1137
      %v1156 = vmul.f32 %v1112, %v1155
      %v1157 = vrcp.pop %v1140
      %v1158 = vmul.f32 %v1113, %v1157
      %1159 = vrot.lane.b32.xlu0 %v749, 64
      %v1160 = vpop.permute.xlu0 %1159
      %1161 = vrot.lane.b32.xlu0 %v754, 64
      %v1162 = vpop.permute.xlu0 %1161
      %1163 = vrot.lane.b32.xlu0 %v759, 64
      %v1164 = vpop.permute.xlu0 %1163
      %1165 = vrot.lane.b32.xlu0 %v764, 64
      %v1166 = vpop.permute.xlu0 %1165
      %1167 = vrot.lane.b32.xlu0 %v769, 64
      %v1168 = vpop.permute.xlu0 %1167
      %1169 = vrot.lane.b32.xlu0 %v774, 64
      %v1170 = vpop.permute.xlu0 %1169
      %1171 = vrot.lane.b32.xlu0 %v779, 64
      %v1172 = vpop.permute.xlu0 %1171
      %1173 = vrot.lane.b32.xlu0 %v784, 64
      %v1174 = vpop.permute.xlu0 %1173
      %1175 = vrot.lane.b32.xlu0 %v789, 64
      %v1176 = vpop.permute.xlu0 %1175
      %v1186 = vsel %vm1049, %v1142, 0
      %v1189 = vsel %vm1049, %v1144, 0
      %v1192 = vsel %vm1049, %v1146, 0
      %v1195 = vsel %vm1049, %v1148, 0
      %v1198 = vsel %vm1049, %v1150, 0
      %v1201 = vsel %vm1049, %v1152, 0
      %v1204 = vsel %vm1049, %v1154, 0
      %v1207 = vsel %vm1049, %v1156, 0
      %v1210 = vsel %vm1049, %v1158, 0
      %vm1212 = vcmask 1041408
      %v1213 = vsel %vm1212, %v1176, 0
      %1215 = vmatprep.subr.mxu0 0.0
      %1216 = vmatpush1.msra.mxu0 %v1160
      %1217 = vmatprep.subr.mxu0 0.0
      %1218 = vmatpush1.msra.mxu0 %v1162
      %1219 = vmatprep.subr.mxu0 0.0
      %1220 = vmatpush1.msra.mxu0 %v1164
      %1221 = vmatprep.subr.mxu0 0.0
      %1222 = vmatpush1.msra.mxu0 %v1166
      %1223 = vmatprep.subr.mxu0 0.0
      %1224 = vmatpush1.msra.mxu0 %v1168
      %1225 = vmatprep.subr.mxu0 0.0
      %1226 = vmatpush1.msra.mxu0 %v1170
      %1227 = vmatprep.subr.mxu0 0.0
      %1228 = vmatpush1.msra.mxu0 %v1172
      %1229 = vmatprep.subr.mxu0 0.0
      %1230 = vmatpush1.msra.mxu0 %v1174
      %1231 = vmatprep.subr.mxu0 0.0
      %1232 = vmatpush1.msra.mxu0 %v1213
      %1233 = vmatprep.subr.mxu0 0.0
      %1234 = vmatpush1.msra.mxu0 0.0
      %1235 = vmatprep.subr.mxu0 0.0
      %1236 = vmatpush1.msra.mxu0 0.0
      %1237 = vmatprep.subr.mxu0 0.0
      %1238 = vmatpush1.msra.mxu0 0.0
      %1239 = vmatprep.subr.mxu0 0.0
      %1240 = vmatpush1.msra.mxu0 0.0
      %1241 = vmatprep.subr.mxu0 0.0
      %1242 = vmatpush1.msra.mxu0 0.0
      %1243 = vmatprep.subr.mxu0 0.0
      %1244 = vmatpush1.msra.mxu0 0.0
      %1245 = vmatprep.subr.mxu0 0.0
      %1246 = vmatpush1.msra.mxu0 0.0
      %1247 = vmatprep.subr.mxu0 0.0
      %1248 = vmatpush1.msra.mxu0 0.0
      %1249 = vmatprep.subr.mxu0 0.0
      %1250 = vmatpush1.msra.mxu0 0.0
      %1251 = vmatprep.subr.mxu0 0.0
      %1252 = vmatpush1.msra.mxu0 0.0
      %1253 = vmatprep.subr.mxu0 0.0
      %1254 = vmatpush1.msra.mxu0 0.0
      %1255 = vmatprep.subr.mxu0 0.0
      %1256 = vmatpush1.msra.mxu0 0.0
      %1257 = vmatprep.subr.mxu0 0.0
      %1258 = vmatpush1.msra.mxu0 0.0
      %1259 = vmatprep.subr.mxu0 0.0
      %1260 = vmatpush1.msra.mxu0 0.0
      %1261 = vmatprep.subr.mxu0 0.0
      %1262 = vmatpush1.msra.mxu0 0.0
      %1263 = vmatprep.subr.mxu0 0.0
      %1264 = vmatpush1.msra.mxu0 0.0
      %1265 = vmatprep.subr.mxu0 0.0
      %1266 = vmatpush1.msra.mxu0 0.0
      %1267 = vmatprep.subr.mxu0 0.0
      %1268 = vmatpush1.msra.mxu0 0.0
      %1269 = vmatprep.subr.mxu0 0.0
      %1270 = vmatpush1.msra.mxu0 0.0
      %1271 = vmatprep.subr.mxu0 0.0
      %1272 = vmatpush1.msra.mxu0 0.0
      %1273 = vmatprep.subr.mxu0 0.0
      %1274 = vmatpush1.msra.mxu0 0.0
      %1275 = vmatprep.subr.mxu0 0.0
      %1276 = vmatpush1.msra.mxu0 0.0
      %1277 = vmatprep.subr.mxu0 0.0
      %1278 = vmatpush1.msra.mxu0 0.0
      %1279 = vmatprep.mubr.f32.mxu0 0.0
      %1280 = vmatmul.mubr.f32.gmra.mrb[0].mxu0 %v1186
      %v1281 = vpop.f32.mrb[0].mxu0
      %v1282 = vadd.f32 0.0, %v1281
      %v1283 = vpop.f32.mrb[0].mxu0
      %1284 = vmatprep.mubr.f32.mxu0 0.0
      %1285 = vmatmul.mubr.f32.gmra.mrb[0].mxu0 %v1189
      %v1286 = vpop.f32.mrb[0].mxu0
      %v1287 = vadd.f32 0.0, %v1286
      %v1288 = vpop.f32.mrb[0].mxu0
      %1289 = vmatprep.mubr.f32.mxu0 0.0
      %1290 = vmatmul.mubr.f32.gmra.mrb[0].mxu0 %v1192
      %v1291 = vpop.f32.mrb[0].mxu0
      %v1292 = vadd.f32 0.0, %v1291
      %v1293 = vpop.f32.mrb[0].mxu0
      %1294 = vmatprep.mubr.f32.mxu0 0.0
      %1295 = vmatmul.mubr.f32.gmra.mrb[0].mxu0 %v1195
      %v1296 = vpop.f32.mrb[0].mxu0
      %v1297 = vadd.f32 0.0, %v1296
      %v1298 = vpop.f32.mrb[0].mxu0
      %1299 = vmatprep.mubr.f32.mxu0 0.0
      %1300 = vmatmul.mubr.f32.gmra.mrb[0].mxu0 %v1198
      %v1301 = vpop.f32.mrb[0].mxu0
      %v1302 = vadd.f32 0.0, %v1301
      %v1303 = vpop.f32.mrb[0].mxu0
      %1304 = vmatprep.mubr.f32.mxu0 0.0
      %1305 = vmatmul.mubr.f32.gmra.mrb[0].mxu0 %v1201
      %v1306 = vpop.f32.mrb[0].mxu0
      %v1307 = vadd.f32 0.0, %v1306
      %v1308 = vpop.f32.mrb[0].mxu0
      %1309 = vmatprep.mubr.f32.mxu0 0.0
      %1310 = vmatmul.mubr.f32.gmra.mrb[0].mxu0 %v1204
      %v1311 = vpop.f32.mrb[0].mxu0
      %v1312 = vadd.f32 0.0, %v1311
      %v1313 = vpop.f32.mrb[0].mxu0
      %1314 = vmatprep.mubr.f32.mxu0 0.0
      %1315 = vmatmul.mubr.f32.gmra.mrb[0].mxu0 %v1207
      %v1316 = vpop.f32.mrb[0].mxu0
      %v1317 = vadd.f32 0.0, %v1316
      %v1318 = vpop.f32.mrb[0].mxu0
      %1319 = vmatprep.mubr.f32.mxu0 0.0
      %1320 = vmatmul.mubr.f32.gmra.mrb[0].mxu0 %v1210
      %v1321 = vpop.f32.mrb[0].mxu0
      %v1322 = vadd.f32 0.0, %v1321
      %v1323 = vpop.f32.mrb[0].mxu0
      %1324 = vdwg.mxu0
      %1325 = vrot.lane.b32.xlu0 %v749, 120
      %v1326 = vpop.permute.xlu0 %1325
      %1327 = vrot.lane.b32.xlu0 %v754, 120
      %v1328 = vpop.permute.xlu0 %1327
      %1329 = vrot.lane.b32.xlu0 %v759, 120
      %v1330 = vpop.permute.xlu0 %1329
      %1331 = vrot.lane.b32.xlu0 %v764, 120
      %v1332 = vpop.permute.xlu0 %1331
      %1333 = vrot.lane.b32.xlu0 %v769, 120
      %v1334 = vpop.permute.xlu0 %1333
      %1335 = vrot.lane.b32.xlu0 %v774, 120
      %v1336 = vpop.permute.xlu0 %1335
      %1337 = vrot.lane.b32.xlu0 %v779, 120
      %v1338 = vpop.permute.xlu0 %1337
      %1339 = vrot.lane.b32.xlu0 %v784, 120
      %v1340 = vpop.permute.xlu0 %1339
      %1341 = vrot.lane.b32.xlu0 %v789, 120
      %v1342 = vpop.permute.xlu0 %1341
      %1343 = vrot.lane.b32.xlu0 %v749, 88
      %v1344 = vpop.permute.xlu0 %1343
      %1345 = vrot.lane.b32.xlu0 %v754, 88
      %v1346 = vpop.permute.xlu0 %1345
      %1347 = vrot.lane.b32.xlu0 %v759, 88
      %v1348 = vpop.permute.xlu0 %1347
      %1349 = vrot.lane.b32.xlu0 %v764, 88
      %v1350 = vpop.permute.xlu0 %1349
      %1351 = vrot.lane.b32.xlu0 %v769, 88
      %v1352 = vpop.permute.xlu0 %1351
      %1353 = vrot.lane.b32.xlu0 %v774, 88
      %v1354 = vpop.permute.xlu0 %1353
      %1355 = vrot.lane.b32.xlu0 %v779, 88
      %v1356 = vpop.permute.xlu0 %1355
      %1357 = vrot.lane.b32.xlu0 %v784, 88
      %v1358 = vpop.permute.xlu0 %1357
      %1359 = vrot.lane.b32.xlu0 %v789, 88
      %v1360 = vpop.permute.xlu0 %1359
      %v1361 = vsel %vm893, %v1326, 0
      %v1363 = vsel %vm893, %v1328, 0
      %v1365 = vsel %vm893, %v1330, 0
      %v1367 = vsel %vm893, %v1332, 0
      %v1369 = vsel %vm893, %v1334, 0
      %v1371 = vsel %vm893, %v1336, 0
      %v1373 = vsel %vm893, %v1338, 0
      %v1375 = vsel %vm893, %v1340, 0
      %v1377 = vsel %vm893, %v1342, 0
      %v1379 = vsel %vm893, %v1344, 0
      %v1381 = vsel %vm893, %v1346, 0
      %v1383 = vsel %vm893, %v1348, 0
      %v1385 = vsel %vm893, %v1350, 0
      %v1387 = vsel %vm893, %v1352, 0
      %v1389 = vsel %vm893, %v1354, 0
      %v1391 = vsel %vm893, %v1356, 0
      %v1393 = vsel %vm893, %v1358, 0
      %v1395 = vsel %vm893, %v1360, 0
      %1397 = vmatprep.subr.mxu0 0.0
      %1398 = vmatpush1.xpose.msra.mxu0 %v1379
      %1399 = vmatprep.subr.mxu0 0.0
      %1400 = vmatpush1.xpose.msra.mxu0 %v1381
      %1401 = vmatprep.subr.mxu0 0.0
      %1402 = vmatpush1.xpose.msra.mxu0 %v1383
      %1403 = vmatprep.subr.mxu0 0.0
      %1404 = vmatpush1.xpose.msra.mxu0 %v1385
      %1405 = vmatprep.subr.mxu0 0.0
      %1406 = vmatpush1.xpose.msra.mxu0 %v1387
      %1407 = vmatprep.subr.mxu0 0.0
      %1408 = vmatpush1.xpose.msra.mxu0 %v1389
      %1409 = vmatprep.subr.mxu0 0.0
      %1410 = vmatpush1.xpose.msra.mxu0 %v1391
      %1411 = vmatprep.subr.mxu0 0.0
      %1412 = vmatpush1.xpose.msra.mxu0 %v1393
      %1413 = vmatprep.subr.mxu0 0.0
      %1414 = vmatpush1.xpose.msra.mxu0 %v1395
      %1415 = vmatprep.subr.mxu0 0.0
      %1416 = vmatpush1.xpose.msra.mxu0 0.0
      %1417 = vmatprep.subr.mxu0 0.0
      %1418 = vmatpush1.xpose.msra.mxu0 0.0
      %1419 = vmatprep.subr.mxu0 0.0
      %1420 = vmatpush1.xpose.msra.mxu0 0.0
      %1421 = vmatprep.subr.mxu0 0.0
      %1422 = vmatpush1.xpose.msra.mxu0 0.0
      %1423 = vmatprep.subr.mxu0 0.0
      %1424 = vmatpush1.xpose.msra.mxu0 0.0
      %1425 = vmatprep.subr.mxu0 0.0
      %1426 = vmatpush1.xpose.msra.mxu0 0.0
      %1427 = vmatprep.subr.mxu0 0.0
      %1428 = vmatpush1.xpose.msra.mxu0 0.0
      %1429 = vmatprep.subr.mxu0 0.0
      %1430 = vmatpush1.xpose.msra.mxu0 0.0
      %1431 = vmatprep.subr.mxu0 0.0
      %1432 = vmatpush1.xpose.msra.mxu0 0.0
      %1433 = vmatprep.subr.mxu0 0.0
      %1434 = vmatpush1.xpose.msra.mxu0 0.0
      %1435 = vmatprep.subr.mxu0 0.0
      %1436 = vmatpush1.xpose.msra.mxu0 0.0
      %1437 = vmatprep.subr.mxu0 0.0
      %1438 = vmatpush1.xpose.msra.mxu0 0.0
      %1439 = vmatprep.subr.mxu0 0.0
      %1440 = vmatpush1.xpose.msra.mxu0 0.0
      %1441 = vmatprep.subr.mxu0 0.0
      %1442 = vmatpush1.xpose.msra.mxu0 0.0
      %1443 = vmatprep.subr.mxu0 0.0
      %1444 = vmatpush1.xpose.msra.mxu0 0.0
      %1445 = vmatprep.subr.mxu0 0.0
      %1446 = vmatpush1.xpose.msra.mxu0 0.0
      %1447 = vmatprep.subr.mxu0 0.0
      %1448 = vmatpush1.xpose.msra.mxu0 0.0
      %1449 = vmatprep.subr.mxu0 0.0
      %1450 = vmatpush1.xpose.msra.mxu0 0.0
      %1451 = vmatprep.subr.mxu0 0.0
      %1452 = vmatpush1.xpose.msra.mxu0 0.0
      %1453 = vmatprep.subr.mxu0 0.0
      %1454 = vmatpush1.xpose.msra.mxu0 0.0
      %1455 = vmatprep.subr.mxu0 0.0
      %1456 = vmatpush1.xpose.msra.mxu0 0.0
      %1457 = vmatprep.subr.mxu0 0.0
      %1458 = vmatpush1.xpose.msra.mxu0 0.0
      %1459 = vmatprep.subr.mxu0 0.0
      %1460 = vmatpush1.xpose.msra.mxu0 0.0
      %1461 = vmatprep.mubr.f32.mxu0 0.0
      %1462 = vmatmul.mubr.f32.gmra.mrb[0].mxu0 %v1361
      %v1463 = vpop.f32.mrb[0].mxu0
      %v1464 = vadd.f32 0.0, %v1463
      %v1465 = vpop.f32.mrb[0].mxu0
      %1466 = vmatprep.mubr.f32.mxu0 0.0
      %1467 = vmatmul.mubr.f32.gmra.mrb[0].mxu0 %v1363
      %v1468 = vpop.f32.mrb[0].mxu0
      %v1469 = vadd.f32 0.0, %v1468
      %v1470 = vpop.f32.mrb[0].mxu0
      %1471 = vmatprep.mubr.f32.mxu0 0.0
      %1472 = vmatmul.mubr.f32.gmra.mrb[0].mxu0 %v1365
      %v1473 = vpop.f32.mrb[0].mxu0
      %v1474 = vadd.f32 0.0, %v1473
      %v1475 = vpop.f32.mrb[0].mxu0
      %1476 = vmatprep.mubr.f32.mxu0 0.0
      %1477 = vmatmul.mubr.f32.gmra.mrb[0].mxu0 %v1367
      %v1478 = vpop.f32.mrb[0].mxu0
      %v1479 = vadd.f32 0.0, %v1478
      %v1480 = vpop.f32.mrb[0].mxu0
      %1481 = vmatprep.mubr.f32.mxu0 0.0
      %1482 = vmatmul.mubr.f32.gmra.mrb[0].mxu0 %v1369
      %v1483 = vpop.f32.mrb[0].mxu0
      %v1484 = vadd.f32 0.0, %v1483
      %v1485 = vpop.f32.mrb[0].mxu0
      %1486 = vmatprep.mubr.f32.mxu0 0.0
      %1487 = vmatmul.mubr.f32.gmra.mrb[0].mxu0 %v1371
      %v1488 = vpop.f32.mrb[0].mxu0
      %v1489 = vadd.f32 0.0, %v1488
      %v1490 = vpop.f32.mrb[0].mxu0
      %1491 = vmatprep.mubr.f32.mxu0 0.0
      %1492 = vmatmul.mubr.f32.gmra.mrb[0].mxu0 %v1373
      %v1493 = vpop.f32.mrb[0].mxu0
      %v1494 = vadd.f32 0.0, %v1493
      %v1495 = vpop.f32.mrb[0].mxu0
      %1496 = vmatprep.mubr.f32.mxu0 0.0
      %1497 = vmatmul.mubr.f32.gmra.mrb[0].mxu0 %v1375
      %v1498 = vpop.f32.mrb[0].mxu0
      %v1499 = vadd.f32 0.0, %v1498
      %v1500 = vpop.f32.mrb[0].mxu0
      %1501 = vmatprep.mubr.f32.mxu0 0.0
      %1502 = vmatmul.mubr.f32.gmra.mrb[0].mxu0 %v1377
      %v1503 = vpop.f32.mrb[0].mxu0
      %v1504 = vadd.f32 0.0, %v1503
      %v1505 = vpop.f32.mrb[0].mxu0
      %1506 = vdwg.mxu0
      %v1507 = vmul.f32 %v1464, 0.35355338
      %v1508 = vmul.f32 %v1469, 0.35355338
      %v1509 = vmul.f32 %v1474, 0.35355338
      %v1510 = vmul.f32 %v1479, 0.35355338
      %v1511 = vmul.f32 %v1484, 0.35355338
      %v1512 = vmul.f32 %v1489, 0.35355338
      %v1513 = vmul.f32 %v1494, 0.35355338
      %v1514 = vmul.f32 %v1499, 0.35355338
      %v1515 = vmul.f32 %v1504, 0.35355338
      %v1516 = vsel %vm1049, %v1507, -inf
      %1517 = vmax.xlane.f32.xlu0 %v1516
      %v1518 = vpop.xlane.xlu0 %1517
      %v1519 = vsel %vm1049, %v1508, -inf
      %1520 = vmax.xlane.f32.xlu0 %v1519
      %v1521 = vpop.xlane.xlu0 %1520
      %v1522 = vsel %vm1049, %v1509, -inf
      %1523 = vmax.xlane.f32.xlu0 %v1522
      %v1524 = vpop.xlane.xlu0 %1523
      %v1525 = vsel %vm1049, %v1510, -inf
      %1526 = vmax.xlane.f32.xlu0 %v1525
      %v1527 = vpop.xlane.xlu0 %1526
      %v1528 = vsel %vm1049, %v1511, -inf
      %1529 = vmax.xlane.f32.xlu0 %v1528
      %v1530 = vpop.xlane.xlu0 %1529
      %v1531 = vsel %vm1049, %v1512, -inf
      %1532 = vmax.xlane.f32.xlu0 %v1531
      %v1533 = vpop.xlane.xlu0 %1532
      %v1534 = vsel %vm1049, %v1513, -inf
      %1535 = vmax.xlane.f32.xlu0 %v1534
      %v1536 = vpop.xlane.xlu0 %1535
      %v1537 = vsel %vm1049, %v1514, -inf
      %1538 = vmax.xlane.f32.xlu0 %v1537
      %v1539 = vpop.xlane.xlu0 %1538
      %v1540 = vsel %vm1074, %v1515, -inf
      %1541 = vmax.xlane.f32.xlu0 %v1540
      %v1542 = vpop.xlane.xlu0 %1541
      %v1543 = vsub.f32 %v1507, %v1518
      %v1544 = vsub.f32 %v1508, %v1521
      %v1545 = vsub.f32 %v1509, %v1524
      %v1546 = vsub.f32 %v1510, %v1527
      %v1547 = vsub.f32 %v1511, %v1530
      %v1548 = vsub.f32 %v1512, %v1533
      %v1549 = vsub.f32 %v1513, %v1536
      %v1550 = vsub.f32 %v1514, %v1539
      %v1551 = vsub.f32 %v1515, %v1542
      %v1552 = vmul.f32 %v1543, 1.442695
      %v1553 = vpow.pop %v1552
      %v1554 = vmul.f32 %v1544, 1.442695
      %v1555 = vpow.pop %v1554
      %v1556 = vmul.f32 %v1545, 1.442695
      %v1557 = vpow.pop %v1556
      %v1558 = vmul.f32 %v1546, 1.442695
      %v1559 = vpow.pop %v1558
      %v1560 = vmul.f32 %v1547, 1.442695
      %v1561 = vpow.pop %v1560
      %v1562 = vmul.f32 %v1548, 1.442695
      %v1563 = vpow.pop %v1562
      %v1564 = vmul.f32 %v1549, 1.442695
      %v1565 = vpow.pop %v1564
      %v1566 = vmul.f32 %v1550, 1.442695
      %v1567 = vpow.pop %v1566
      %v1568 = vmul.f32 %v1551, 1.442695
      %v1569 = vpow.pop %v1568
      %v1570 = vmul.f32 %v1553, %v853
      %v1571 = vmul.f32 %v1555, %v854
      %v1572 = vmul.f32 %v1557, %v855
      %v1573 = vmul.f32 %v1559, %v856
      %v1574 = vmul.f32 %v1561, %v857
      %v1575 = vmul.f32 %v1563, %v858
      %v1576 = vmul.f32 %v1565, %v859
      %v1577 = vmul.f32 %v1567, %v860
      %v1578 = vmul.f32 %v1569, %v861
      %v1579 = vsel %vm1049, %v1570, 0.0
      %1580 = vadd.xlane.f32.xlu0 %v1579
      %v1581 = vpop.xlane.xlu0 %1580
      %v1582 = vsel %vm1049, %v1571, 0.0
      %1583 = vadd.xlane.f32.xlu0 %v1582
      %v1584 = vpop.xlane.xlu0 %1583
      %v1585 = vsel %vm1049, %v1572, 0.0
      %1586 = vadd.xlane.f32.xlu0 %v1585
      %v1587 = vpop.xlane.xlu0 %1586
      %v1588 = vsel %vm1049, %v1573, 0.0
      %1589 = vadd.xlane.f32.xlu0 %v1588
      %v1590 = vpop.xlane.xlu0 %1589
      %v1591 = vsel %vm1049, %v1574, 0.0
      %1592 = vadd.xlane.f32.xlu0 %v1591
      %v1593 = vpop.xlane.xlu0 %1592
      %v1594 = vsel %vm1049, %v1575, 0.0
      %1595 = vadd.xlane.f32.xlu0 %v1594
      %v1596 = vpop.xlane.xlu0 %1595
      %v1597 = vsel %vm1049, %v1576, 0.0
      %1598 = vadd.xlane.f32.xlu0 %v1597
      %v1599 = vpop.xlane.xlu0 %1598
      %v1600 = vsel %vm1049, %v1577, 0.0
      %1601 = vadd.xlane.f32.xlu0 %v1600
      %v1602 = vpop.xlane.xlu0 %1601
      %v1603 = vsel %vm1074, %v1578, 0.0
      %1604 = vadd.xlane.f32.xlu0 %v1603
      %v1605 = vpop.xlane.xlu0 %1604
      %v1606 = vrcp.pop %v1581
      %v1607 = vmul.f32 %v1570, %v1606
      %v1608 = vrcp.pop %v1584
      %v1609 = vmul.f32 %v1571, %v1608
      %v1610 = vrcp.pop %v1587
      %v1611 = vmul.f32 %v1572, %v1610
      %v1612 = vrcp.pop %v1590
      %v1613 = vmul.f32 %v1573, %v1612
      %v1614 = vrcp.pop %v1593
      %v1615 = vmul.f32 %v1574, %v1614
      %v1616 = vrcp.pop %v1596
      %v1617 = vmul.f32 %v1575, %v1616
      %v1618 = vrcp.pop %v1599
      %v1619 = vmul.f32 %v1576, %v1618
      %v1620 = vrcp.pop %v1602
      %v1621 = vmul.f32 %v1577, %v1620
      %v1622 = vrcp.pop %v1605
      %v1623 = vmul.f32 %v1578, %v1622
      %1624 = vrot.lane.b32.xlu0 %v749, 56
      %v1625 = vpop.permute.xlu0 %1624
      %1626 = vrot.lane.b32.xlu0 %v754, 56
      %v1627 = vpop.permute.xlu0 %1626
      %1628 = vrot.lane.b32.xlu0 %v759, 56
      %v1629 = vpop.permute.xlu0 %1628
      %1630 = vrot.lane.b32.xlu0 %v764, 56
      %v1631 = vpop.permute.xlu0 %1630
      %1632 = vrot.lane.b32.xlu0 %v769, 56
      %v1633 = vpop.permute.xlu0 %1632
      %1634 = vrot.lane.b32.xlu0 %v774, 56
      %v1635 = vpop.permute.xlu0 %1634
      %1636 = vrot.lane.b32.xlu0 %v779, 56
      %v1637 = vpop.permute.xlu0 %1636
      %1638 = vrot.lane.b32.xlu0 %v784, 56
      %v1639 = vpop.permute.xlu0 %1638
      %1640 = vrot.lane.b32.xlu0 %v789, 56
      %v1641 = vpop.permute.xlu0 %1640
      %v1651 = vsel %vm1049, %v1607, 0
      %v1654 = vsel %vm1049, %v1609, 0
      %v1657 = vsel %vm1049, %v1611, 0
      %v1660 = vsel %vm1049, %v1613, 0
      %v1663 = vsel %vm1049, %v1615, 0
      %v1666 = vsel %vm1049, %v1617, 0
      %v1669 = vsel %vm1049, %v1619, 0
      %v1672 = vsel %vm1049, %v1621, 0
      %v1675 = vsel %vm1049, %v1623, 0
      %v1677 = vsel %vm1212, %v1641, 0
      %1679 = vmatprep.subr.mxu0 0.0
      %1680 = vmatpush1.msra.mxu0 %v1625
      %1681 = vmatprep.subr.mxu0 0.0
      %1682 = vmatpush1.msra.mxu0 %v1627
      %1683 = vmatprep.subr.mxu0 0.0
      %1684 = vmatpush1.msra.mxu0 %v1629
      %1685 = vmatprep.subr.mxu0 0.0
      %1686 = vmatpush1.msra.mxu0 %v1631
      %1687 = vmatprep.subr.mxu0 0.0
      %1688 = vmatpush1.msra.mxu0 %v1633
      %1689 = vmatprep.subr.mxu0 0.0
      %1690 = vmatpush1.msra.mxu0 %v1635
      %1691 = vmatprep.subr.mxu0 0.0
      %1692 = vmatpush1.msra.mxu0 %v1637
      %1693 = vmatprep.subr.mxu0 0.0
      %1694 = vmatpush1.msra.mxu0 %v1639
      %1695 = vmatprep.subr.mxu0 0.0
      %1696 = vmatpush1.msra.mxu0 %v1677
      %1697 = vmatprep.subr.mxu0 0.0
      %1698 = vmatpush1.msra.mxu0 0.0
      %1699 = vmatprep.subr.mxu0 0.0
      %1700 = vmatpush1.msra.mxu0 0.0
      %1701 = vmatprep.subr.mxu0 0.0
      %1702 = vmatpush1.msra.mxu0 0.0
      %1703 = vmatprep.subr.mxu0 0.0
      %1704 = vmatpush1.msra.mxu0 0.0
      %1705 = vmatprep.subr.mxu0 0.0
      %1706 = vmatpush1.msra.mxu0 0.0
      %1707 = vmatprep.subr.mxu0 0.0
      %1708 = vmatpush1.msra.mxu0 0.0
      %1709 = vmatprep.subr.mxu0 0.0
      %1710 = vmatpush1.msra.mxu0 0.0
      %1711 = vmatprep.subr.mxu0 0.0
      %1712 = vmatpush1.msra.mxu0 0.0
      %1713 = vmatprep.subr.mxu0 0.0
      %1714 = vmatpush1.msra.mxu0 0.0
      %1715 = vmatprep.subr.mxu0 0.0
      %1716 = vmatpush1.msra.mxu0 0.0
      %1717 = vmatprep.subr.mxu0 0.0
      %1718 = vmatpush1.msra.mxu0 0.0
      %1719 = vmatprep.subr.mxu0 0.0
      %1720 = vmatpush1.msra.mxu0 0.0
      %1721 = vmatprep.subr.mxu0 0.0
      %1722 = vmatpush1.msra.mxu0 0.0
      %1723 = vmatprep.subr.mxu0 0.0
      %1724 = vmatpush1.msra.mxu0 0.0
      %1725 = vmatprep.subr.mxu0 0.0
      %1726 = vmatpush1.msra.mxu0 0.0
      %1727 = vmatprep.subr.mxu0 0.0
      %1728 = vmatpush1.msra.mxu0 0.0
      %1729 = vmatprep.subr.mxu0 0.0
      %1730 = vmatpush1.msra.mxu0 0.0
      %1731 = vmatprep.subr.mxu0 0.0
      %1732 = vmatpush1.msra.mxu0 0.0
      %1733 = vmatprep.subr.mxu0 0.0
      %1734 = vmatpush1.msra.mxu0 0.0
      %1735 = vmatprep.subr.mxu0 0.0
      %1736 = vmatpush1.msra.mxu0 0.0
      %1737 = vmatprep.subr.mxu0 0.0
      %1738 = vmatpush1.msra.mxu0 0.0
      %1739 = vmatprep.subr.mxu0 0.0
      %1740 = vmatpush1.msra.mxu0 0.0
      %1741 = vmatprep.subr.mxu0 0.0
      %1742 = vmatpush1.msra.mxu0 0.0
      %1743 = vmatprep.mubr.f32.mxu0 0.0
      %1744 = vmatmul.mubr.f32.gmra.mrb[0].mxu0 %v1651
      %v1745 = vpop.f32.mrb[0].mxu0
      %v1746 = vadd.f32 0.0, %v1745
      %v1747 = vpop.f32.mrb[0].mxu0
      %1748 = vmatprep.mubr.f32.mxu0 0.0
      %1749 = vmatmul.mubr.f32.gmra.mrb[0].mxu0 %v1654
      %v1750 = vpop.f32.mrb[0].mxu0
      %v1751 = vadd.f32 0.0, %v1750
      %v1752 = vpop.f32.mrb[0].mxu0
      %1753 = vmatprep.mubr.f32.mxu0 0.0
      %1754 = vmatmul.mubr.f32.gmra.mrb[0].mxu0 %v1657
      %v1755 = vpop.f32.mrb[0].mxu0
      %v1756 = vadd.f32 0.0, %v1755
      %v1757 = vpop.f32.mrb[0].mxu0
      %1758 = vmatprep.mubr.f32.mxu0 0.0
      %1759 = vmatmul.mubr.f32.gmra.mrb[0].mxu0 %v1660
      %v1760 = vpop.f32.mrb[0].mxu0
      %v1761 = vadd.f32 0.0, %v1760
      %v1762 = vpop.f32.mrb[0].mxu0
      %1763 = vmatprep.mubr.f32.mxu0 0.0
      %1764 = vmatmul.mubr.f32.gmra.mrb[0].mxu0 %v1663
      %v1765 = vpop.f32.mrb[0].mxu0
      %v1766 = vadd.f32 0.0, %v1765
      %v1767 = vpop.f32.mrb[0].mxu0
      %1768 = vmatprep.mubr.f32.mxu0 0.0
      %1769 = vmatmul.mubr.f32.gmra.mrb[0].mxu0 %v1666
      %v1770 = vpop.f32.mrb[0].mxu0
      %v1771 = vadd.f32 0.0, %v1770
      %v1772 = vpop.f32.mrb[0].mxu0
      %1773 = vmatprep.mubr.f32.mxu0 0.0
      %1774 = vmatmul.mubr.f32.gmra.mrb[0].mxu0 %v1669
      %v1775 = vpop.f32.mrb[0].mxu0
      %v1776 = vadd.f32 0.0, %v1775
      %v1777 = vpop.f32.mrb[0].mxu0
      %1778 = vmatprep.mubr.f32.mxu0 0.0
      %1779 = vmatmul.mubr.f32.gmra.mrb[0].mxu0 %v1672
      %v1780 = vpop.f32.mrb[0].mxu0
      %v1781 = vadd.f32 0.0, %v1780
      %v1782 = vpop.f32.mrb[0].mxu0
      %1783 = vmatprep.mubr.f32.mxu0 0.0
      %1784 = vmatmul.mubr.f32.gmra.mrb[0].mxu0 %v1675
      %v1785 = vpop.f32.mrb[0].mxu0
      %v1786 = vadd.f32 0.0, %v1785
      %v1787 = vpop.f32.mrb[0].mxu0
      %1788 = vdwg.mxu0
      %v1790 = vsel %vm893, %v1746, 0
      %v1793 = vsel %vm893, %v1751, 0
      %v1796 = vsel %vm893, %v1756, 0
      %v1799 = vsel %vm893, %v1761, 0
      %v1802 = vsel %vm893, %v1766, 0
      %v1805 = vsel %vm893, %v1771, 0
      %v1808 = vsel %vm893, %v1776, 0
      %v1811 = vsel %vm893, %v1781, 0
      %v1814 = vsel %vm893, %v1786, 0
      %1816 = vmatprep.subr.mxu0 0.0
      %1817 = vmatpush1.msra.mxu0 %v863
      %1818 = vmatprep.subr.mxu0 0.0
      %1819 = vmatpush1.msra.mxu0 0.0
      %1820 = vmatprep.subr.mxu0 0.0
      %1821 = vmatpush1.msra.mxu0 0.0
      %1822 = vmatprep.subr.mxu0 0.0
      %1823 = vmatpush1.msra.mxu0 0.0
      %1824 = vmatprep.subr.mxu0 0.0
      %1825 = vmatpush1.msra.mxu0 0.0
      %1826 = vmatprep.subr.mxu0 0.0
      %1827 = vmatpush1.msra.mxu0 0.0
      %1828 = vmatprep.subr.mxu0 0.0
      %1829 = vmatpush1.msra.mxu0 0.0
      %1830 = vmatprep.subr.mxu0 0.0
      %1831 = vmatpush1.msra.mxu0 0.0
      %1832 = vmatprep.subr.mxu0 0.0
      %1833 = vmatpush1.msra.mxu0 0.0
      %1834 = vmatprep.subr.mxu0 0.0
      %1835 = vmatpush1.msra.mxu0 0.0
      %1836 = vmatprep.subr.mxu0 0.0
      %1837 = vmatpush1.msra.mxu0 0.0
      %1838 = vmatprep.subr.mxu0 0.0
      %1839 = vmatpush1.msra.mxu0 0.0
      %1840 = vmatprep.subr.mxu0 0.0
      %1841 = vmatpush1.msra.mxu0 0.0
      %1842 = vmatprep.subr.mxu0 0.0
      %1843 = vmatpush1.msra.mxu0 0.0
      %1844 = vmatprep.subr.mxu0 0.0
      %1845 = vmatpush1.msra.mxu0 0.0
      %1846 = vmatprep.subr.mxu0 0.0
      %1847 = vmatpush1.msra.mxu0 0.0
      %1848 = vmatprep.subr.mxu0 0.0
      %1849 = vmatpush1.msra.mxu0 0.0
      %1850 = vmatprep.subr.mxu0 0.0
      %1851 = vmatpush1.msra.mxu0 0.0
      %1852 = vmatprep.subr.mxu0 0.0
      %1853 = vmatpush1.msra.mxu0 0.0
      %1854 = vmatprep.subr.mxu0 0.0
      %1855 = vmatpush1.msra.mxu0 0.0
      %1856 = vmatprep.subr.mxu0 0.0
      %1857 = vmatpush1.msra.mxu0 0.0
      %1858 = vmatprep.subr.mxu0 0.0
      %1859 = vmatpush1.msra.mxu0 0.0
      %1860 = vmatprep.subr.mxu0 0.0
      %1861 = vmatpush1.msra.mxu0 0.0
      %1862 = vmatprep.subr.mxu0 0.0
      %1863 = vmatpush1.msra.mxu0 0.0
      %1864 = vmatprep.subr.mxu0 0.0
      %1865 = vmatpush1.msra.mxu0 0.0
      %1866 = vmatprep.subr.mxu0 0.0
      %1867 = vmatpush1.msra.mxu0 0.0
      %1868 = vmatprep.subr.mxu0 0.0
      %1869 = vmatpush1.msra.mxu0 0.0
      %1870 = vmatprep.subr.mxu0 0.0
      %1871 = vmatpush1.msra.mxu0 0.0
      %1872 = vmatprep.subr.mxu0 0.0
      %1873 = vmatpush1.msra.mxu0 0.0
      %1874 = vmatprep.subr.mxu0 0.0
      %1875 = vmatpush1.msra.mxu0 0.0
      %1876 = vmatprep.subr.mxu0 0.0
      %1877 = vmatpush1.msra.mxu0 0.0
      %1878 = vmatprep.subr.mxu0 0.0
      %1879 = vmatpush1.msra.mxu0 0.0
      %1880 = vmatprep.mubr.f32.mxu0 0.0
      %1881 = vmatmul.mubr.f32.gmra.mrb[0].mxu0 %v1790
      %v1882 = vpop.f32.mrb[0].mxu0
      %v1883 = vadd.f32 0.0, %v1882
      %v1884 = vpop.f32.mrb[0].mxu0
      %1885 = vmatprep.mubr.f32.mxu0 0.0
      %1886 = vmatmul.mubr.f32.gmra.mrb[0].mxu0 %v1793
      %v1887 = vpop.f32.mrb[0].mxu0
      %v1888 = vadd.f32 0.0, %v1887
      %v1889 = vpop.f32.mrb[0].mxu0
      %1890 = vmatprep.mubr.f32.mxu0 0.0
      %1891 = vmatmul.mubr.f32.gmra.mrb[0].mxu0 %v1796
      %v1892 = vpop.f32.mrb[0].mxu0
      %v1893 = vadd.f32 0.0, %v1892
      %v1894 = vpop.f32.mrb[0].mxu0
      %1895 = vmatprep.mubr.f32.mxu0 0.0
      %1896 = vmatmul.mubr.f32.gmra.mrb[0].mxu0 %v1799
      %v1897 = vpop.f32.mrb[0].mxu0
      %v1898 = vadd.f32 0.0, %v1897
      %v1899 = vpop.f32.mrb[0].mxu0
      %1900 = vmatprep.mubr.f32.mxu0 0.0
      %1901 = vmatmul.mubr.f32.gmra.mrb[0].mxu0 %v1802
      %v1902 = vpop.f32.mrb[0].mxu0
      %v1903 = vadd.f32 0.0, %v1902
      %v1904 = vpop.f32.mrb[0].mxu0
      %1905 = vmatprep.mubr.f32.mxu0 0.0
      %1906 = vmatmul.mubr.f32.gmra.mrb[0].mxu0 %v1805
      %v1907 = vpop.f32.mrb[0].mxu0
      %v1908 = vadd.f32 0.0, %v1907
      %v1909 = vpop.f32.mrb[0].mxu0
      %1910 = vmatprep.mubr.f32.mxu0 0.0
      %1911 = vmatmul.mubr.f32.gmra.mrb[0].mxu0 %v1808
      %v1912 = vpop.f32.mrb[0].mxu0
      %v1913 = vadd.f32 0.0, %v1912
      %v1914 = vpop.f32.mrb[0].mxu0
      %1915 = vmatprep.mubr.f32.mxu0 0.0
      %1916 = vmatmul.mubr.f32.gmra.mrb[0].mxu0 %v1811
      %v1917 = vpop.f32.mrb[0].mxu0
      %v1918 = vadd.f32 0.0, %v1917
      %v1919 = vpop.f32.mrb[0].mxu0
      %1920 = vmatprep.mubr.f32.mxu0 0.0
      %1921 = vmatmul.mubr.f32.gmra.mrb[0].mxu0 %v1814
      %v1922 = vpop.f32.mrb[0].mxu0
      %v1923 = vadd.f32 0.0, %v1922
      %v1924 = vpop.f32.mrb[0].mxu0
      %1925 = vdwg.mxu0
      %v1927 = vsel %vm893, %v1282, 0
      %v1930 = vsel %vm893, %v1287, 0
      %v1933 = vsel %vm893, %v1292, 0
      %v1936 = vsel %vm893, %v1297, 0
      %v1939 = vsel %vm893, %v1302, 0
      %v1942 = vsel %vm893, %v1307, 0
      %v1945 = vsel %vm893, %v1312, 0
      %v1948 = vsel %vm893, %v1317, 0
      %v1951 = vsel %vm893, %v1322, 0
      %1953 = vmatprep.subr.mxu0 0.0
      %1954 = vmatpush1.msra.mxu0 %v862
      %1955 = vmatprep.subr.mxu0 0.0
      %1956 = vmatpush1.msra.mxu0 0.0
      %1957 = vmatprep.subr.mxu0 0.0
      %1958 = vmatpush1.msra.mxu0 0.0
      %1959 = vmatprep.subr.mxu0 0.0
      %1960 = vmatpush1.msra.mxu0 0.0
      %1961 = vmatprep.subr.mxu0 0.0
      %1962 = vmatpush1.msra.mxu0 0.0
      %1963 = vmatprep.subr.mxu0 0.0
      %1964 = vmatpush1.msra.mxu0 0.0
      %1965 = vmatprep.subr.mxu0 0.0
      %1966 = vmatpush1.msra.mxu0 0.0
      %1967 = vmatprep.subr.mxu0 0.0
      %1968 = vmatpush1.msra.mxu0 0.0
      %1969 = vmatprep.subr.mxu0 0.0
      %1970 = vmatpush1.msra.mxu0 0.0
      %1971 = vmatprep.subr.mxu0 0.0
      %1972 = vmatpush1.msra.mxu0 0.0
      %1973 = vmatprep.subr.mxu0 0.0
      %1974 = vmatpush1.msra.mxu0 0.0
      %1975 = vmatprep.subr.mxu0 0.0
      %1976 = vmatpush1.msra.mxu0 0.0
      %1977 = vmatprep.subr.mxu0 0.0
      %1978 = vmatpush1.msra.mxu0 0.0
      %1979 = vmatprep.subr.mxu0 0.0
      %1980 = vmatpush1.msra.mxu0 0.0
      %1981 = vmatprep.subr.mxu0 0.0
      %1982 = vmatpush1.msra.mxu0 0.0
      %1983 = vmatprep.subr.mxu0 0.0
      %1984 = vmatpush1.msra.mxu0 0.0
      %1985 = vmatprep.subr.mxu0 0.0
      %1986 = vmatpush1.msra.mxu0 0.0
      %1987 = vmatprep.subr.mxu0 0.0
      %1988 = vmatpush1.msra.mxu0 0.0
      %1989 = vmatprep.subr.mxu0 0.0
      %1990 = vmatpush1.msra.mxu0 0.0
      %1991 = vmatprep.subr.mxu0 0.0
      %1992 = vmatpush1.msra.mxu0 0.0
      %1993 = vmatprep.subr.mxu0 0.0
      %1994 = vmatpush1.msra.mxu0 0.0
      %1995 = vmatprep.subr.mxu0 0.0
      %1996 = vmatpush1.msra.mxu0 0.0
      %1997 = vmatprep.subr.mxu0 0.0
      %1998 = vmatpush1.msra.mxu0 0.0
      %1999 = vmatprep.subr.mxu0 0.0
      %2000 = vmatpush1.msra.mxu0 0.0
      %2001 = vmatprep.subr.mxu0 0.0
      %2002 = vmatpush1.msra.mxu0 0.0
      %2003 = vmatprep.subr.mxu0 0.0
      %2004 = vmatpush1.msra.mxu0 0.0
      %2005 = vmatprep.subr.mxu0 0.0
      %2006 = vmatpush1.msra.mxu0 0.0
      %2007 = vmatprep.subr.mxu0 0.0
      %2008 = vmatpush1.msra.mxu0 0.0
      %2009 = vmatprep.subr.mxu0 0.0
      %2010 = vmatpush1.msra.mxu0 0.0
      %2011 = vmatprep.subr.mxu0 0.0
      %2012 = vmatpush1.msra.mxu0 0.0
      %2013 = vmatprep.subr.mxu0 0.0
      %2014 = vmatpush1.msra.mxu0 0.0
      %2015 = vmatprep.subr.mxu0 0.0
      %2016 = vmatpush1.msra.mxu0 0.0
      %2017 = vmatprep.mubr.f32.mxu0 0.0
      %2018 = vmatmul.mubr.f32.gmra.mrb[0].mxu0 %v1927
      %v2019 = vpop.f32.mrb[0].mxu0
      %v2020 = vadd.f32 %v1883, %v2019
      %v2021 = vpop.f32.mrb[0].mxu0
      %2022 = vmatprep.mubr.f32.mxu0 0.0
      %2023 = vmatmul.mubr.f32.gmra.mrb[0].mxu0 %v1930
      %v2024 = vpop.f32.mrb[0].mxu0
      %v2025 = vadd.f32 %v1888, %v2024
      %v2026 = vpop.f32.mrb[0].mxu0
      %2027 = vmatprep.mubr.f32.mxu0 0.0
      %2028 = vmatmul.mubr.f32.gmra.mrb[0].mxu0 %v1933
      %v2029 = vpop.f32.mrb[0].mxu0
      %v2030 = vadd.f32 %v1893, %v2029
      %v2031 = vpop.f32.mrb[0].mxu0
      %2032 = vmatprep.mubr.f32.mxu0 0.0
      %2033 = vmatmul.mubr.f32.gmra.mrb[0].mxu0 %v1936
      %v2034 = vpop.f32.mrb[0].mxu0
      %v2035 = vadd.f32 %v1898, %v2034
      %v2036 = vpop.f32.mrb[0].mxu0
      %2037 = vmatprep.mubr.f32.mxu0 0.0
      %2038 = vmatmul.mubr.f32.gmra.mrb[0].mxu0 %v1939
      %v2039 = vpop.f32.mrb[0].mxu0
      %v2040 = vadd.f32 %v1903, %v2039
      %v2041 = vpop.f32.mrb[0].mxu0
      %2042 = vmatprep.mubr.f32.mxu0 0.0
      %2043 = vmatmul.mubr.f32.gmra.mrb[0].mxu0 %v1942
      %v2044 = vpop.f32.mrb[0].mxu0
      %v2045 = vadd.f32 %v1908, %v2044
      %v2046 = vpop.f32.mrb[0].mxu0
      %2047 = vmatprep.mubr.f32.mxu0 0.0
      %2048 = vmatmul.mubr.f32.gmra.mrb[0].mxu0 %v1945
      %v2049 = vpop.f32.mrb[0].mxu0
      %v2050 = vadd.f32 %v1913, %v2049
      %v2051 = vpop.f32.mrb[0].mxu0
      %2052 = vmatprep.mubr.f32.mxu0 0.0
      %2053 = vmatmul.mubr.f32.gmra.mrb[0].mxu0 %v1948
      %v2054 = vpop.f32.mrb[0].mxu0
      %v2055 = vadd.f32 %v1918, %v2054
      %v2056 = vpop.f32.mrb[0].mxu0
      %2057 = vmatprep.mubr.f32.mxu0 0.0
      %2058 = vmatmul.mubr.f32.gmra.mrb[0].mxu0 %v1951
      %v2059 = vpop.f32.mrb[0].mxu0
      %v2060 = vadd.f32 %v1923, %v2059
      %v2061 = vpop.f32.mrb[0].mxu0
      %2062 = vdwg.mxu0
      %2063 = vrot.lane.b32.xlu0 %v749, 112
      %v2064 = vpop.permute.xlu0 %2063
      %2065 = vrot.lane.b32.xlu0 %v754, 112
      %v2066 = vpop.permute.xlu0 %2065
      %2067 = vrot.lane.b32.xlu0 %v759, 112
      %v2068 = vpop.permute.xlu0 %2067
      %2069 = vrot.lane.b32.xlu0 %v764, 112
      %v2070 = vpop.permute.xlu0 %2069
      %2071 = vrot.lane.b32.xlu0 %v769, 112
      %v2072 = vpop.permute.xlu0 %2071
      %2073 = vrot.lane.b32.xlu0 %v774, 112
      %v2074 = vpop.permute.xlu0 %2073
      %2075 = vrot.lane.b32.xlu0 %v779, 112
      %v2076 = vpop.permute.xlu0 %2075
      %2077 = vrot.lane.b32.xlu0 %v784, 112
      %v2078 = vpop.permute.xlu0 %2077
      %2079 = vrot.lane.b32.xlu0 %v789, 112
      %v2080 = vpop.permute.xlu0 %2079
      %2081 = vrot.lane.b32.xlu0 %v749, 80
      %v2082 = vpop.permute.xlu0 %2081
      %2083 = vrot.lane.b32.xlu0 %v754, 80
      %v2084 = vpop.permute.xlu0 %2083
      %2085 = vrot.lane.b32.xlu0 %v759, 80
      %v2086 = vpop.permute.xlu0 %2085
      %2087 = vrot.lane.b32.xlu0 %v764, 80
      %v2088 = vpop.permute.xlu0 %2087
      %2089 = vrot.lane.b32.xlu0 %v769, 80
      %v2090 = vpop.permute.xlu0 %2089
      %2091 = vrot.lane.b32.xlu0 %v774, 80
      %v2092 = vpop.permute.xlu0 %2091
      %2093 = vrot.lane.b32.xlu0 %v779, 80
      %v2094 = vpop.permute.xlu0 %2093
      %2095 = vrot.lane.b32.xlu0 %v784, 80
      %v2096 = vpop.permute.xlu0 %2095
      %2097 = vrot.lane.b32.xlu0 %v789, 80
      %v2098 = vpop.permute.xlu0 %2097
      %v2099 = vsel %vm893, %v2064, 0
      %v2101 = vsel %vm893, %v2066, 0
      %v2103 = vsel %vm893, %v2068, 0
      %v2105 = vsel %vm893, %v2070, 0
      %v2107 = vsel %vm893, %v2072, 0
      %v2109 = vsel %vm893, %v2074, 0
      %v2111 = vsel %vm893, %v2076, 0
      %v2113 = vsel %vm893, %v2078, 0
      %v2115 = vsel %vm893, %v2080, 0
      %v2117 = vsel %vm893, %v2082, 0
      %v2119 = vsel %vm893, %v2084, 0
      %v2121 = vsel %vm893, %v2086, 0
      %v2123 = vsel %vm893, %v2088, 0
      %v2125 = vsel %vm893, %v2090, 0
      %v2127 = vsel %vm893, %v2092, 0
      %v2129 = vsel %vm893, %v2094, 0
      %v2131 = vsel %vm893, %v2096, 0
      %v2133 = vsel %vm893, %v2098, 0
      %2135 = vmatprep.subr.mxu0 0.0
      %2136 = vmatpush1.xpose.msra.mxu0 %v2117
      %2137 = vmatprep.subr.mxu0 0.0
      %2138 = vmatpush1.xpose.msra.mxu0 %v2119
      %2139 = vmatprep.subr.mxu0 0.0
      %2140 = vmatpush1.xpose.msra.mxu0 %v2121
      %2141 = vmatprep.subr.mxu0 0.0
      %2142 = vmatpush1.xpose.msra.mxu0 %v2123
      %2143 = vmatprep.subr.mxu0 0.0
      %2144 = vmatpush1.xpose.msra.mxu0 %v2125
      %2145 = vmatprep.subr.mxu0 0.0
      %2146 = vmatpush1.xpose.msra.mxu0 %v2127
      %2147 = vmatprep.subr.mxu0 0.0
      %2148 = vmatpush1.xpose.msra.mxu0 %v2129
      %2149 = vmatprep.subr.mxu0 0.0
      %2150 = vmatpush1.xpose.msra.mxu0 %v2131
      %2151 = vmatprep.subr.mxu0 0.0
      %2152 = vmatpush1.xpose.msra.mxu0 %v2133
      %2153 = vmatprep.subr.mxu0 0.0
      %2154 = vmatpush1.xpose.msra.mxu0 0.0
      %2155 = vmatprep.subr.mxu0 0.0
      %2156 = vmatpush1.xpose.msra.mxu0 0.0
      %2157 = vmatprep.subr.mxu0 0.0
      %2158 = vmatpush1.xpose.msra.mxu0 0.0
      %2159 = vmatprep.subr.mxu0 0.0
      %2160 = vmatpush1.xpose.msra.mxu0 0.0
      %2161 = vmatprep.subr.mxu0 0.0
      %2162 = vmatpush1.xpose.msra.mxu0 0.0
      %2163 = vmatprep.subr.mxu0 0.0
      %2164 = vmatpush1.xpose.msra.mxu0 0.0
      %2165 = vmatprep.subr.mxu0 0.0
      %2166 = vmatpush1.xpose.msra.mxu0 0.0
      %2167 = vmatprep.subr.mxu0 0.0
      %2168 = vmatpush1.xpose.msra.mxu0 0.0
      %2169 = vmatprep.subr.mxu0 0.0
      %2170 = vmatpush1.xpose.msra.mxu0 0.0
      %2171 = vmatprep.subr.mxu0 0.0
      %2172 = vmatpush1.xpose.msra.mxu0 0.0
      %2173 = vmatprep.subr.mxu0 0.0
      %2174 = vmatpush1.xpose.msra.mxu0 0.0
      %2175 = vmatprep.subr.mxu0 0.0
      %2176 = vmatpush1.xpose.msra.mxu0 0.0
      %2177 = vmatprep.subr.mxu0 0.0
      %2178 = vmatpush1.xpose.msra.mxu0 0.0
      %2179 = vmatprep.subr.mxu0 0.0
      %2180 = vmatpush1.xpose.msra.mxu0 0.0
      %2181 = vmatprep.subr.mxu0 0.0
      %2182 = vmatpush1.xpose.msra.mxu0 0.0
      %2183 = vmatprep.subr.mxu0 0.0
      %2184 = vmatpush1.xpose.msra.mxu0 0.0
      %2185 = vmatprep.subr.mxu0 0.0
      %2186 = vmatpush1.xpose.msra.mxu0 0.0
      %2187 = vmatprep.subr.mxu0 0.0
      %2188 = vmatpush1.xpose.msra.mxu0 0.0
      %2189 = vmatprep.subr.mxu0 0.0
      %2190 = vmatpush1.xpose.msra.mxu0 0.0
      %2191 = vmatprep.subr.mxu0 0.0
      %2192 = vmatpush1.xpose.msra.mxu0 0.0
      %2193 = vmatprep.subr.mxu0 0.0
      %2194 = vmatpush1.xpose.msra.mxu0 0.0
      %2195 = vmatprep.subr.mxu0 0.0
      %2196 = vmatpush1.xpose.msra.mxu0 0.0
      %2197 = vmatprep.subr.mxu0 0.0
      %2198 = vmatpush1.xpose.msra.mxu0 0.0
      %2199 = vmatprep.mubr.f32.mxu0 0.0
      %2200 = vmatmul.mubr.f32.gmra.mrb[0].mxu0 %v2099
      %v2201 = vpop.f32.mrb[0].mxu0
      %v2202 = vadd.f32 0.0, %v2201
      %v2203 = vpop.f32.mrb[0].mxu0
      %2204 = vmatprep.mubr.f32.mxu0 0.0
      %2205 = vmatmul.mubr.f32.gmra.mrb[0].mxu0 %v2101
      %v2206 = vpop.f32.mrb[0].mxu0
      %v2207 = vadd.f32 0.0, %v2206
      %v2208 = vpop.f32.mrb[0].mxu0
      %2209 = vmatprep.mubr.f32.mxu0 0.0
      %2210 = vmatmul.mubr.f32.gmra.mrb[0].mxu0 %v2103
      %v2211 = vpop.f32.mrb[0].mxu0
      %v2212 = vadd.f32 0.0, %v2211
      %v2213 = vpop.f32.mrb[0].mxu0
      %2214 = vmatprep.mubr.f32.mxu0 0.0
      %2215 = vmatmul.mubr.f32.gmra.mrb[0].mxu0 %v2105
      %v2216 = vpop.f32.mrb[0].mxu0
      %v2217 = vadd.f32 0.0, %v2216
      %v2218 = vpop.f32.mrb[0].mxu0
      %2219 = vmatprep.mubr.f32.mxu0 0.0
      %2220 = vmatmul.mubr.f32.gmra.mrb[0].mxu0 %v2107
      %v2221 = vpop.f32.mrb[0].mxu0
      %v2222 = vadd.f32 0.0, %v2221
      %v2223 = vpop.f32.mrb[0].mxu0
      %2224 = vmatprep.mubr.f32.mxu0 0.0
      %2225 = vmatmul.mubr.f32.gmra.mrb[0].mxu0 %v2109
      %v2226 = vpop.f32.mrb[0].mxu0
      %v2227 = vadd.f32 0.0, %v2226
      %v2228 = vpop.f32.mrb[0].mxu0
      %2229 = vmatprep.mubr.f32.mxu0 0.0
      %2230 = vmatmul.mubr.f32.gmra.mrb[0].mxu0 %v2111
      %v2231 = vpop.f32.mrb[0].mxu0
      %v2232 = vadd.f32 0.0, %v2231
      %v2233 = vpop.f32.mrb[0].mxu0
      %2234 = vmatprep.mubr.f32.mxu0 0.0
      %2235 = vmatmul.mubr.f32.gmra.mrb[0].mxu0 %v2113
      %v2236 = vpop.f32.mrb[0].mxu0
      %v2237 = vadd.f32 0.0, %v2236
      %v2238 = vpop.f32.mrb[0].mxu0
      %2239 = vmatprep.mubr.f32.mxu0 0.0
      %2240 = vmatmul.mubr.f32.gmra.mrb[0].mxu0 %v2115
      %v2241 = vpop.f32.mrb[0].mxu0
      %v2242 = vadd.f32 0.0, %v2241
      %v2243 = vpop.f32.mrb[0].mxu0
      %2244 = vdwg.mxu0
      %v2245 = vmul.f32 %v2202, 0.35355338
      %v2246 = vmul.f32 %v2207, 0.35355338
      %v2247 = vmul.f32 %v2212, 0.35355338
      %v2248 = vmul.f32 %v2217, 0.35355338
      %v2249 = vmul.f32 %v2222, 0.35355338
      %v2250 = vmul.f32 %v2227, 0.35355338
      %v2251 = vmul.f32 %v2232, 0.35355338
      %v2252 = vmul.f32 %v2237, 0.35355338
      %v2253 = vmul.f32 %v2242, 0.35355338
      %v2254 = vsel %vm1049, %v2245, -inf
      %2255 = vmax.xlane.f32.xlu0 %v2254
      %v2256 = vpop.xlane.xlu0 %2255
      %v2257 = vsel %vm1049, %v2246, -inf
      %2258 = vmax.xlane.f32.xlu0 %v2257
      %v2259 = vpop.xlane.xlu0 %2258
      %v2260 = vsel %vm1049, %v2247, -inf
      %2261 = vmax.xlane.f32.xlu0 %v2260
      %v2262 = vpop.xlane.xlu0 %2261
      %v2263 = vsel %vm1049, %v2248, -inf
      %2264 = vmax.xlane.f32.xlu0 %v2263
      %v2265 = vpop.xlane.xlu0 %2264
      %v2266 = vsel %vm1049, %v2249, -inf
      %2267 = vmax.xlane.f32.xlu0 %v2266
      %v2268 = vpop.xlane.xlu0 %2267
      %v2269 = vsel %vm1049, %v2250, -inf
      %2270 = vmax.xlane.f32.xlu0 %v2269
      %v2271 = vpop.xlane.xlu0 %2270
      %v2272 = vsel %vm1049, %v2251, -inf
      %2273 = vmax.xlane.f32.xlu0 %v2272
      %v2274 = vpop.xlane.xlu0 %2273
      %v2275 = vsel %vm1049, %v2252, -inf
      %2276 = vmax.xlane.f32.xlu0 %v2275
      %v2277 = vpop.xlane.xlu0 %2276
      %v2278 = vsel %vm1074, %v2253, -inf
      %2279 = vmax.xlane.f32.xlu0 %v2278
      %v2280 = vpop.xlane.xlu0 %2279
      %v2281 = vsub.f32 %v2245, %v2256
      %v2282 = vsub.f32 %v2246, %v2259
      %v2283 = vsub.f32 %v2247, %v2262
      %v2284 = vsub.f32 %v2248, %v2265
      %v2285 = vsub.f32 %v2249, %v2268
      %v2286 = vsub.f32 %v2250, %v2271
      %v2287 = vsub.f32 %v2251, %v2274
      %v2288 = vsub.f32 %v2252, %v2277
      %v2289 = vsub.f32 %v2253, %v2280
      %v2290 = vmul.f32 %v2281, 1.442695
      %v2291 = vpow.pop %v2290
      %v2292 = vmul.f32 %v2282, 1.442695
      %v2293 = vpow.pop %v2292
      %v2294 = vmul.f32 %v2283, 1.442695
      %v2295 = vpow.pop %v2294
      %v2296 = vmul.f32 %v2284, 1.442695
      %v2297 = vpow.pop %v2296
      %v2298 = vmul.f32 %v2285, 1.442695
      %v2299 = vpow.pop %v2298
      %v2300 = vmul.f32 %v2286, 1.442695
      %v2301 = vpow.pop %v2300
      %v2302 = vmul.f32 %v2287, 1.442695
      %v2303 = vpow.pop %v2302
      %v2304 = vmul.f32 %v2288, 1.442695
      %v2305 = vpow.pop %v2304
      %v2306 = vmul.f32 %v2289, 1.442695
      %v2307 = vpow.pop %v2306
      %v2308 = vmul.f32 %v2291, %v853
      %v2309 = vmul.f32 %v2293, %v854
      %v2310 = vmul.f32 %v2295, %v855
      %v2311 = vmul.f32 %v2297, %v856
      %v2312 = vmul.f32 %v2299, %v857
      %v2313 = vmul.f32 %v2301, %v858
      %v2314 = vmul.f32 %v2303, %v859
      %v2315 = vmul.f32 %v2305, %v860
      %v2316 = vmul.f32 %v2307, %v861
      %v2317 = vsel %vm1049, %v2308, 0.0
      %2318 = vadd.xlane.f32.xlu0 %v2317
      %v2319 = vpop.xlane.xlu0 %2318
      %v2320 = vsel %vm1049, %v2309, 0.0
      %2321 = vadd.xlane.f32.xlu0 %v2320
      %v2322 = vpop.xlane.xlu0 %2321
      %v2323 = vsel %vm1049, %v2310, 0.0
      %2324 = vadd.xlane.f32.xlu0 %v2323
      %v2325 = vpop.xlane.xlu0 %2324
      %v2326 = vsel %vm1049, %v2311, 0.0
      %2327 = vadd.xlane.f32.xlu0 %v2326
      %v2328 = vpop.xlane.xlu0 %2327
      %v2329 = vsel %vm1049, %v2312, 0.0
      %2330 = vadd.xlane.f32.xlu0 %v2329
      %v2331 = vpop.xlane.xlu0 %2330
      %v2332 = vsel %vm1049, %v2313, 0.0
      %2333 = vadd.xlane.f32.xlu0 %v2332
      %v2334 = vpop.xlane.xlu0 %2333
      %v2335 = vsel %vm1049, %v2314, 0.0
      %2336 = vadd.xlane.f32.xlu0 %v2335
      %v2337 = vpop.xlane.xlu0 %2336
      %v2338 = vsel %vm1049, %v2315, 0.0
      %2339 = vadd.xlane.f32.xlu0 %v2338
      %v2340 = vpop.xlane.xlu0 %2339
      %v2341 = vsel %vm1074, %v2316, 0.0
      %2342 = vadd.xlane.f32.xlu0 %v2341
      %v2343 = vpop.xlane.xlu0 %2342
      %v2344 = vrcp.pop %v2319
      %v2345 = vmul.f32 %v2308, %v2344
      %v2346 = vrcp.pop %v2322
      %v2347 = vmul.f32 %v2309, %v2346
      %v2348 = vrcp.pop %v2325
      %v2349 = vmul.f32 %v2310, %v2348
      %v2350 = vrcp.pop %v2328
      %v2351 = vmul.f32 %v2311, %v2350
      %v2352 = vrcp.pop %v2331
      %v2353 = vmul.f32 %v2312, %v2352
      %v2354 = vrcp.pop %v2334
      %v2355 = vmul.f32 %v2313, %v2354
      %v2356 = vrcp.pop %v2337
      %v2357 = vmul.f32 %v2314, %v2356
      %v2358 = vrcp.pop %v2340
      %v2359 = vmul.f32 %v2315, %v2358
      %v2360 = vrcp.pop %v2343
      %v2361 = vmul.f32 %v2316, %v2360
      %2362 = vrot.lane.b32.xlu0 %v749, 48
      %v2363 = vpop.permute.xlu0 %2362
      %2364 = vrot.lane.b32.xlu0 %v754, 48
      %v2365 = vpop.permute.xlu0 %2364
      %2366 = vrot.lane.b32.xlu0 %v759, 48
      %v2367 = vpop.permute.xlu0 %2366
      %2368 = vrot.lane.b32.xlu0 %v764, 48
      %v2369 = vpop.permute.xlu0 %2368
      %2370 = vrot.lane.b32.xlu0 %v769, 48
      %v2371 = vpop.permute.xlu0 %2370
      %2372 = vrot.lane.b32.xlu0 %v774, 48
      %v2373 = vpop.permute.xlu0 %2372
      %2374 = vrot.lane.b32.xlu0 %v779, 48
      %v2375 = vpop.permute.xlu0 %2374
      %2376 = vrot.lane.b32.xlu0 %v784, 48
      %v2377 = vpop.permute.xlu0 %2376
      %2378 = vrot.lane.b32.xlu0 %v789, 48
      %v2379 = vpop.permute.xlu0 %2378
      %v2389 = vsel %vm1049, %v2345, 0
      %v2392 = vsel %vm1049, %v2347, 0
      %v2395 = vsel %vm1049, %v2349, 0
      %v2398 = vsel %vm1049, %v2351, 0
      %v2401 = vsel %vm1049, %v2353, 0
      %v2404 = vsel %vm1049, %v2355, 0
      %v2407 = vsel %vm1049, %v2357, 0
      %v2410 = vsel %vm1049, %v2359, 0
      %v2413 = vsel %vm1049, %v2361, 0
      %v2415 = vsel %vm1212, %v2379, 0
      %2417 = vmatprep.subr.mxu0 0.0
      %2418 = vmatpush1.msra.mxu0 %v2363
      %2419 = vmatprep.subr.mxu0 0.0
      %2420 = vmatpush1.msra.mxu0 %v2365
      %2421 = vmatprep.subr.mxu0 0.0
      %2422 = vmatpush1.msra.mxu0 %v2367
      %2423 = vmatprep.subr.mxu0 0.0
      %2424 = vmatpush1.msra.mxu0 %v2369
      %2425 = vmatprep.subr.mxu0 0.0
      %2426 = vmatpush1.msra.mxu0 %v2371
      %2427 = vmatprep.subr.mxu0 0.0
      %2428 = vmatpush1.msra.mxu0 %v2373
      %2429 = vmatprep.subr.mxu0 0.0
      %2430 = vmatpush1.msra.mxu0 %v2375
      %2431 = vmatprep.subr.mxu0 0.0
      %2432 = vmatpush1.msra.mxu0 %v2377
      %2433 = vmatprep.subr.mxu0 0.0
      %2434 = vmatpush1.msra.mxu0 %v2415
      %2435 = vmatprep.subr.mxu0 0.0
      %2436 = vmatpush1.msra.mxu0 0.0
      %2437 = vmatprep.subr.mxu0 0.0
      %2438 = vmatpush1.msra.mxu0 0.0
      %2439 = vmatprep.subr.mxu0 0.0
      %2440 = vmatpush1.msra.mxu0 0.0
      %2441 = vmatprep.subr.mxu0 0.0
      %2442 = vmatpush1.msra.mxu0 0.0
      %2443 = vmatprep.subr.mxu0 0.0
      %2444 = vmatpush1.msra.mxu0 0.0
      %2445 = vmatprep.subr.mxu0 0.0
      %2446 = vmatpush1.msra.mxu0 0.0
      %2447 = vmatprep.subr.mxu0 0.0
      %2448 = vmatpush1.msra.mxu0 0.0
      %2449 = vmatprep.subr.mxu0 0.0
      %2450 = vmatpush1.msra.mxu0 0.0
      %2451 = vmatprep.subr.mxu0 0.0
      %2452 = vmatpush1.msra.mxu0 0.0
      %2453 = vmatprep.subr.mxu0 0.0
      %2454 = vmatpush1.msra.mxu0 0.0
      %2455 = vmatprep.subr.mxu0 0.0
      %2456 = vmatpush1.msra.mxu0 0.0
      %2457 = vmatprep.subr.mxu0 0.0
      %2458 = vmatpush1.msra.mxu0 0.0
      %2459 = vmatprep.subr.mxu0 0.0
      %2460 = vmatpush1.msra.mxu0 0.0
      %2461 = vmatprep.subr.mxu0 0.0
      %2462 = vmatpush1.msra.mxu0 0.0
      %2463 = vmatprep.subr.mxu0 0.0
      %2464 = vmatpush1.msra.mxu0 0.0
      %2465 = vmatprep.subr.mxu0 0.0
      %2466 = vmatpush1.msra.mxu0 0.0
      %2467 = vmatprep.subr.mxu0 0.0
      %2468 = vmatpush1.msra.mxu0 0.0
      %2469 = vmatprep.subr.mxu0 0.0
      %2470 = vmatpush1.msra.mxu0 0.0
      %2471 = vmatprep.subr.mxu0 0.0
      %2472 = vmatpush1.msra.mxu0 0.0
      %2473 = vmatprep.subr.mxu0 0.0
      %2474 = vmatpush1.msra.mxu0 0.0
      %2475 = vmatprep.subr.mxu0 0.0
      %2476 = vmatpush1.msra.mxu0 0.0
      %2477 = vmatprep.subr.mxu0 0.0
      %2478 = vmatpush1.msra.mxu0 0.0
      %2479 = vmatprep.subr.mxu0 0.0
      %2480 = vmatpush1.msra.mxu0 0.0
      %2481 = vmatprep.mubr.f32.mxu0 0.0
      %2482 = vmatmul.mubr.f32.gmra.mrb[0].mxu0 %v2389
      %v2483 = vpop.f32.mrb[0].mxu0
      %v2484 = vadd.f32 0.0, %v2483
      %v2485 = vpop.f32.mrb[0].mxu0
      %2486 = vmatprep.mubr.f32.mxu0 0.0
      %2487 = vmatmul.mubr.f32.gmra.mrb[0].mxu0 %v2392
      %v2488 = vpop.f32.mrb[0].mxu0
      %v2489 = vadd.f32 0.0, %v2488
      %v2490 = vpop.f32.mrb[0].mxu0
      %2491 = vmatprep.mubr.f32.mxu0 0.0
      %2492 = vmatmul.mubr.f32.gmra.mrb[0].mxu0 %v2395
      %v2493 = vpop.f32.mrb[0].mxu0
      %v2494 = vadd.f32 0.0, %v2493
      %v2495 = vpop.f32.mrb[0].mxu0
      %2496 = vmatprep.mubr.f32.mxu0 0.0
      %2497 = vmatmul.mubr.f32.gmra.mrb[0].mxu0 %v2398
      %v2498 = vpop.f32.mrb[0].mxu0
      %v2499 = vadd.f32 0.0, %v2498
      %v2500 = vpop.f32.mrb[0].mxu0
      %2501 = vmatprep.mubr.f32.mxu0 0.0
      %2502 = vmatmul.mubr.f32.gmra.mrb[0].mxu0 %v2401
      %v2503 = vpop.f32.mrb[0].mxu0
      %v2504 = vadd.f32 0.0, %v2503
      %v2505 = vpop.f32.mrb[0].mxu0
      %2506 = vmatprep.mubr.f32.mxu0 0.0
      %2507 = vmatmul.mubr.f32.gmra.mrb[0].mxu0 %v2404
      %v2508 = vpop.f32.mrb[0].mxu0
      %v2509 = vadd.f32 0.0, %v2508
      %v2510 = vpop.f32.mrb[0].mxu0
      %2511 = vmatprep.mubr.f32.mxu0 0.0
      %2512 = vmatmul.mubr.f32.gmra.mrb[0].mxu0 %v2407
      %v2513 = vpop.f32.mrb[0].mxu0
      %v2514 = vadd.f32 0.0, %v2513
      %v2515 = vpop.f32.mrb[0].mxu0
      %2516 = vmatprep.mubr.f32.mxu0 0.0
      %2517 = vmatmul.mubr.f32.gmra.mrb[0].mxu0 %v2410
      %v2518 = vpop.f32.mrb[0].mxu0
      %v2519 = vadd.f32 0.0, %v2518
      %v2520 = vpop.f32.mrb[0].mxu0
      %2521 = vmatprep.mubr.f32.mxu0 0.0
      %2522 = vmatmul.mubr.f32.gmra.mrb[0].mxu0 %v2413
      %v2523 = vpop.f32.mrb[0].mxu0
      %v2524 = vadd.f32 0.0, %v2523
      %v2525 = vpop.f32.mrb[0].mxu0
      %2526 = vdwg.mxu0
      %v2528 = vsel %vm893, %v2484, 0
      %v2531 = vsel %vm893, %v2489, 0
      %v2534 = vsel %vm893, %v2494, 0
      %v2537 = vsel %vm893, %v2499, 0
      %v2540 = vsel %vm893, %v2504, 0
      %v2543 = vsel %vm893, %v2509, 0
      %v2546 = vsel %vm893, %v2514, 0
      %v2549 = vsel %vm893, %v2519, 0
      %v2552 = vsel %vm893, %v2524, 0
      %2554 = vmatprep.subr.mxu0 0.0
      %2555 = vmatpush1.msra.mxu0 %v864
      %2556 = vmatprep.subr.mxu0 0.0
      %2557 = vmatpush1.msra.mxu0 0.0
      %2558 = vmatprep.subr.mxu0 0.0
      %2559 = vmatpush1.msra.mxu0 0.0
      %2560 = vmatprep.subr.mxu0 0.0
      %2561 = vmatpush1.msra.mxu0 0.0
      %2562 = vmatprep.subr.mxu0 0.0
      %2563 = vmatpush1.msra.mxu0 0.0
      %2564 = vmatprep.subr.mxu0 0.0
      %2565 = vmatpush1.msra.mxu0 0.0
      %2566 = vmatprep.subr.mxu0 0.0
      %2567 = vmatpush1.msra.mxu0 0.0
      %2568 = vmatprep.subr.mxu0 0.0
      %2569 = vmatpush1.msra.mxu0 0.0
      %2570 = vmatprep.subr.mxu0 0.0
      %2571 = vmatpush1.msra.mxu0 0.0
      %2572 = vmatprep.subr.mxu0 0.0
      %2573 = vmatpush1.msra.mxu0 0.0
      %2574 = vmatprep.subr.mxu0 0.0
      %2575 = vmatpush1.msra.mxu0 0.0
      %2576 = vmatprep.subr.mxu0 0.0
      %2577 = vmatpush1.msra.mxu0 0.0
      %2578 = vmatprep.subr.mxu0 0.0
      %2579 = vmatpush1.msra.mxu0 0.0
      %2580 = vmatprep.subr.mxu0 0.0
      %2581 = vmatpush1.msra.mxu0 0.0
      %2582 = vmatprep.subr.mxu0 0.0
      %2583 = vmatpush1.msra.mxu0 0.0
      %2584 = vmatprep.subr.mxu0 0.0
      %2585 = vmatpush1.msra.mxu0 0.0
      %2586 = vmatprep.subr.mxu0 0.0
      %2587 = vmatpush1.msra.mxu0 0.0
      %2588 = vmatprep.subr.mxu0 0.0
      %2589 = vmatpush1.msra.mxu0 0.0
      %2590 = vmatprep.subr.mxu0 0.0
      %2591 = vmatpush1.msra.mxu0 0.0
      %2592 = vmatprep.subr.mxu0 0.0
      %2593 = vmatpush1.msra.mxu0 0.0
      %2594 = vmatprep.subr.mxu0 0.0
      %2595 = vmatpush1.msra.mxu0 0.0
      %2596 = vmatprep.subr.mxu0 0.0
      %2597 = vmatpush1.msra.mxu0 0.0
      %2598 = vmatprep.subr.mxu0 0.0
      %2599 = vmatpush1.msra.mxu0 0.0
      %2600 = vmatprep.subr.mxu0 0.0
      %2601 = vmatpush1.msra.mxu0 0.0
      %2602 = vmatprep.subr.mxu0 0.0
      %2603 = vmatpush1.msra.mxu0 0.0
      %2604 = vmatprep.subr.mxu0 0.0
      %2605 = vmatpush1.msra.mxu0 0.0
      %2606 = vmatprep.subr.mxu0 0.0
      %2607 = vmatpush1.msra.mxu0 0.0
      %2608 = vmatprep.subr.mxu0 0.0
      %2609 = vmatpush1.msra.mxu0 0.0
      %2610 = vmatprep.subr.mxu0 0.0
      %2611 = vmatpush1.msra.mxu0 0.0
      %2612 = vmatprep.subr.mxu0 0.0
      %2613 = vmatpush1.msra.mxu0 0.0
      %2614 = vmatprep.subr.mxu0 0.0
      %2615 = vmatpush1.msra.mxu0 0.0
      %2616 = vmatprep.subr.mxu0 0.0
      %2617 = vmatpush1.msra.mxu0 0.0
      %2618 = vmatprep.mubr.f32.mxu0 0.0
      %2619 = vmatmul.mubr.f32.gmra.mrb[0].mxu0 %v2528
      %v2620 = vpop.f32.mrb[0].mxu0
      %v2621 = vadd.f32 0.0, %v2620
      %v2622 = vpop.f32.mrb[0].mxu0
      %2623 = vmatprep.mubr.f32.mxu0 0.0
      %2624 = vmatmul.mubr.f32.gmra.mrb[0].mxu0 %v2531
      %v2625 = vpop.f32.mrb[0].mxu0
      %v2626 = vadd.f32 0.0, %v2625
      %v2627 = vpop.f32.mrb[0].mxu0
      %2628 = vmatprep.mubr.f32.mxu0 0.0
      %2629 = vmatmul.mubr.f32.gmra.mrb[0].mxu0 %v2534
      %v2630 = vpop.f32.mrb[0].mxu0
      %v2631 = vadd.f32 0.0, %v2630
      %v2632 = vpop.f32.mrb[0].mxu0
      %2633 = vmatprep.mubr.f32.mxu0 0.0
      %2634 = vmatmul.mubr.f32.gmra.mrb[0].mxu0 %v2537
      %v2635 = vpop.f32.mrb[0].mxu0
      %v2636 = vadd.f32 0.0, %v2635
      %v2637 = vpop.f32.mrb[0].mxu0
      %2638 = vmatprep.mubr.f32.mxu0 0.0
      %2639 = vmatmul.mubr.f32.gmra.mrb[0].mxu0 %v2540
      %v2640 = vpop.f32.mrb[0].mxu0
      %v2641 = vadd.f32 0.0, %v2640
      %v2642 = vpop.f32.mrb[0].mxu0
      %2643 = vmatprep.mubr.f32.mxu0 0.0
      %2644 = vmatmul.mubr.f32.gmra.mrb[0].mxu0 %v2543
      %v2645 = vpop.f32.mrb[0].mxu0
      %v2646 = vadd.f32 0.0, %v2645
      %v2647 = vpop.f32.mrb[0].mxu0
      %2648 = vmatprep.mubr.f32.mxu0 0.0
      %2649 = vmatmul.mubr.f32.gmra.mrb[0].mxu0 %v2546
      %v2650 = vpop.f32.mrb[0].mxu0
      %v2651 = vadd.f32 0.0, %v2650
      %v2652 = vpop.f32.mrb[0].mxu0
      %2653 = vmatprep.mubr.f32.mxu0 0.0
      %2654 = vmatmul.mubr.f32.gmra.mrb[0].mxu0 %v2549
      %v2655 = vpop.f32.mrb[0].mxu0
      %v2656 = vadd.f32 0.0, %v2655
      %v2657 = vpop.f32.mrb[0].mxu0
      %2658 = vmatprep.mubr.f32.mxu0 0.0
      %2659 = vmatmul.mubr.f32.gmra.mrb[0].mxu0 %v2552
      %v2660 = vpop.f32.mrb[0].mxu0
      %v2661 = vadd.f32 0.0, %v2660
      %v2662 = vpop.f32.mrb[0].mxu0
      %2663 = vdwg.mxu0
      %v2664 = vadd.f32 %v2020, %v2621
      %v2665 = vadd.f32 %v2025, %v2626
      %v2666 = vadd.f32 %v2030, %v2631
      %v2667 = vadd.f32 %v2035, %v2636
      %v2668 = vadd.f32 %v2040, %v2641
      %v2669 = vadd.f32 %v2045, %v2646
      %v2670 = vadd.f32 %v2050, %v2651
      %v2671 = vadd.f32 %v2055, %v2656
      %v2672 = vadd.f32 %v2060, %v2661
      %2673 = vrot.lane.b32.xlu0 %v749, 104
      %v2674 = vpop.permute.xlu0 %2673
      %2675 = vrot.lane.b32.xlu0 %v754, 104
      %v2676 = vpop.permute.xlu0 %2675
      %2677 = vrot.lane.b32.xlu0 %v759, 104
      %v2678 = vpop.permute.xlu0 %2677
      %2679 = vrot.lane.b32.xlu0 %v764, 104
      %v2680 = vpop.permute.xlu0 %2679
      %2681 = vrot.lane.b32.xlu0 %v769, 104
      %v2682 = vpop.permute.xlu0 %2681
      %2683 = vrot.lane.b32.xlu0 %v774, 104
      %v2684 = vpop.permute.xlu0 %2683
      %2685 = vrot.lane.b32.xlu0 %v779, 104
      %v2686 = vpop.permute.xlu0 %2685
      %2687 = vrot.lane.b32.xlu0 %v784, 104
      %v2688 = vpop.permute.xlu0 %2687
      %2689 = vrot.lane.b32.xlu0 %v789, 104
      %v2690 = vpop.permute.xlu0 %2689
      %2691 = vrot.lane.b32.xlu0 %v749, 72
      %v2692 = vpop.permute.xlu0 %2691
      %2693 = vrot.lane.b32.xlu0 %v754, 72
      %v2694 = vpop.permute.xlu0 %2693
      %2695 = vrot.lane.b32.xlu0 %v759, 72
      %v2696 = vpop.permute.xlu0 %2695
      %2697 = vrot.lane.b32.xlu0 %v764, 72
      %v2698 = vpop.permute.xlu0 %2697
      %2699 = vrot.lane.b32.xlu0 %v769, 72
      %v2700 = vpop.permute.xlu0 %2699
      %2701 = vrot.lane.b32.xlu0 %v774, 72
      %v2702 = vpop.permute.xlu0 %2701
      %2703 = vrot.lane.b32.xlu0 %v779, 72
      %v2704 = vpop.permute.xlu0 %2703
      %2705 = vrot.lane.b32.xlu0 %v784, 72
      %v2706 = vpop.permute.xlu0 %2705
      %2707 = vrot.lane.b32.xlu0 %v789, 72
      %v2708 = vpop.permute.xlu0 %2707
      %v2709 = vsel %vm893, %v2674, 0
      %v2711 = vsel %vm893, %v2676, 0
      %v2713 = vsel %vm893, %v2678, 0
      %v2715 = vsel %vm893, %v2680, 0
      %v2717 = vsel %vm893, %v2682, 0
      %v2719 = vsel %vm893, %v2684, 0
      %v2721 = vsel %vm893, %v2686, 0
      %v2723 = vsel %vm893, %v2688, 0
      %v2725 = vsel %vm893, %v2690, 0
      %v2727 = vsel %vm893, %v2692, 0
      %v2729 = vsel %vm893, %v2694, 0
      %v2731 = vsel %vm893, %v2696, 0
      %v2733 = vsel %vm893, %v2698, 0
      %v2735 = vsel %vm893, %v2700, 0
      %v2737 = vsel %vm893, %v2702, 0
      %v2739 = vsel %vm893, %v2704, 0
      %v2741 = vsel %vm893, %v2706, 0
      %v2743 = vsel %vm893, %v2708, 0
      %2745 = vmatprep.subr.mxu0 0.0
      %2746 = vmatpush1.xpose.msra.mxu0 %v2727
      %2747 = vmatprep.subr.mxu0 0.0
      %2748 = vmatpush1.xpose.msra.mxu0 %v2729
      %2749 = vmatprep.subr.mxu0 0.0
      %2750 = vmatpush1.xpose.msra.mxu0 %v2731
      %2751 = vmatprep.subr.mxu0 0.0
      %2752 = vmatpush1.xpose.msra.mxu0 %v2733
      %2753 = vmatprep.subr.mxu0 0.0
      %2754 = vmatpush1.xpose.msra.mxu0 %v2735
      %2755 = vmatprep.subr.mxu0 0.0
      %2756 = vmatpush1.xpose.msra.mxu0 %v2737
      %2757 = vmatprep.subr.mxu0 0.0
      %2758 = vmatpush1.xpose.msra.mxu0 %v2739
      %2759 = vmatprep.subr.mxu0 0.0
      %2760 = vmatpush1.xpose.msra.mxu0 %v2741
      %2761 = vmatprep.subr.mxu0 0.0
      %2762 = vmatpush1.xpose.msra.mxu0 %v2743
      %2763 = vmatprep.subr.mxu0 0.0
      %2764 = vmatpush1.xpose.msra.mxu0 0.0
      %2765 = vmatprep.subr.mxu0 0.0
      %2766 = vmatpush1.xpose.msra.mxu0 0.0
      %2767 = vmatprep.subr.mxu0 0.0
      %2768 = vmatpush1.xpose.msra.mxu0 0.0
      %2769 = vmatprep.subr.mxu0 0.0
      %2770 = vmatpush1.xpose.msra.mxu0 0.0
      %2771 = vmatprep.subr.mxu0 0.0
      %2772 = vmatpush1.xpose.msra.mxu0 0.0
      %2773 = vmatprep.subr.mxu0 0.0
      %2774 = vmatpush1.xpose.msra.mxu0 0.0
      %2775 = vmatprep.subr.mxu0 0.0
      %2776 = vmatpush1.xpose.msra.mxu0 0.0
      %2777 = vmatprep.subr.mxu0 0.0
      %2778 = vmatpush1.xpose.msra.mxu0 0.0
      %2779 = vmatprep.subr.mxu0 0.0
      %2780 = vmatpush1.xpose.msra.mxu0 0.0
      %2781 = vmatprep.subr.mxu0 0.0
      %2782 = vmatpush1.xpose.msra.mxu0 0.0
      %2783 = vmatprep.subr.mxu0 0.0
      %2784 = vmatpush1.xpose.msra.mxu0 0.0
      %2785 = vmatprep.subr.mxu0 0.0
      %2786 = vmatpush1.xpose.msra.mxu0 0.0
      %2787 = vmatprep.subr.mxu0 0.0
      %2788 = vmatpush1.xpose.msra.mxu0 0.0
      %2789 = vmatprep.subr.mxu0 0.0
      %2790 = vmatpush1.xpose.msra.mxu0 0.0
      %2791 = vmatprep.subr.mxu0 0.0
      %2792 = vmatpush1.xpose.msra.mxu0 0.0
      %2793 = vmatprep.subr.mxu0 0.0
      %2794 = vmatpush1.xpose.msra.mxu0 0.0
      %2795 = vmatprep.subr.mxu0 0.0
      %2796 = vmatpush1.xpose.msra.mxu0 0.0
      %2797 = vmatprep.subr.mxu0 0.0
      %2798 = vmatpush1.xpose.msra.mxu0 0.0
      %2799 = vmatprep.subr.mxu0 0.0
      %2800 = vmatpush1.xpose.msra.mxu0 0.0
      %2801 = vmatprep.subr.mxu0 0.0
      %2802 = vmatpush1.xpose.msra.mxu0 0.0
      %2803 = vmatprep.subr.mxu0 0.0
      %2804 = vmatpush1.xpose.msra.mxu0 0.0
      %2805 = vmatprep.subr.mxu0 0.0
      %2806 = vmatpush1.xpose.msra.mxu0 0.0
      %2807 = vmatprep.subr.mxu0 0.0
      %2808 = vmatpush1.xpose.msra.mxu0 0.0
      %2809 = vmatprep.mubr.f32.mxu0 0.0
      %2810 = vmatmul.mubr.f32.gmra.mrb[0].mxu0 %v2709
      %v2811 = vpop.f32.mrb[0].mxu0
      %v2812 = vadd.f32 0.0, %v2811
      %v2813 = vpop.f32.mrb[0].mxu0
      %2814 = vmatprep.mubr.f32.mxu0 0.0
      %2815 = vmatmul.mubr.f32.gmra.mrb[0].mxu0 %v2711
      %v2816 = vpop.f32.mrb[0].mxu0
      %v2817 = vadd.f32 0.0, %v2816
      %v2818 = vpop.f32.mrb[0].mxu0
      %2819 = vmatprep.mubr.f32.mxu0 0.0
      %2820 = vmatmul.mubr.f32.gmra.mrb[0].mxu0 %v2713
      %v2821 = vpop.f32.mrb[0].mxu0
      %v2822 = vadd.f32 0.0, %v2821
      %v2823 = vpop.f32.mrb[0].mxu0
      %2824 = vmatprep.mubr.f32.mxu0 0.0
      %2825 = vmatmul.mubr.f32.gmra.mrb[0].mxu0 %v2715
      %v2826 = vpop.f32.mrb[0].mxu0
      %v2827 = vadd.f32 0.0, %v2826
      %v2828 = vpop.f32.mrb[0].mxu0
      %2829 = vmatprep.mubr.f32.mxu0 0.0
      %2830 = vmatmul.mubr.f32.gmra.mrb[0].mxu0 %v2717
      %v2831 = vpop.f32.mrb[0].mxu0
      %v2832 = vadd.f32 0.0, %v2831
      %v2833 = vpop.f32.mrb[0].mxu0
      %2834 = vmatprep.mubr.f32.mxu0 0.0
      %2835 = vmatmul.mubr.f32.gmra.mrb[0].mxu0 %v2719
      %v2836 = vpop.f32.mrb[0].mxu0
      %v2837 = vadd.f32 0.0, %v2836
      %v2838 = vpop.f32.mrb[0].mxu0
      %2839 = vmatprep.mubr.f32.mxu0 0.0
      %2840 = vmatmul.mubr.f32.gmra.mrb[0].mxu0 %v2721
      %v2841 = vpop.f32.mrb[0].mxu0
      %v2842 = vadd.f32 0.0, %v2841
      %v2843 = vpop.f32.mrb[0].mxu0
      %2844 = vmatprep.mubr.f32.mxu0 0.0
      %2845 = vmatmul.mubr.f32.gmra.mrb[0].mxu0 %v2723
      %v2846 = vpop.f32.mrb[0].mxu0
      %v2847 = vadd.f32 0.0, %v2846
      %v2848 = vpop.f32.mrb[0].mxu0
      %2849 = vmatprep.mubr.f32.mxu0 0.0
      %2850 = vmatmul.mubr.f32.gmra.mrb[0].mxu0 %v2725
      %v2851 = vpop.f32.mrb[0].mxu0
      %v2852 = vadd.f32 0.0, %v2851
      %v2853 = vpop.f32.mrb[0].mxu0
      %2854 = vdwg.mxu0
      %v2855 = vmul.f32 %v2812, 0.35355338
      %v2856 = vmul.f32 %v2817, 0.35355338
      %v2857 = vmul.f32 %v2822, 0.35355338
      %v2858 = vmul.f32 %v2827, 0.35355338
      %v2859 = vmul.f32 %v2832, 0.35355338
      %v2860 = vmul.f32 %v2837, 0.35355338
      %v2861 = vmul.f32 %v2842, 0.35355338
      %v2862 = vmul.f32 %v2847, 0.35355338
      %v2863 = vmul.f32 %v2852, 0.35355338
      %v2864 = vsel %vm1049, %v2855, -inf
      %2865 = vmax.xlane.f32.xlu0 %v2864
      %v2866 = vpop.xlane.xlu0 %2865
      %v2867 = vsel %vm1049, %v2856, -inf
      %2868 = vmax.xlane.f32.xlu0 %v2867
      %v2869 = vpop.xlane.xlu0 %2868
      %v2870 = vsel %vm1049, %v2857, -inf
      %2871 = vmax.xlane.f32.xlu0 %v2870
      %v2872 = vpop.xlane.xlu0 %2871
      %v2873 = vsel %vm1049, %v2858, -inf
      %2874 = vmax.xlane.f32.xlu0 %v2873
      %v2875 = vpop.xlane.xlu0 %2874
      %v2876 = vsel %vm1049, %v2859, -inf
      %2877 = vmax.xlane.f32.xlu0 %v2876
      %v2878 = vpop.xlane.xlu0 %2877
      %v2879 = vsel %vm1049, %v2860, -inf
      %2880 = vmax.xlane.f32.xlu0 %v2879
      %v2881 = vpop.xlane.xlu0 %2880
      %v2882 = vsel %vm1049, %v2861, -inf
      %2883 = vmax.xlane.f32.xlu0 %v2882
      %v2884 = vpop.xlane.xlu0 %2883
      %v2885 = vsel %vm1049, %v2862, -inf
      %2886 = vmax.xlane.f32.xlu0 %v2885
      %v2887 = vpop.xlane.xlu0 %2886
      %v2888 = vsel %vm1074, %v2863, -inf
      %2889 = vmax.xlane.f32.xlu0 %v2888
      %v2890 = vpop.xlane.xlu0 %2889
      %v2891 = vsub.f32 %v2855, %v2866
      %v2892 = vsub.f32 %v2856, %v2869
      %v2893 = vsub.f32 %v2857, %v2872
      %v2894 = vsub.f32 %v2858, %v2875
      %v2895 = vsub.f32 %v2859, %v2878
      %v2896 = vsub.f32 %v2860, %v2881
      %v2897 = vsub.f32 %v2861, %v2884
      %v2898 = vsub.f32 %v2862, %v2887
      %v2899 = vsub.f32 %v2863, %v2890
      %v2900 = vmul.f32 %v2891, 1.442695
      %v2901 = vpow.pop %v2900
      %v2902 = vmul.f32 %v2892, 1.442695
      %v2903 = vpow.pop %v2902
      %v2904 = vmul.f32 %v2893, 1.442695
      %v2905 = vpow.pop %v2904
      %v2906 = vmul.f32 %v2894, 1.442695
      %v2907 = vpow.pop %v2906
      %v2908 = vmul.f32 %v2895, 1.442695
      %v2909 = vpow.pop %v2908
      %v2910 = vmul.f32 %v2896, 1.442695
      %v2911 = vpow.pop %v2910
      %v2912 = vmul.f32 %v2897, 1.442695
      %v2913 = vpow.pop %v2912
      %v2914 = vmul.f32 %v2898, 1.442695
      %v2915 = vpow.pop %v2914
      %v2916 = vmul.f32 %v2899, 1.442695
      %v2917 = vpow.pop %v2916
      %v2918 = vmul.f32 %v2901, %v853
      %v2919 = vmul.f32 %v2903, %v854
      %v2920 = vmul.f32 %v2905, %v855
      %v2921 = vmul.f32 %v2907, %v856
      %v2922 = vmul.f32 %v2909, %v857
      %v2923 = vmul.f32 %v2911, %v858
      %v2924 = vmul.f32 %v2913, %v859
      %v2925 = vmul.f32 %v2915, %v860
      %v2926 = vmul.f32 %v2917, %v861
      %v2927 = vsel %vm1049, %v2918, 0.0
      %2928 = vadd.xlane.f32.xlu0 %v2927
      %v2929 = vpop.xlane.xlu0 %2928
      %v2930 = vsel %vm1049, %v2919, 0.0
      %2931 = vadd.xlane.f32.xlu0 %v2930
      %v2932 = vpop.xlane.xlu0 %2931
      %v2933 = vsel %vm1049, %v2920, 0.0
      %2934 = vadd.xlane.f32.xlu0 %v2933
      %v2935 = vpop.xlane.xlu0 %2934
      %v2936 = vsel %vm1049, %v2921, 0.0
      %2937 = vadd.xlane.f32.xlu0 %v2936
      %v2938 = vpop.xlane.xlu0 %2937
      %v2939 = vsel %vm1049, %v2922, 0.0
      %2940 = vadd.xlane.f32.xlu0 %v2939
      %v2941 = vpop.xlane.xlu0 %2940
      %v2942 = vsel %vm1049, %v2923, 0.0
      %2943 = vadd.xlane.f32.xlu0 %v2942
      %v2944 = vpop.xlane.xlu0 %2943
      %v2945 = vsel %vm1049, %v2924, 0.0
      %2946 = vadd.xlane.f32.xlu0 %v2945
      %v2947 = vpop.xlane.xlu0 %2946
      %v2948 = vsel %vm1049, %v2925, 0.0
      %2949 = vadd.xlane.f32.xlu0 %v2948
      %v2950 = vpop.xlane.xlu0 %2949
      %v2951 = vsel %vm1074, %v2926, 0.0
      %2952 = vadd.xlane.f32.xlu0 %v2951
      %v2953 = vpop.xlane.xlu0 %2952
      %v2954 = vrcp.pop %v2929
      %v2955 = vmul.f32 %v2918, %v2954
      %v2956 = vrcp.pop %v2932
      %v2957 = vmul.f32 %v2919, %v2956
      %v2958 = vrcp.pop %v2935
      %v2959 = vmul.f32 %v2920, %v2958
      %v2960 = vrcp.pop %v2938
      %v2961 = vmul.f32 %v2921, %v2960
      %v2962 = vrcp.pop %v2941
      %v2963 = vmul.f32 %v2922, %v2962
      %v2964 = vrcp.pop %v2944
      %v2965 = vmul.f32 %v2923, %v2964
      %v2966 = vrcp.pop %v2947
      %v2967 = vmul.f32 %v2924, %v2966
      %v2968 = vrcp.pop %v2950
      %v2969 = vmul.f32 %v2925, %v2968
      %v2970 = vrcp.pop %v2953
      %v2971 = vmul.f32 %v2926, %v2970
      %2972 = vrot.lane.b32.xlu0 %v749, 40
      %v2973 = vpop.permute.xlu0 %2972
      %2974 = vrot.lane.b32.xlu0 %v754, 40
      %v2975 = vpop.permute.xlu0 %2974
      %2976 = vrot.lane.b32.xlu0 %v759, 40
      %v2977 = vpop.permute.xlu0 %2976
      %2978 = vrot.lane.b32.xlu0 %v764, 40
      %v2979 = vpop.permute.xlu0 %2978
      %2980 = vrot.lane.b32.xlu0 %v769, 40
      %v2981 = vpop.permute.xlu0 %2980
      %2982 = vrot.lane.b32.xlu0 %v774, 40
      %v2983 = vpop.permute.xlu0 %2982
      %2984 = vrot.lane.b32.xlu0 %v779, 40
      %v2985 = vpop.permute.xlu0 %2984
      %2986 = vrot.lane.b32.xlu0 %v784, 40
      %v2987 = vpop.permute.xlu0 %2986
      %2988 = vrot.lane.b32.xlu0 %v789, 40
      %v2989 = vpop.permute.xlu0 %2988
      %v2999 = vsel %vm1049, %v2955, 0
      %v3002 = vsel %vm1049, %v2957, 0
      %v3005 = vsel %vm1049, %v2959, 0
      %v3008 = vsel %vm1049, %v2961, 0
      %v3011 = vsel %vm1049, %v2963, 0
      %v3014 = vsel %vm1049, %v2965, 0
      %v3017 = vsel %vm1049, %v2967, 0
      %v3020 = vsel %vm1049, %v2969, 0
      %v3023 = vsel %vm1049, %v2971, 0
      %v3025 = vsel %vm1212, %v2989, 0
      %3027 = vmatprep.subr.mxu0 0.0
      %3028 = vmatpush1.msra.mxu0 %v2973
      %3029 = vmatprep.subr.mxu0 0.0
      %3030 = vmatpush1.msra.mxu0 %v2975
      %3031 = vmatprep.subr.mxu0 0.0
      %3032 = vmatpush1.msra.mxu0 %v2977
      %3033 = vmatprep.subr.mxu0 0.0
      %3034 = vmatpush1.msra.mxu0 %v2979
      %3035 = vmatprep.subr.mxu0 0.0
      %3036 = vmatpush1.msra.mxu0 %v2981
      %3037 = vmatprep.subr.mxu0 0.0
      %3038 = vmatpush1.msra.mxu0 %v2983
      %3039 = vmatprep.subr.mxu0 0.0
      %3040 = vmatpush1.msra.mxu0 %v2985
      %3041 = vmatprep.subr.mxu0 0.0
      %3042 = vmatpush1.msra.mxu0 %v2987
      %3043 = vmatprep.subr.mxu0 0.0
      %3044 = vmatpush1.msra.mxu0 %v3025
      %3045 = vmatprep.subr.mxu0 0.0
      %3046 = vmatpush1.msra.mxu0 0.0
      %3047 = vmatprep.subr.mxu0 0.0
      %3048 = vmatpush1.msra.mxu0 0.0
      %3049 = vmatprep.subr.mxu0 0.0
      %3050 = vmatpush1.msra.mxu0 0.0
      %3051 = vmatprep.subr.mxu0 0.0
      %3052 = vmatpush1.msra.mxu0 0.0
      %3053 = vmatprep.subr.mxu0 0.0
      %3054 = vmatpush1.msra.mxu0 0.0
      %3055 = vmatprep.subr.mxu0 0.0
      %3056 = vmatpush1.msra.mxu0 0.0
      %3057 = vmatprep.subr.mxu0 0.0
      %3058 = vmatpush1.msra.mxu0 0.0
      %3059 = vmatprep.subr.mxu0 0.0
      %3060 = vmatpush1.msra.mxu0 0.0
      %3061 = vmatprep.subr.mxu0 0.0
      %3062 = vmatpush1.msra.mxu0 0.0
      %3063 = vmatprep.subr.mxu0 0.0
      %3064 = vmatpush1.msra.mxu0 0.0
      %3065 = vmatprep.subr.mxu0 0.0
      %3066 = vmatpush1.msra.mxu0 0.0
      %3067 = vmatprep.subr.mxu0 0.0
      %3068 = vmatpush1.msra.mxu0 0.0
      %3069 = vmatprep.subr.mxu0 0.0
      %3070 = vmatpush1.msra.mxu0 0.0
      %3071 = vmatprep.subr.mxu0 0.0
      %3072 = vmatpush1.msra.mxu0 0.0
      %3073 = vmatprep.subr.mxu0 0.0
      %3074 = vmatpush1.msra.mxu0 0.0
      %3075 = vmatprep.subr.mxu0 0.0
      %3076 = vmatpush1.msra.mxu0 0.0
      %3077 = vmatprep.subr.mxu0 0.0
      %3078 = vmatpush1.msra.mxu0 0.0
      %3079 = vmatprep.subr.mxu0 0.0
      %3080 = vmatpush1.msra.mxu0 0.0
      %3081 = vmatprep.subr.mxu0 0.0
      %3082 = vmatpush1.msra.mxu0 0.0
      %3083 = vmatprep.subr.mxu0 0.0
      %3084 = vmatpush1.msra.mxu0 0.0
      %3085 = vmatprep.subr.mxu0 0.0
      %3086 = vmatpush1.msra.mxu0 0.0
      %3087 = vmatprep.subr.mxu0 0.0
      %3088 = vmatpush1.msra.mxu0 0.0
      %3089 = vmatprep.subr.mxu0 0.0
      %3090 = vmatpush1.msra.mxu0 0.0
      %3091 = vmatprep.mubr.f32.mxu0 0.0
      %3092 = vmatmul.mubr.f32.gmra.mrb[0].mxu0 %v2999
      %v3093 = vpop.f32.mrb[0].mxu0
      %v3094 = vadd.f32 0.0, %v3093
      %v3095 = vpop.f32.mrb[0].mxu0
      %3096 = vmatprep.mubr.f32.mxu0 0.0
      %3097 = vmatmul.mubr.f32.gmra.mrb[0].mxu0 %v3002
      %v3098 = vpop.f32.mrb[0].mxu0
      %v3099 = vadd.f32 0.0, %v3098
      %v3100 = vpop.f32.mrb[0].mxu0
      %3101 = vmatprep.mubr.f32.mxu0 0.0
      %3102 = vmatmul.mubr.f32.gmra.mrb[0].mxu0 %v3005
      %v3103 = vpop.f32.mrb[0].mxu0
      %v3104 = vadd.f32 0.0, %v3103
      %v3105 = vpop.f32.mrb[0].mxu0
      %3106 = vmatprep.mubr.f32.mxu0 0.0
      %3107 = vmatmul.mubr.f32.gmra.mrb[0].mxu0 %v3008
      %v3108 = vpop.f32.mrb[0].mxu0
      %v3109 = vadd.f32 0.0, %v3108
      %v3110 = vpop.f32.mrb[0].mxu0
      %3111 = vmatprep.mubr.f32.mxu0 0.0
      %3112 = vmatmul.mubr.f32.gmra.mrb[0].mxu0 %v3011
      %v3113 = vpop.f32.mrb[0].mxu0
      %v3114 = vadd.f32 0.0, %v3113
      %v3115 = vpop.f32.mrb[0].mxu0
      %3116 = vmatprep.mubr.f32.mxu0 0.0
      %3117 = vmatmul.mubr.f32.gmra.mrb[0].mxu0 %v3014
      %v3118 = vpop.f32.mrb[0].mxu0
      %v3119 = vadd.f32 0.0, %v3118
      %v3120 = vpop.f32.mrb[0].mxu0
      %3121 = vmatprep.mubr.f32.mxu0 0.0
      %3122 = vmatmul.mubr.f32.gmra.mrb[0].mxu0 %v3017
      %v3123 = vpop.f32.mrb[0].mxu0
      %v3124 = vadd.f32 0.0, %v3123
      %v3125 = vpop.f32.mrb[0].mxu0
      %3126 = vmatprep.mubr.f32.mxu0 0.0
      %3127 = vmatmul.mubr.f32.gmra.mrb[0].mxu0 %v3020
      %v3128 = vpop.f32.mrb[0].mxu0
      %v3129 = vadd.f32 0.0, %v3128
      %v3130 = vpop.f32.mrb[0].mxu0
      %3131 = vmatprep.mubr.f32.mxu0 0.0
      %3132 = vmatmul.mubr.f32.gmra.mrb[0].mxu0 %v3023
      %v3133 = vpop.f32.mrb[0].mxu0
      %v3134 = vadd.f32 0.0, %v3133
      %v3135 = vpop.f32.mrb[0].mxu0
      %3136 = vdwg.mxu0
      %v3138 = vsel %vm893, %v3094, 0
      %v3141 = vsel %vm893, %v3099, 0
      %v3144 = vsel %vm893, %v3104, 0
      %v3147 = vsel %vm893, %v3109, 0
      %v3150 = vsel %vm893, %v3114, 0
      %v3153 = vsel %vm893, %v3119, 0
      %v3156 = vsel %vm893, %v3124, 0
      %v3159 = vsel %vm893, %v3129, 0
      %v3162 = vsel %vm893, %v3134, 0
      %3164 = vmatprep.subr.mxu0 0.0
      %3165 = vmatpush1.msra.mxu0 %v865
      %3166 = vmatprep.subr.mxu0 0.0
      %3167 = vmatpush1.msra.mxu0 0.0
      %3168 = vmatprep.subr.mxu0 0.0
      %3169 = vmatpush1.msra.mxu0 0.0
      %3170 = vmatprep.subr.mxu0 0.0
      %3171 = vmatpush1.msra.mxu0 0.0
      %3172 = vmatprep.subr.mxu0 0.0
      %3173 = vmatpush1.msra.mxu0 0.0
      %3174 = vmatprep.subr.mxu0 0.0
      %3175 = vmatpush1.msra.mxu0 0.0
      %3176 = vmatprep.subr.mxu0 0.0
      %3177 = vmatpush1.msra.mxu0 0.0
      %3178 = vmatprep.subr.mxu0 0.0
      %3179 = vmatpush1.msra.mxu0 0.0
      %3180 = vmatprep.subr.mxu0 0.0
      %3181 = vmatpush1.msra.mxu0 0.0
      %3182 = vmatprep.subr.mxu0 0.0
      %3183 = vmatpush1.msra.mxu0 0.0
      %3184 = vmatprep.subr.mxu0 0.0
      %3185 = vmatpush1.msra.mxu0 0.0
      %3186 = vmatprep.subr.mxu0 0.0
      %3187 = vmatpush1.msra.mxu0 0.0
      %3188 = vmatprep.subr.mxu0 0.0
      %3189 = vmatpush1.msra.mxu0 0.0
      %3190 = vmatprep.subr.mxu0 0.0
      %3191 = vmatpush1.msra.mxu0 0.0
      %3192 = vmatprep.subr.mxu0 0.0
      %3193 = vmatpush1.msra.mxu0 0.0
      %3194 = vmatprep.subr.mxu0 0.0
      %3195 = vmatpush1.msra.mxu0 0.0
      %3196 = vmatprep.subr.mxu0 0.0
      %3197 = vmatpush1.msra.mxu0 0.0
      %3198 = vmatprep.subr.mxu0 0.0
      %3199 = vmatpush1.msra.mxu0 0.0
      %3200 = vmatprep.subr.mxu0 0.0
      %3201 = vmatpush1.msra.mxu0 0.0
      %3202 = vmatprep.subr.mxu0 0.0
      %3203 = vmatpush1.msra.mxu0 0.0
      %3204 = vmatprep.subr.mxu0 0.0
      %3205 = vmatpush1.msra.mxu0 0.0
      %3206 = vmatprep.subr.mxu0 0.0
      %3207 = vmatpush1.msra.mxu0 0.0
      %3208 = vmatprep.subr.mxu0 0.0
      %3209 = vmatpush1.msra.mxu0 0.0
      %3210 = vmatprep.subr.mxu0 0.0
      %3211 = vmatpush1.msra.mxu0 0.0
      %3212 = vmatprep.subr.mxu0 0.0
      %3213 = vmatpush1.msra.mxu0 0.0
      %3214 = vmatprep.subr.mxu0 0.0
      %3215 = vmatpush1.msra.mxu0 0.0
      %3216 = vmatprep.subr.mxu0 0.0
      %3217 = vmatpush1.msra.mxu0 0.0
      %3218 = vmatprep.subr.mxu0 0.0
      %3219 = vmatpush1.msra.mxu0 0.0
      %3220 = vmatprep.subr.mxu0 0.0
      %3221 = vmatpush1.msra.mxu0 0.0
      %3222 = vmatprep.subr.mxu0 0.0
      %3223 = vmatpush1.msra.mxu0 0.0
      %3224 = vmatprep.subr.mxu0 0.0
      %3225 = vmatpush1.msra.mxu0 0.0
      %3226 = vmatprep.subr.mxu0 0.0
      %3227 = vmatpush1.msra.mxu0 0.0
      %3228 = vmatprep.mubr.f32.mxu0 0.0
      %3229 = vmatmul.mubr.f32.gmra.mrb[0].mxu0 %v3138
      %v3230 = vpop.f32.mrb[0].mxu0
      %v3231 = vadd.f32 0.0, %v3230
      %v3232 = vpop.f32.mrb[0].mxu0
      %3233 = vmatprep.mubr.f32.mxu0 0.0
      %3234 = vmatmul.mubr.f32.gmra.mrb[0].mxu0 %v3141
      %v3235 = vpop.f32.mrb[0].mxu0
      %v3236 = vadd.f32 0.0, %v3235
      %v3237 = vpop.f32.mrb[0].mxu0
      %3238 = vmatprep.mubr.f32.mxu0 0.0
      %3239 = vmatmul.mubr.f32.gmra.mrb[0].mxu0 %v3144
      %v3240 = vpop.f32.mrb[0].mxu0
      %v3241 = vadd.f32 0.0, %v3240
      %v3242 = vpop.f32.mrb[0].mxu0
      %3243 = vmatprep.mubr.f32.mxu0 0.0
      %3244 = vmatmul.mubr.f32.gmra.mrb[0].mxu0 %v3147
      %v3245 = vpop.f32.mrb[0].mxu0
      %v3246 = vadd.f32 0.0, %v3245
      %v3247 = vpop.f32.mrb[0].mxu0
      %3248 = vmatprep.mubr.f32.mxu0 0.0
      %3249 = vmatmul.mubr.f32.gmra.mrb[0].mxu0 %v3150
      %v3250 = vpop.f32.mrb[0].mxu0
      %v3251 = vadd.f32 0.0, %v3250
      %v3252 = vpop.f32.mrb[0].mxu0
      %3253 = vmatprep.mubr.f32.mxu0 0.0
      %3254 = vmatmul.mubr.f32.gmra.mrb[0].mxu0 %v3153
      %v3255 = vpop.f32.mrb[0].mxu0
      %v3256 = vadd.f32 0.0, %v3255
      %v3257 = vpop.f32.mrb[0].mxu0
      %3258 = vmatprep.mubr.f32.mxu0 0.0
      %3259 = vmatmul.mubr.f32.gmra.mrb[0].mxu0 %v3156
      %v3260 = vpop.f32.mrb[0].mxu0
      %v3261 = vadd.f32 0.0, %v3260
      %v3262 = vpop.f32.mrb[0].mxu0
      %3263 = vmatprep.mubr.f32.mxu0 0.0
      %3264 = vmatmul.mubr.f32.gmra.mrb[0].mxu0 %v3159
      %v3265 = vpop.f32.mrb[0].mxu0
      %v3266 = vadd.f32 0.0, %v3265
      %v3267 = vpop.f32.mrb[0].mxu0
      %3268 = vmatprep.mubr.f32.mxu0 0.0
      %3269 = vmatmul.mubr.f32.gmra.mrb[0].mxu0 %v3162
      %v3270 = vpop.f32.mrb[0].mxu0
      %v3271 = vadd.f32 0.0, %v3270
      %v3272 = vpop.f32.mrb[0].mxu0
      %3273 = vdwg.mxu0
      %v3274 = vadd.f32 %v2664, %v3231
      %v3275 = vadd.f32 %v2665, %v3236
      %v3276 = vadd.f32 %v2666, %v3241
      %v3277 = vadd.f32 %v2667, %v3246
      %v3278 = vadd.f32 %v2668, %v3251
      %v3279 = vadd.f32 %v2669, %v3256
      %v3280 = vadd.f32 %v2670, %v3261
      %v3281 = vadd.f32 %v2671, %v3266
      %v3282 = vadd.f32 %v2672, %v3271
      %v3283 = vadd.f32 %v482, %v3274
      %v3284 = vadd.f32 %v483, %v3275
      %v3285 = vadd.f32 %v484, %v3276
      %v3286 = vadd.f32 %v485, %v3277
      %v3287 = vadd.f32 %v486, %v3278
      %v3288 = vadd.f32 %v487, %v3279
      %v3289 = vadd.f32 %v488, %v3280
      %v3290 = vadd.f32 %v489, %v3281
      %v3291 = vadd.f32 %v490, %v3282
      %v3292 = vld [vmem:[%s7] sm:$0x1]
      %v3294 = vlaneseq
      %v3295 = vshrl.u32 %v3294, 7
      %v3296 = vsub.s32 0, %v3295
      %v3297 = vrot.slane %v3292, %v3296
      %v3299 = vadd.f32 %v3283, %v3297
      %v3300 = vadd.f32 %v3284, %v3297
      %v3301 = vadd.f32 %v3285, %v3297
      %v3302 = vadd.f32 %v3286, %v3297
      %v3303 = vadd.f32 %v3287, %v3297
      %v3304 = vadd.f32 %v3288, %v3297
      %v3305 = vadd.f32 %v3289, %v3297
      %v3306 = vadd.f32 %v3290, %v3297
      %v3307 = vadd.f32 %v3291, %v3297
      %v3308 = vld [vmem:[%s8] sm:$0x1]
      %v3309 = vld [vmem:[%s9] sm:$0x1]
      %v3310 = vsel %vm494, %v3299, 0.0
      %3311 = vadd.xlane.f32.xlu0 %v3310
      %v3312 = vpop.xlane.xlu0 %3311
      %v3313 = vsel %vm494, %v3300, 0.0
      %3314 = vadd.xlane.f32.xlu0 %v3313
      %v3315 = vpop.xlane.xlu0 %3314
      %v3316 = vsel %vm494, %v3301, 0.0
      %3317 = vadd.xlane.f32.xlu0 %v3316
      %v3318 = vpop.xlane.xlu0 %3317
      %v3319 = vsel %vm494, %v3302, 0.0
      %3320 = vadd.xlane.f32.xlu0 %v3319
      %v3321 = vpop.xlane.xlu0 %3320
      %v3322 = vsel %vm494, %v3303, 0.0
      %3323 = vadd.xlane.f32.xlu0 %v3322
      %v3324 = vpop.xlane.xlu0 %3323
      %v3325 = vsel %vm494, %v3304, 0.0
      %3326 = vadd.xlane.f32.xlu0 %v3325
      %v3327 = vpop.xlane.xlu0 %3326
      %v3328 = vsel %vm494, %v3305, 0.0
      %3329 = vadd.xlane.f32.xlu0 %v3328
      %v3330 = vpop.xlane.xlu0 %3329
      %v3331 = vsel %vm494, %v3306, 0.0
      %3332 = vadd.xlane.f32.xlu0 %v3331
      %v3333 = vpop.xlane.xlu0 %3332
      %v3334 = vsel %vm519, %v3307, 0.0
      %3335 = vadd.xlane.f32.xlu0 %v3334
      %v3336 = vpop.xlane.xlu0 %3335
      %v3337 = vmul.f32 %v3312, %v523
      %v3338 = vmul.f32 %v3315, %v523
      %v3339 = vmul.f32 %v3318, %v523
      %v3340 = vmul.f32 %v3321, %v523
      %v3341 = vmul.f32 %v3324, %v523
      %v3342 = vmul.f32 %v3327, %v523
      %v3343 = vmul.f32 %v3330, %v523
      %v3344 = vmul.f32 %v3333, %v523
      %v3345 = vmul.f32 %v3336, %v523
      %v3346 = vsub.f32 %v3299, %v3337
      %v3347 = vsub.f32 %v3300, %v3338
      %v3348 = vsub.f32 %v3301, %v3339
      %v3349 = vsub.f32 %v3302, %v3340
      %v3350 = vsub.f32 %v3303, %v3341
      %v3351 = vsub.f32 %v3304, %v3342
      %v3352 = vsub.f32 %v3305, %v3343
      %v3353 = vsub.f32 %v3306, %v3344
      %v3354 = vsub.f32 %v3307, %v3345
      %v3355 = vmul.f32 %v3346, %v3346
      %v3356 = vmul.f32 %v3347, %v3347
      %v3357 = vmul.f32 %v3348, %v3348
      %v3358 = vmul.f32 %v3349, %v3349
      %v3359 = vmul.f32 %v3350, %v3350
      %v3360 = vmul.f32 %v3351, %v3351
      %v3361 = vmul.f32 %v3352, %v3352
      %v3362 = vmul.f32 %v3353, %v3353
      %v3363 = vmul.f32 %v3354, %v3354
      %v3364 = vsel %vm494, %v3355, 0.0
      %3365 = vadd.xlane.f32.xlu0 %v3364
      %v3366 = vpop.xlane.xlu0 %3365
      %v3367 = vsel %vm494, %v3356, 0.0
      %3368 = vadd.xlane.f32.xlu0 %v3367
      %v3369 = vpop.xlane.xlu0 %3368
      %v3370 = vsel %vm494, %v3357, 0.0
      %3371 = vadd.xlane.f32.xlu0 %v3370
      %v3372 = vpop.xlane.xlu0 %3371
      %v3373 = vsel %vm494, %v3358, 0.0
      %3374 = vadd.xlane.f32.xlu0 %v3373
      %v3375 = vpop.xlane.xlu0 %3374
      %v3376 = vsel %vm494, %v3359, 0.0
      %3377 = vadd.xlane.f32.xlu0 %v3376
      %v3378 = vpop.xlane.xlu0 %3377
      %v3379 = vsel %vm494, %v3360, 0.0
      %3380 = vadd.xlane.f32.xlu0 %v3379
      %v3381 = vpop.xlane.xlu0 %3380
      %v3382 = vsel %vm494, %v3361, 0.0
      %3383 = vadd.xlane.f32.xlu0 %v3382
      %v3384 = vpop.xlane.xlu0 %3383
      %v3385 = vsel %vm494, %v3362, 0.0
      %3386 = vadd.xlane.f32.xlu0 %v3385
      %v3387 = vpop.xlane.xlu0 %3386
      %v3388 = vsel %vm519, %v3363, 0.0
      %3389 = vadd.xlane.f32.xlu0 %v3388
      %v3390 = vpop.xlane.xlu0 %3389
      %v3391 = vmul.f32 %v3366, %v523
      %v3392 = vmul.f32 %v3369, %v523
      %v3393 = vmul.f32 %v3372, %v523
      %v3394 = vmul.f32 %v3375, %v523
      %v3395 = vmul.f32 %v3378, %v523
      %v3396 = vmul.f32 %v3381, %v523
      %v3397 = vmul.f32 %v3384, %v523
      %v3398 = vmul.f32 %v3387, %v523
      %v3399 = vmul.f32 %v3390, %v523
      %v3400 = vadd.f32 %v3391, 1e-06
      %v3401 = vadd.f32 %v3392, 1e-06
      %v3402 = vadd.f32 %v3393, 1e-06
      %v3403 = vadd.f32 %v3394, 1e-06
      %v3404 = vadd.f32 %v3395, 1e-06
      %v3405 = vadd.f32 %v3396, 1e-06
      %v3406 = vadd.f32 %v3397, 1e-06
      %v3407 = vadd.f32 %v3398, 1e-06
      %v3408 = vadd.f32 %v3399, 1e-06
      %v3409 = vrsqrt.pop %v3400
      %v3410 = vrsqrt.pop %v3401
      %v3411 = vrsqrt.pop %v3402
      %v3412 = vrsqrt.pop %v3403
      %v3413 = vrsqrt.pop %v3404
      %v3414 = vrsqrt.pop %v3405
      %v3415 = vrsqrt.pop %v3406
      %v3416 = vrsqrt.pop %v3407
      %v3417 = vrsqrt.pop %v3408
      %v3418 = vmul.f32 %v3346, %v3409
      %v3419 = vmul.f32 %v3347, %v3410
      %v3420 = vmul.f32 %v3348, %v3411
      %v3421 = vmul.f32 %v3349, %v3412
      %v3422 = vmul.f32 %v3350, %v3413
      %v3423 = vmul.f32 %v3351, %v3414
      %v3424 = vmul.f32 %v3352, %v3415
      %v3425 = vmul.f32 %v3353, %v3416
      %v3426 = vmul.f32 %v3354, %v3417
      %v3428 = vlaneseq
      %v3429 = vshrl.u32 %v3428, 7
      %v3430 = vsub.s32 0, %v3429
      %v3431 = vrot.slane %v3308, %v3430
      %v3433 = vmul.f32 %v3418, %v3431
      %v3434 = vmul.f32 %v3419, %v3431
      %v3435 = vmul.f32 %v3420, %v3431
      %v3436 = vmul.f32 %v3421, %v3431
      %v3437 = vmul.f32 %v3422, %v3431
      %v3438 = vmul.f32 %v3423, %v3431
      %v3439 = vmul.f32 %v3424, %v3431
      %v3440 = vmul.f32 %v3425, %v3431
      %v3441 = vmul.f32 %v3426, %v3431
      %v3443 = vlaneseq
      %v3444 = vshrl.u32 %v3443, 7
      %v3445 = vsub.s32 0, %v3444
      %v3446 = vrot.slane %v3309, %v3445
      %v3448 = vadd.f32 %v3433, %v3446
      %v3449 = vadd.f32 %v3434, %v3446
      %v3450 = vadd.f32 %v3435, %v3446
      %v3451 = vadd.f32 %v3436, %v3446
      %v3452 = vadd.f32 %v3437, %v3446
      %v3453 = vadd.f32 %v3438, %v3446
      %v3454 = vadd.f32 %v3439, %v3446
      %v3455 = vadd.f32 %v3440, %v3446
      %v3456 = vadd.f32 %v3441, %v3446
      %v3457 = vld [vmem:[%s10] sm:$0xff]
      %v3458 = vld [vmem:[%s10 + $0x8] sm:$0xff]
      %v3459 = vld [vmem:[%s10 + $0x10] sm:$0xff]
      %v3460 = vld [vmem:[%s10 + $0x18] sm:$0xff]
      %v3461 = vld [vmem:[%s11] sm:$0x1]
      %v3463 = vlaneseq
      %v3464 = vshrl.u32 %v3463, 7
      %v3465 = vsub.s32 0, %v3464
      %v3466 = vrot.slane %v3461, %v3465
      %v3469 = vsel %vm494, %v3448, 0
      %v3472 = vsel %vm494, %v3449, 0
      %v3475 = vsel %vm494, %v3450, 0
      %v3478 = vsel %vm494, %v3451, 0
      %v3481 = vsel %vm494, %v3452, 0
      %v3484 = vsel %vm494, %v3453, 0
      %v3487 = vsel %vm494, %v3454, 0
      %v3490 = vsel %vm494, %v3455, 0
      %v3493 = vsel %vm494, %v3456, 0
      %3495 = vmatprep.subr.mxu0 0.0
      %3496 = vmatpush1.msra.mxu0 %v3457
      %3497 = vmatprep.subr.mxu0 0.0
      %3498 = vmatpush1.msra.mxu0 %v3458
      %3499 = vmatprep.subr.mxu0 0.0
      %3500 = vmatpush1.msra.mxu0 %v3459
      %3501 = vmatprep.subr.mxu0 0.0
      %3502 = vmatpush1.msra.mxu0 %v3460
      %3503 = vmatprep.subr.mxu0 0.0
      %3504 = vmatpush1.msra.mxu0 0.0
      %3505 = vmatprep.subr.mxu0 0.0
      %3506 = vmatpush1.msra.mxu0 0.0
      %3507 = vmatprep.subr.mxu0 0.0
      %3508 = vmatpush1.msra.mxu0 0.0
      %3509 = vmatprep.subr.mxu0 0.0
      %3510 = vmatpush1.msra.mxu0 0.0
      %3511 = vmatprep.subr.mxu0 0.0
      %3512 = vmatpush1.msra.mxu0 0.0
      %3513 = vmatprep.subr.mxu0 0.0
      %3514 = vmatpush1.msra.mxu0 0.0
      %3515 = vmatprep.subr.mxu0 0.0
      %3516 = vmatpush1.msra.mxu0 0.0
      %3517 = vmatprep.subr.mxu0 0.0
      %3518 = vmatpush1.msra.mxu0 0.0
      %3519 = vmatprep.subr.mxu0 0.0
      %3520 = vmatpush1.msra.mxu0 0.0
      %3521 = vmatprep.subr.mxu0 0.0
      %3522 = vmatpush1.msra.mxu0 0.0
      %3523 = vmatprep.subr.mxu0 0.0
      %3524 = vmatpush1.msra.mxu0 0.0
      %3525 = vmatprep.subr.mxu0 0.0
      %3526 = vmatpush1.msra.mxu0 0.0
      %3527 = vmatprep.subr.mxu0 0.0
      %3528 = vmatpush1.msra.mxu0 0.0
      %3529 = vmatprep.subr.mxu0 0.0
      %3530 = vmatpush1.msra.mxu0 0.0
      %3531 = vmatprep.subr.mxu0 0.0
      %3532 = vmatpush1.msra.mxu0 0.0
      %3533 = vmatprep.subr.mxu0 0.0
      %3534 = vmatpush1.msra.mxu0 0.0
      %3535 = vmatprep.subr.mxu0 0.0
      %3536 = vmatpush1.msra.mxu0 0.0
      %3537 = vmatprep.subr.mxu0 0.0
      %3538 = vmatpush1.msra.mxu0 0.0
      %3539 = vmatprep.subr.mxu0 0.0
      %3540 = vmatpush1.msra.mxu0 0.0
      %3541 = vmatprep.subr.mxu0 0.0
      %3542 = vmatpush1.msra.mxu0 0.0
      %3543 = vmatprep.subr.mxu0 0.0
      %3544 = vmatpush1.msra.mxu0 0.0
      %3545 = vmatprep.subr.mxu0 0.0
      %3546 = vmatpush1.msra.mxu0 0.0
      %3547 = vmatprep.subr.mxu0 0.0
      %3548 = vmatpush1.msra.mxu0 0.0
      %3549 = vmatprep.subr.mxu0 0.0
      %3550 = vmatpush1.msra.mxu0 0.0
      %3551 = vmatprep.subr.mxu0 0.0
      %3552 = vmatpush1.msra.mxu0 0.0
      %3553 = vmatprep.subr.mxu0 0.0
      %3554 = vmatpush1.msra.mxu0 0.0
      %3555 = vmatprep.subr.mxu0 0.0
      %3556 = vmatpush1.msra.mxu0 0.0
      %3557 = vmatprep.subr.mxu0 0.0
      %3558 = vmatpush1.msra.mxu0 0.0
      %3559 = vmatprep.mubr.f32.mxu0 0.0
      %3560 = vmatmul.mubr.f32.gmra.mrb[0].mxu0 %v3469
      %v3561 = vpop.f32.mrb[0].mxu0
      %v3562 = vadd.f32 %v3466, %v3561
      %v3563 = vpop.f32.mrb[0].mxu0
      %3564 = vmatprep.mubr.f32.mxu0 0.0
      %3565 = vmatmul.mubr.f32.gmra.mrb[0].mxu0 %v3472
      %v3566 = vpop.f32.mrb[0].mxu0
      %v3567 = vadd.f32 %v3466, %v3566
      %v3568 = vpop.f32.mrb[0].mxu0
      %3569 = vmatprep.mubr.f32.mxu0 0.0
      %3570 = vmatmul.mubr.f32.gmra.mrb[0].mxu0 %v3475
      %v3571 = vpop.f32.mrb[0].mxu0
      %v3572 = vadd.f32 %v3466, %v3571
      %v3573 = vpop.f32.mrb[0].mxu0
      %3574 = vmatprep.mubr.f32.mxu0 0.0
      %3575 = vmatmul.mubr.f32.gmra.mrb[0].mxu0 %v3478
      %v3576 = vpop.f32.mrb[0].mxu0
      %v3577 = vadd.f32 %v3466, %v3576
      %v3578 = vpop.f32.mrb[0].mxu0
      %3579 = vmatprep.mubr.f32.mxu0 0.0
      %3580 = vmatmul.mubr.f32.gmra.mrb[0].mxu0 %v3481
      %v3581 = vpop.f32.mrb[0].mxu0
      %v3582 = vadd.f32 %v3466, %v3581
      %v3583 = vpop.f32.mrb[0].mxu0
      %3584 = vmatprep.mubr.f32.mxu0 0.0
      %3585 = vmatmul.mubr.f32.gmra.mrb[0].mxu0 %v3484
      %v3586 = vpop.f32.mrb[0].mxu0
      %v3587 = vadd.f32 %v3466, %v3586
      %v3588 = vpop.f32.mrb[0].mxu0
      %3589 = vmatprep.mubr.f32.mxu0 0.0
      %3590 = vmatmul.mubr.f32.gmra.mrb[0].mxu0 %v3487
      %v3591 = vpop.f32.mrb[0].mxu0
      %v3592 = vadd.f32 %v3466, %v3591
      %v3593 = vpop.f32.mrb[0].mxu0
      %3594 = vmatprep.mubr.f32.mxu0 0.0
      %3595 = vmatmul.mubr.f32.gmra.mrb[0].mxu0 %v3490
      %v3596 = vpop.f32.mrb[0].mxu0
      %v3597 = vadd.f32 %v3466, %v3596
      %v3598 = vpop.f32.mrb[0].mxu0
      %3599 = vmatprep.mubr.f32.mxu0 0.0
      %3600 = vmatmul.mubr.f32.gmra.mrb[0].mxu0 %v3493
      %v3601 = vpop.f32.mrb[0].mxu0
      %v3602 = vadd.f32 %v3466, %v3601
      %v3603 = vpop.f32.mrb[0].mxu0
      %3604 = vdwg.mxu0
      %v3605 = vmul.f32 %v3562, 0.5
      %v3606 = vmul.f32 %v3567, 0.5
      %v3607 = vmul.f32 %v3572, 0.5
      %v3608 = vmul.f32 %v3577, 0.5
      %v3609 = vmul.f32 %v3582, 0.5
      %v3610 = vmul.f32 %v3587, 0.5
      %v3611 = vmul.f32 %v3592, 0.5
      %v3612 = vmul.f32 %v3597, 0.5
      %v3613 = vmul.f32 %v3602, 0.5
      %v3614 = vmul.f32 %v3562, 0.044715
      %v3615 = vmul.f32 %v3567, 0.044715
      %v3616 = vmul.f32 %v3572, 0.044715
      %v3617 = vmul.f32 %v3577, 0.044715
      %v3618 = vmul.f32 %v3582, 0.044715
      %v3619 = vmul.f32 %v3587, 0.044715
      %v3620 = vmul.f32 %v3592, 0.044715
      %v3621 = vmul.f32 %v3597, 0.044715
      %v3622 = vmul.f32 %v3602, 0.044715
      %v3623 = vmul.f32 %v3614, %v3562
      %v3624 = vmul.f32 %v3615, %v3567
      %v3625 = vmul.f32 %v3616, %v3572
      %v3626 = vmul.f32 %v3617, %v3577
      %v3627 = vmul.f32 %v3618, %v3582
      %v3628 = vmul.f32 %v3619, %v3587
      %v3629 = vmul.f32 %v3620, %v3592
      %v3630 = vmul.f32 %v3621, %v3597
      %v3631 = vmul.f32 %v3622, %v3602
      %v3632 = vmul.f32 %v3623, %v3562
      %v3633 = vmul.f32 %v3624, %v3567
      %v3634 = vmul.f32 %v3625, %v3572
      %v3635 = vmul.f32 %v3626, %v3577
      %v3636 = vmul.f32 %v3627, %v3582
      %v3637 = vmul.f32 %v3628, %v3587
      %v3638 = vmul.f32 %v3629, %v3592
      %v3639 = vmul.f32 %v3630, %v3597
      %v3640 = vmul.f32 %v3631, %v3602
      %v3641 = vadd.f32 %v3562, %v3632
      %v3642 = vadd.f32 %v3567, %v3633
      %v3643 = vadd.f32 %v3572, %v3634
      %v3644 = vadd.f32 %v3577, %v3635
      %v3645 = vadd.f32 %v3582, %v3636
      %v3646 = vadd.f32 %v3587, %v3637
      %v3647 = vadd.f32 %v3592, %v3638
      %v3648 = vadd.f32 %v3597, %v3639
      %v3649 = vadd.f32 %v3602, %v3640
      %v3650 = vmul.f32 %v3641, 0.7978846
      %v3651 = vmul.f32 %v3642, 0.7978846
      %v3652 = vmul.f32 %v3643, 0.7978846
      %v3653 = vmul.f32 %v3644, 0.7978846
      %v3654 = vmul.f32 %v3645, 0.7978846
      %v3655 = vmul.f32 %v3646, 0.7978846
      %v3656 = vmul.f32 %v3647, 0.7978846
      %v3657 = vmul.f32 %v3648, 0.7978846
      %v3658 = vmul.f32 %v3649, 0.7978846
      %v3659 = vtanh.pop %v3650
      %v3660 = vtanh.pop %v3651
      %v3661 = vtanh.pop %v3652
      %v3662 = vtanh.pop %v3653
      %v3663 = vtanh.pop %v3654
      %v3664 = vtanh.pop %v3655
      %v3665 = vtanh.pop %v3656
      %v3666 = vtanh.pop %v3657
      %v3667 = vtanh.pop %v3658
      %v3668 = vadd.f32 %v3659, 1.0
      %v3669 = vadd.f32 %v3660, 1.0
      %v3670 = vadd.f32 %v3661, 1.0
      %v3671 = vadd.f32 %v3662, 1.0
      %v3672 = vadd.f32 %v3663, 1.0
      %v3673 = vadd.f32 %v3664, 1.0
      %v3674 = vadd.f32 %v3665, 1.0
      %v3675 = vadd.f32 %v3666, 1.0
      %v3676 = vadd.f32 %v3667, 1.0
      %v3677 = vmul.f32 %v3605, %v3668
      %v3678 = vmul.f32 %v3606, %v3669
      %v3679 = vmul.f32 %v3607, %v3670
      %v3680 = vmul.f32 %v3608, %v3671
      %v3681 = vmul.f32 %v3609, %v3672
      %v3682 = vmul.f32 %v3610, %v3673
      %v3683 = vmul.f32 %v3611, %v3674
      %v3684 = vmul.f32 %v3612, %v3675
      %v3685 = vmul.f32 %v3613, %v3676
      %v3686 = vld [vmem:[%s12] sm:$0xff]
      %v3687 = vld [vmem:[%s12 + $0x8] sm:$0xff]
      %v3688 = vld [vmem:[%s12 + $0x10] sm:$0xff]
      %v3689 = vld [vmem:[%s12 + $0x18] sm:$0xff]
      %v3690 = vld [vmem:[%s12 + $0x20] sm:$0xff]
      %v3691 = vld [vmem:[%s12 + $0x28] sm:$0xff]
      %v3692 = vld [vmem:[%s12 + $0x30] sm:$0xff]
      %v3693 = vld [vmem:[%s12 + $0x38] sm:$0xff]
      %v3694 = vld [vmem:[%s12 + $0x40] sm:$0xff]
      %v3695 = vld [vmem:[%s12 + $0x48] sm:$0xff]
      %v3696 = vld [vmem:[%s12 + $0x50] sm:$0xff]
      %v3697 = vld [vmem:[%s12 + $0x58] sm:$0xff]
      %v3698 = vld [vmem:[%s12 + $0x60] sm:$0xff]
      %v3699 = vld [vmem:[%s12 + $0x68] sm:$0xff]
      %v3700 = vld [vmem:[%s12 + $0x70] sm:$0xff]
      %v3701 = vld [vmem:[%s12 + $0x78] sm:$0xff]
      %3702 = vmatprep.subr.mxu0 0.0
      %3703 = vmatpush1.msra.mxu0 %v3686
      %3704 = vmatprep.subr.mxu0 0.0
      %3705 = vmatpush1.msra.mxu0 %v3687
      %3706 = vmatprep.subr.mxu0 0.0
      %3707 = vmatpush1.msra.mxu0 %v3688
      %3708 = vmatprep.subr.mxu0 0.0
      %3709 = vmatpush1.msra.mxu0 %v3689
      %3710 = vmatprep.subr.mxu0 0.0
      %3711 = vmatpush1.msra.mxu0 %v3690
      %3712 = vmatprep.subr.mxu0 0.0
      %3713 = vmatpush1.msra.mxu0 %v3691
      %3714 = vmatprep.subr.mxu0 0.0
      %3715 = vmatpush1.msra.mxu0 %v3692
      %3716 = vmatprep.subr.mxu0 0.0
      %3717 = vmatpush1.msra.mxu0 %v3693
      %3718 = vmatprep.subr.mxu0 0.0
      %3719 = vmatpush1.msra.mxu0 %v3694
      %3720 = vmatprep.subr.mxu0 0.0
      %3721 = vmatpush1.msra.mxu0 %v3695
      %3722 = vmatprep.subr.mxu0 0.0
      %3723 = vmatpush1.msra.mxu0 %v3696
      %3724 = vmatprep.subr.mxu0 0.0
      %3725 = vmatpush1.msra.mxu0 %v3697
      %3726 = vmatprep.subr.mxu0 0.0
      %3727 = vmatpush1.msra.mxu0 %v3698
      %3728 = vmatprep.subr.mxu0 0.0
      %3729 = vmatpush1.msra.mxu0 %v3699
      %3730 = vmatprep.subr.mxu0 0.0
      %3731 = vmatpush1.msra.mxu0 %v3700
      %3732 = vmatprep.subr.mxu0 0.0
      %3733 = vmatpush1.msra.mxu0 %v3701
      %3734 = vmatprep.subr.mxu0 0.0
      %3735 = vmatpush1.msra.mxu0 0.0
      %3736 = vmatprep.subr.mxu0 0.0
      %3737 = vmatpush1.msra.mxu0 0.0
      %3738 = vmatprep.subr.mxu0 0.0
      %3739 = vmatpush1.msra.mxu0 0.0
      %3740 = vmatprep.subr.mxu0 0.0
      %3741 = vmatpush1.msra.mxu0 0.0
      %3742 = vmatprep.subr.mxu0 0.0
      %3743 = vmatpush1.msra.mxu0 0.0
      %3744 = vmatprep.subr.mxu0 0.0
      %3745 = vmatpush1.msra.mxu0 0.0
      %3746 = vmatprep.subr.mxu0 0.0
      %3747 = vmatpush1.msra.mxu0 0.0
      %3748 = vmatprep.subr.mxu0 0.0
      %3749 = vmatpush1.msra.mxu0 0.0
      %3750 = vmatprep.subr.mxu0 0.0
      %3751 = vmatpush1.msra.mxu0 0.0
      %3752 = vmatprep.subr.mxu0 0.0
      %3753 = vmatpush1.msra.mxu0 0.0
      %3754 = vmatprep.subr.mxu0 0.0
      %3755 = vmatpush1.msra.mxu0 0.0
      %3756 = vmatprep.subr.mxu0 0.0
      %3757 = vmatpush1.msra.mxu0 0.0
      %3758 = vmatprep.subr.mxu0 0.0
      %3759 = vmatpush1.msra.mxu0 0.0
      %3760 = vmatprep.subr.mxu0 0.0
      %3761 = vmatpush1.msra.mxu0 0.0
      %3762 = vmatprep.subr.mxu0 0.0
      %3763 = vmatpush1.msra.mxu0 0.0
      %3764 = vmatprep.subr.mxu0 0.0
      %3765 = vmatpush1.msra.mxu0 0.0
      %3766 = vmatprep.mubr.f32.mxu0 0.0
      %3767 = vmatmul.mubr.f32.gmra.mrb[0].mxu0 %v3677
      %v3768 = vpop.f32.mrb[0].mxu0
      %v3769 = vadd.f32 0.0, %v3768
      %v3770 = vpop.f32.mrb[0].mxu0
      %3771 = vmatprep.mubr.f32.mxu0 0.0
      %3772 = vmatmul.mubr.f32.gmra.mrb[0].mxu0 %v3678
      %v3773 = vpop.f32.mrb[0].mxu0
      %v3774 = vadd.f32 0.0, %v3773
      %v3775 = vpop.f32.mrb[0].mxu0
      %3776 = vmatprep.mubr.f32.mxu0 0.0
      %3777 = vmatmul.mubr.f32.gmra.mrb[0].mxu0 %v3679
      %v3778 = vpop.f32.mrb[0].mxu0
      %v3779 = vadd.f32 0.0, %v3778
      %v3780 = vpop.f32.mrb[0].mxu0
      %3781 = vmatprep.mubr.f32.mxu0 0.0
      %3782 = vmatmul.mubr.f32.gmra.mrb[0].mxu0 %v3680
      %v3783 = vpop.f32.mrb[0].mxu0
      %v3784 = vadd.f32 0.0, %v3783
      %v3785 = vpop.f32.mrb[0].mxu0
      %3786 = vmatprep.mubr.f32.mxu0 0.0
      %3787 = vmatmul.mubr.f32.gmra.mrb[0].mxu0 %v3681
      %v3788 = vpop.f32.mrb[0].mxu0
      %v3789 = vadd.f32 0.0, %v3788
      %v3790 = vpop.f32.mrb[0].mxu0
      %3791 = vmatprep.mubr.f32.mxu0 0.0
      %3792 = vmatmul.mubr.f32.gmra.mrb[0].mxu0 %v3682
      %v3793 = vpop.f32.mrb[0].mxu0
      %v3794 = vadd.f32 0.0, %v3793
      %v3795 = vpop.f32.mrb[0].mxu0
      %3796 = vmatprep.mubr.f32.mxu0 0.0
      %3797 = vmatmul.mubr.f32.gmra.mrb[0].mxu0 %v3683
      %v3798 = vpop.f32.mrb[0].mxu0
      %v3799 = vadd.f32 0.0, %v3798
      %v3800 = vpop.f32.mrb[0].mxu0
      %3801 = vmatprep.mubr.f32.mxu0 0.0
      %3802 = vmatmul.mubr.f32.gmra.mrb[0].mxu0 %v3684
      %v3803 = vpop.f32.mrb[0].mxu0
      %v3804 = vadd.f32 0.0, %v3803
      %v3805 = vpop.f32.mrb[0].mxu0
      %3806 = vmatprep.mubr.f32.mxu0 0.0
      %3807 = vmatmul.mubr.f32.gmra.mrb[0].mxu0 %v3685
      %v3808 = vpop.f32.mrb[0].mxu0
      %v3809 = vadd.f32 0.0, %v3808
      %v3810 = vpop.f32.mrb[0].mxu0
      %3811 = vdwg.mxu0
      %v3812 = vadd.f32 %v3299, %v3769
      %v3813 = vadd.f32 %v3300, %v3774
      %v3814 = vadd.f32 %v3301, %v3779
      %v3815 = vadd.f32 %v3302, %v3784
      %v3816 = vadd.f32 %v3303, %v3789
      %v3817 = vadd.f32 %v3304, %v3794
      %v3818 = vadd.f32 %v3305, %v3799
      %v3819 = vadd.f32 %v3306, %v3804
      %v3820 = vadd.f32 %v3307, %v3809
      %v3821 = vld [vmem:[%s13] sm:$0x1]
      %v3823 = vlaneseq
      %v3824 = vshrl.u32 %v3823, 7
      %v3825 = vsub.s32 0, %v3824
      %v3826 = vrot.slane %v3821, %v3825
      %v3828 = vadd.f32 %v3812, %v3826
      %v3829 = vadd.f32 %v3813, %v3826
      %v3830 = vadd.f32 %v3814, %v3826
      %v3831 = vadd.f32 %v3815, %v3826
      %v3832 = vadd.f32 %v3816, %v3826
      %v3833 = vadd.f32 %v3817, %v3826
      %v3834 = vadd.f32 %v3818, %v3826
      %v3835 = vadd.f32 %v3819, %v3826
      %v3836 = vadd.f32 %v3820, %v3826
      %3837 = vst.msk [vmem:[%s481] sm:$0xff] %vm494, %v3828
      %3838 = vst.msk [vmem:[%s481 + $0x8] sm:$0xff] %vm494, %v3829
      %3839 = vst.msk [vmem:[%s481 + $0x10] sm:$0xff] %vm494, %v3830
      %3840 = vst.msk [vmem:[%s481 + $0x18] sm:$0xff] %vm494, %v3831
      %3841 = vst.msk [vmem:[%s481 + $0x20] sm:$0xff] %vm494, %v3832
      %3842 = vst.msk [vmem:[%s481 + $0x28] sm:$0xff] %vm494, %v3833
      %3843 = vst.msk [vmem:[%s481 + $0x30] sm:$0xff] %vm494, %v3834
      %3844 = vst.msk [vmem:[%s481 + $0x38] sm:$0xff] %vm494, %v3835
      %3845 = vst.msk [vmem:[%s481 + $0x40] sm:$0x3] %vm519, %v3836
      %p3846 = scmp.lt.s32.totalorder %s25, 1
      %s3847 = scalar_select %p3846, %s25, 1
      %s3848 = smul.addr %s3847, 9
      %s3849 = smul.addr %s3848, 8
      %s3850 = scalar_lea.vmem %s14, %s3849
      // Predicated region
      $region77: #{tpu_custom_call.1} parent=75 // pred_check
        %p3851 = pneg %p347
      $region78: #{tpu_custom_call.1} parent=75 // pred_check_branch
        %3853 = sbr.rel (%p3851) target = $region80
      $region79: #{tpu_custom_call.1} parent=75 // pred_region
        _
      $region80: #{tpu_custom_call.1} parent=75 // pred_fallthru
        _
    $region76: #{tpu_custom_call.1} parent=5 // pred_fallthru
      _
    %p3854 = scmp.le.s32.totalorder 2, %s20
    // Predicated region
    $region81: #{tpu_custom_call.1} parent=5 // pred_check
      %p3855 = pneg %p3854
    $region82: #{tpu_custom_call.1} parent=5 // pred_check_branch
      %3857 = sbr.rel (%p3855) target = $region84
    $region83: #{tpu_custom_call.1} parent=5 // pred_region
      %s3858 = ssub.s32 %s20, 2
      // Predicated region
      $region85: #{tpu_custom_call.1} parent=83 // pred_check
        %p3859 = pneg %p353
      $region86: #{tpu_custom_call.1} parent=83 // pred_check_branch
        %3861 = sbr.rel (%p3859) target = $region88
      $region87: #{tpu_custom_call.1} parent=83 // pred_region
        %p3862 = scmp.lt.s32.totalorder %s26, 1
        %s3863 = scalar_select %p3862, %s26, 1
        %s3864 = smul.addr %s3863, 9
        %s3865 = smul.addr %s3864, 8
        %s3866 = scalar_lea.vmem %s14, %s3865
      $region88: #{tpu_custom_call.1} parent=83 // pred_fallthru
        _
    $region84: #{tpu_custom_call.1} parent=5 // pred_fallthru
      _
  $region6: #{tpu_custom_call.1} parent=0 // loop_footer
    %s24 = sadd.s32 1, %s20
  $region7: #{tpu_custom_call.1} parent=0 // loop_footer_branch
    %19 = sbr.rel target = $region3
  $region8: #{tpu_custom_call.1} parent=0 // loop_exit
    _

</llo_original>
